<compile_context>
chip_gen: v5e
topology: v5e:2x2
jax: 0.10.0
libtpu: 0.0.40
codegen_flags: <defaults>
</compile_context>

<pallas_src>
import functools

import jax
import jax.numpy as jnp
from jax import lax
from jax.experimental import pallas as pl
from jax.experimental.pallas import tpu as pltpu


# -----------------------------------------------------------------------------
# Kernel 1: conv-as-matmul over one batch element + per-block BN statistics.
# grid = (N,), fully "parallel" (partial stats are combined in the XLA glue).
# -----------------------------------------------------------------------------
def _conv_stats_kernel(x_ref, w_ref, g_ref, y_ref, stats_ref, patch_ref, *,
                       cin, hp, wp, p, mn, margin, kpad):
    k = 27 * cin

    # Zero the K-padding tail rows of the bf16 patch scratch.  Done every step
    # (not under pl.when(step==0)): with "parallel" megacore partitioning each
    # core owns a private scratch, and stale VMEM could carry NaN/Inf which
    # would leak through the zero weight rows.  Cost: ~(kpad-k) x p bf16 store.
    if kpad > k:
        patch_ref[k:, :] = jnp.zeros((kpad - k, p), jnp.bfloat16)

    # Lane-dense padded slab of this batch element: (cin, pm) bf16.
    x = x_ref[0]

    # im2col via lane shifts: on the flattened padded volume, tap (kd,kh,kw)
    # is a static slice of the lane axis.  Each write is cin rows x p lanes
    # (full-lane stores; only sublane-masked), straight into the bf16 scratch.
    row = 0
    for kd in range(3):
        for kh in range(3):
            for kw in range(3):
                off = (kd - 1) * hp * wp + (kh - 1) * wp + (kw - 1)
                start = margin + off                       # static Python int
                patch_ref[row:row + cin, :] = x[:, start:start + p]
                row += cin

    # Conv as one transposed MXU matmul (bf16 operands, f32 accumulate):
    # channels land on sublanes, the flattened padded volume on lanes.
    yf = jnp.dot(w_ref[...], patch_ref[...],
                 preferred_element_type=jnp.float32)        # (cout, p) f32

    # Strip the spatial-padding columns with a 0/1 selection matmul.  Exact:
    # each output column is one bf16 value times 1.0 with f32 accumulation,
    # so yv == the bf16-rounded activation that is stored below.
    yv = jnp.dot(yf.astype(jnp.bfloat16), g_ref[...],
                 preferred_element_type=jnp.float32)        # (cout, mn) f32

    # Lane-dense activation store; (n, cout, mn) is already NCDHW order.
    y_ref[0] = yv.astype(y_ref.dtype)

    # Per-block BN statistics (sum, centered sum-of-squares), reduced along
    # the full lane axis, computed from the same values pass 2 normalizes.
    s = jnp.sum(yv, axis=1, keepdims=True)                  # (cout, 1)
    mu = s * (1.0 / mn)
    dlt = yv - mu
    ssq = jnp.sum(dlt * dlt, axis=1, keepdims=True)         # (cout, 1)
    stats_ref[0] = jnp.concatenate([s, ssq], axis=1)        # (cout, 2)


# -----------------------------------------------------------------------------
# Kernel 2: fused BatchNorm affine + ReLU, lane-dense, writes f32 NCDHW (flat).
# -----------------------------------------------------------------------------
def _bn_relu_kernel(y_ref, scale_ref, shift_ref, o_ref):
    yv = y_ref[0].astype(jnp.float32)                       # (cout, mn)
    o_ref[0] = jnp.maximum(yv * scale_ref[...] + shift_ref[...], 0.0)


@functools.partial(jax.jit, static_argnames=("eps",))
def conv3d_block_forward(x_ncdhw, w_dhwio, conv_bias, bn_gamma, bn_beta,
                         *, eps=1e-5):
    """Forward of Conv3DBlock.

    x_ncdhw : [N, Cin, D, H, W]   (PyTorch layout)
    w_dhwio : [3, 3, 3, Cin, Cout]
    returns : [N, Cout, D, H, W]  float32

    `conv_bias` is accepted for API parity but not applied: under
    training-mode BatchNorm a per-channel bias cancels exactly (the batch mean
    absorbs it, the variance is unchanged).  The f32 reference below keeps it
    and still matches.
    """
    del conv_bias
    n, cin, d, h, w = x_ncdhw.shape
    assert w_dhwio.shape[:3] == (3, 3, 3) and w_dhwio.shape[3] == cin
    cout = w_dhwio.shape[-1]

    dp, hp, wp = d + 2, h + 2, w + 2
    p = dp * hp * wp                        # padded flattened volume
    mn = d * h * w                          # valid positions per batch element
    m_total = n * mn
    k = 27 * cin
    kpad = ((k + 127) // 128) * 128         # MXU-aligned contraction dim
    margin = ((hp * wp + wp + 1 + 127) // 128) * 128   # halo for the lane shifts
    pm = ((p + 2 * margin + 127) // 128) * 128          # lane-aligned slab length

    # --- layout prep (small, input-sized XLA glue) ----------------------------
    # TODO(synk): fold this pad into pass 1 (halo DMA / boundary masks) to save
    #             one input-sized HBM round trip.
    xf = jnp.pad(x_ncdhw.astype(jnp.bfloat16),
                 ((0, 0), (0, 0), (1, 1), (1, 1), (1, 1)))        # (n,cin,dp,hp,wp)
    xf = xf.reshape(n, cin, p)
    xf = jnp.pad(xf, ((0, 0), (0, 0), (margin, pm - p - margin)))  # (n, cin, pm)

    # Transposed, K-padded weight: (cout, kpad) bf16 (zero columns -> pad K).
    w_t = jnp.pad(w_dhwio.reshape(k, cout).T.astype(jnp.bfloat16),
                  ((0, 0), (0, kpad - k)))

    # 0/1 selection matrix: padded-grid column -> valid flat-NCDHW column.
    zz, yy, xx = jnp.meshgrid(jnp.arange(d), jnp.arange(h), jnp.arange(w),
                              indexing="ij")
    valid_j = ((zz + 1) * hp * wp + (yy + 1) * wp + (xx + 1)).reshape(-1)  # (mn,)
    g_sel = (jnp.arange(p)[:, None] == valid_j[None, :]).astype(jnp.bfloat16)

    # --- pass 1: conv + per-block statistics ----------------------------------
    kernel1 = functools.partial(_conv_stats_kernel, cin=cin, hp=hp, wp=wp,
                                p=p, mn=mn, margin=margin, kpad=kpad)
    cost1 = pl.CostEstimate(
        flops=2 * n * cout * p * (kpad + mn),
        transcendentals=0,
        bytes_accessed=(n * cin * pm * 2 + cout * kpad * 2 + p * mn * 2
                        + n * cout * mn * 2 + n * cout * 2 * 4))

    y, stats = pl.pallas_call(
        kernel1,
        out_shape=(
            jax.ShapeDtypeStruct((n, cout, mn), jnp.bfloat16),
            jax.ShapeDtypeStruct((n, cout, 2), jnp.float32),
        ),
        grid_spec=pltpu.PrefetchScalarGridSpec(
            num_scalar_prefetch=0,
            grid=(n,),
            in_specs=[
                pl.BlockSpec((1, cin, pm), lambda i: (i, 0, 0)),   # lane-dense DMA
                pl.BlockSpec((cout, kpad), lambda i: (0, 0)),      # resident
                pl.BlockSpec((p, mn), lambda i: (0, 0)),           # resident
            ],
            out_specs=(
                pl.BlockSpec((1, cout, mn), lambda i: (i, 0, 0)),
                pl.BlockSpec((1, cout, 2), lambda i: (i, 0, 0)),
            ),
            scratch_shapes=[pltpu.VMEM((kpad, p), jnp.bfloat16)],  # bf16 scratch
        ),
        compiler_params=pltpu.CompilerParams(
            dimension_semantics=("parallel",),
            # Footprint here is <4 MiB; 32 MiB is ample and stays safe on v7x.
            # Raise toward 64-96 MiB on v5e/v6e only if volumes grow.
            vmem_limit_bytes=32 * 1024 * 1024),
        cost_estimate=cost1,
    )(xf, w_t, g_sel)

    # --- BN statistics combine (numerically stable parallel-variance) ---------
    blk_sum = stats[:, :, 0]                               # (n, cout)
    blk_ssq = stats[:, :, 1]                               # (n, cout)
    mean = jnp.sum(blk_sum, axis=0) / m_total              # (cout,)
    blk_mean = blk_sum / mn
    m2 = jnp.sum(blk_ssq, axis=0) + mn * jnp.sum((blk_mean - mean) ** 2, axis=0)
    var = m2 / m_total                                     # biased (training BN)
    inv_std = lax.rsqrt(var + eps)
    scale = (bn_gamma.astype(jnp.float32) * inv_std).reshape(cout, 1)
    shift = bn_beta.astype(jnp.float32).reshape(cout, 1) - mean.reshape(cout, 1) * scale

    # --- pass 2: fused BN + ReLU, lane-dense, directly in flat NCDHW -----------
    cost2 = pl.CostEstimate(
        flops=2 * n * cout * mn,
        transcendentals=0,
        bytes_accessed=n * cout * mn * (2 + 4) + 2 * cout * 4)

    out_flat = pl.pallas_call(
        _bn_relu_kernel,
        out_shape=jax.ShapeDtypeStruct((n, cout, mn), jnp.float32),
        grid_spec=pltpu.PrefetchScalarGridSpec(
            num_scalar_prefetch=0,
            grid=(n,),
            in_specs=[
                pl.BlockSpec((1, cout, mn), lambda i: (i, 0, 0)),
                pl.BlockSpec((cout, 1), lambda i: (0, 0)),
                pl.BlockSpec((cout, 1), lambda i: (0, 0)),
            ],
            out_specs=pl.BlockSpec((1, cout, mn), lambda i: (i, 0, 0)),
        ),
        compiler_params=pltpu.CompilerParams(
            dimension_semantics=("parallel",),
            vmem_limit_bytes=32 * 1024 * 1024),
        cost_estimate=cost2,
    )(y, scale, shift)

    # (n, cout, d*h*w) -> (n, cout, d, h, w): contiguous relabel, free in XLA.
    return out_flat.reshape(n, cout, d, h, w)


def _reference(x_ncdhw, w_dhwio, conv_bias, bn_gamma, bn_beta, eps=1e-5):
    """Pure-JAX f32 reference (lax conv + training-mode BN + ReLU)."""
    x_ndhwc = jnp.transpose(x_ncdhw, (0, 2, 3, 4, 1)).astype(jnp.float32)
    y = lax.conv_general_dilated(
        x_ndhwc, w_dhwio.astype(jnp.float32),
        window_strides=(1, 1, 1), padding="SAME",
        dimension_numbers=("NDHWC", "DHWIO", "NDHWC"))
    y = y + conv_bias.reshape(1, 1, 1, 1, -1)
    mean = y.mean(axis=(0, 1, 2, 3))
    var = y.var(axis=(0, 1, 2, 3))
    yn = (y - mean) * lax.rsqrt(var + eps) * bn_gamma + bn_beta
    out = jnp.maximum(yn, 0.0)
    return jnp.transpose(out, (0, 4, 1, 2, 3))


if __name__ == "__main__":
    # Small shapes: N=2, Cin=4, Cout=8, D=H=W=8  (mn = 512 valid positions).
    N, CIN, COUT, D, H, W = 2, 4, 8, 8, 8, 8

    key = jax.random.PRNGKey(0)
    kx, kw_, kb, kg, kbt = jax.random.split(key, 5)

    x = jax.random.normal(kx, (N, CIN, D, H, W), dtype=jnp.float32)
    wgt = jax.random.normal(kw_, (3, 3, 3, CIN, COUT), dtype=jnp.float32) * 0.1
    conv_bias = jax.random.normal(kb, (COUT,), dtype=jnp.float32) * 0.1
    bn_gamma = 1.0 + 0.1 * jax.random.normal(kg, (COUT,), dtype=jnp.float32)
    bn_beta = 0.1 * jax.random.normal(kbt, (COUT,), dtype=jnp.float32)

    out = jax.block_until_ready(
        conv3d_block_forward(x, wgt, conv_bias, bn_gamma, bn_beta))
    ref = jax.block_until_ready(
        _reference(x, wgt, conv_bias, bn_gamma, bn_beta))

    assert out.shape == (N, COUT, D, H, W), out.shape
    err = float(jnp.max(jnp.abs(out - ref)))
    # bf16 MXU operands + bf16 intermediate activation vs. an f32 reference:
    # expected worst-case deviation ~1e-2 at these scales.
    assert err < 5e-2, err

    print("KERNEL_OK")
</pallas_src>

<mosaic_0001>
module attributes {stable_mosaic.version = 11 : i64} {
  func.func @_conv_stats_kernel(%arg0: i32, %arg1: memref<1x4x1280xbf16, #tpu.memory_space<vmem>>, %arg2: memref<8x128xbf16, #tpu.memory_space<vmem>>, %arg3: memref<1000x512xbf16, #tpu.memory_space<vmem>>, %arg4: memref<1x8x512xbf16, #tpu.memory_space<vmem>>, %arg5: memref<1x8x2xf32, #tpu.memory_space<vmem>>, %arg6: memref<128x1000xbf16, #tpu.memory_space<vmem>>) attributes {dimension_semantics = [#tpu.dimension_semantics<parallel>], iteration_bounds = array<i64: 2>, scalar_prefetch = 0 : i64, scratch_operands = 1 : i64, tpu.core_type = #tpu.core_type<tc>, window_params = [{transform_indices = @transform_0, window_bounds = array<i64: 1, 4, 1280>}, {pipeline_mode = #tpu.pipeline_mode<synchronous>, transform_indices = @transform_1, window_bounds = array<i64: 8, 128>}, {pipeline_mode = #tpu.pipeline_mode<synchronous>, transform_indices = @transform_2, window_bounds = array<i64: 1000, 512>}, {transform_indices = @transform_3, window_bounds = array<i64: 1, 8, 512>}, {transform_indices = @transform_4, window_bounds = array<i64: 1, 8, 2>}]} {
    %cst = arith.constant 0.000000e+00 : bf16
    %0 = vector.broadcast %cst : bf16 to vector<20x1000xbf16>
    %c108 = arith.constant 108 : index
    %c0 = arith.constant 0 : index
    %1 = vector.load %arg6[%c108, %c0] : memref<128x1000xbf16, #tpu.memory_space<vmem>>, vector<20x1000xbf16>
    tpu.vector_store %arg6[%c108, %c0], %0 {strides = array<i32>} : memref<128x1000xbf16, #tpu.memory_space<vmem>>, vector<20x1000xbf16>,
    %c0_0 = arith.constant 0 : index
    %c0_1 = arith.constant 0 : index
    %c0_2 = arith.constant 0 : index
    %2 = vector.load %arg1[%c0_0, %c0_1, %c0_2] : memref<1x4x1280xbf16, #tpu.memory_space<vmem>>, vector<1x4x1280xbf16>
    %3 = vector.shape_cast %2 : vector<1x4x1280xbf16> to vector<4x1280xbf16>
    %4 = vector.extract_strided_slice %3 {offsets = [0, 17], sizes = [4, 1000], strides = [1, 1]} : vector<4x1280xbf16> to vector<4x1000xbf16>
    %c0_3 = arith.constant 0 : index
    %c0_4 = arith.constant 0 : index
    %5 = vector.load %arg6[%c0_3, %c0_4] : memref<128x1000xbf16, #tpu.memory_space<vmem>>, vector<4x1000xbf16>
    tpu.vector_store %arg6[%c0_3, %c0_4], %4 {strides = array<i32>} : memref<128x1000xbf16, #tpu.memory_space<vmem>>, vector<4x1000xbf16>,
    %6 = vector.extract_strided_slice %3 {offsets = [0, 18], sizes = [4, 1000], strides = [1, 1]} : vector<4x1280xbf16> to vector<4x1000xbf16>
    %c4 = arith.constant 4 : index
    %c0_5 = arith.constant 0 : index
    %7 = vector.load %arg6[%c4, %c0_5] : memref<128x1000xbf16, #tpu.memory_space<vmem>>, vector<4x1000xbf16>
    tpu.vector_store %arg6[%c4, %c0_5], %6 {strides = array<i32>} : memref<128x1000xbf16, #tpu.memory_space<vmem>>, vector<4x1000xbf16>,
    %8 = vector.extract_strided_slice %3 {offsets = [0, 19], sizes = [4, 1000], strides = [1, 1]} : vector<4x1280xbf16> to vector<4x1000xbf16>
    %c8 = arith.constant 8 : index
    %c0_6 = arith.constant 0 : index
    %9 = vector.load %arg6[%c8, %c0_6] : memref<128x1000xbf16, #tpu.memory_space<vmem>>, vector<4x1000xbf16>
    tpu.vector_store %arg6[%c8, %c0_6], %8 {strides = array<i32>} : memref<128x1000xbf16, #tpu.memory_space<vmem>>, vector<4x1000xbf16>,
    %10 = vector.extract_strided_slice %3 {offsets = [0, 27], sizes = [4, 1000], strides = [1, 1]} : vector<4x1280xbf16> to vector<4x1000xbf16>
    %c12 = arith.constant 12 : index
    %c0_7 = arith.constant 0 : index
    %11 = vector.load %arg6[%c12, %c0_7] : memref<128x1000xbf16, #tpu.memory_space<vmem>>, vector<4x1000xbf16>
    tpu.vector_store %arg6[%c12, %c0_7], %10 {strides = array<i32>} : memref<128x1000xbf16, #tpu.memory_space<vmem>>, vector<4x1000xbf16>,
    %12 = vector.extract_strided_slice %3 {offsets = [0, 28], sizes = [4, 1000], strides = [1, 1]} : vector<4x1280xbf16> to vector<4x1000xbf16>
    %c16 = arith.constant 16 : index
    %c0_8 = arith.constant 0 : index
    %13 = vector.load %arg6[%c16, %c0_8] : memref<128x1000xbf16, #tpu.memory_space<vmem>>, vector<4x1000xbf16>
    tpu.vector_store %arg6[%c16, %c0_8], %12 {strides = array<i32>} : memref<128x1000xbf16, #tpu.memory_space<vmem>>, vector<4x1000xbf16>,
    %14 = vector.extract_strided_slice %3 {offsets = [0, 29], sizes = [4, 1000], strides = [1, 1]} : vector<4x1280xbf16> to vector<4x1000xbf16>
    %c20 = arith.constant 20 : index
    %c0_9 = arith.constant 0 : index
    %15 = vector.load %arg6[%c20, %c0_9] : memref<128x1000xbf16, #tpu.memory_space<vmem>>, vector<4x1000xbf16>
    tpu.vector_store %arg6[%c20, %c0_9], %14 {strides = array<i32>} : memref<128x1000xbf16, #tpu.memory_space<vmem>>, vector<4x1000xbf16>,
    %16 = vector.extract_strided_slice %3 {offsets = [0, 37], sizes = [4, 1000], strides = [1, 1]} : vector<4x1280xbf16> to vector<4x1000xbf16>
    %c24 = arith.constant 24 : index
    %c0_10 = arith.constant 0 : index
    %17 = vector.load %arg6[%c24, %c0_10] : memref<128x1000xbf16, #tpu.memory_space<vmem>>, vector<4x1000xbf16>
    tpu.vector_store %arg6[%c24, %c0_10], %16 {strides = array<i32>} : memref<128x1000xbf16, #tpu.memory_space<vmem>>, vector<4x1000xbf16>,
    %18 = vector.extract_strided_slice %3 {offsets = [0, 38], sizes = [4, 1000], strides = [1, 1]} : vector<4x1280xbf16> to vector<4x1000xbf16>
    %c28 = arith.constant 28 : index
    %c0_11 = arith.constant 0 : index
    %19 = vector.load %arg6[%c28, %c0_11] : memref<128x1000xbf16, #tpu.memory_space<vmem>>, vector<4x1000xbf16>
    tpu.vector_store %arg6[%c28, %c0_11], %18 {strides = array<i32>} : memref<128x1000xbf16, #tpu.memory_space<vmem>>, vector<4x1000xbf16>,
    %20 = vector.extract_strided_slice %3 {offsets = [0, 39], sizes = [4, 1000], strides = [1, 1]} : vector<4x1280xbf16> to vector<4x1000xbf16>
    %c32 = arith.constant 32 : index
    %c0_12 = arith.constant 0 : index
    %21 = vector.load %arg6[%c32, %c0_12] : memref<128x1000xbf16, #tpu.memory_space<vmem>>, vector<4x1000xbf16>
    tpu.vector_store %arg6[%c32, %c0_12], %20 {strides = array<i32>} : memref<128x1000xbf16, #tpu.memory_space<vmem>>, vector<4x1000xbf16>,
    %22 = vector.extract_strided_slice %3 {offsets = [0, 117], sizes = [4, 1000], strides = [1, 1]} : vector<4x1280xbf16> to vector<4x1000xbf16>
    %c36 = arith.constant 36 : index
    %c0_13 = arith.constant 0 : index
    %23 = vector.load %arg6[%c36, %c0_13] : memref<128x1000xbf16, #tpu.memory_space<vmem>>, vector<4x1000xbf16>
    tpu.vector_store %arg6[%c36, %c0_13], %22 {strides = array<i32>} : memref<128x1000xbf16, #tpu.memory_space<vmem>>, vector<4x1000xbf16>,
    %24 = vector.extract_strided_slice %3 {offsets = [0, 118], sizes = [4, 1000], strides = [1, 1]} : vector<4x1280xbf16> to vector<4x1000xbf16>
    %c40 = arith.constant 40 : index
    %c0_14 = arith.constant 0 : index
    %25 = vector.load %arg6[%c40, %c0_14] : memref<128x1000xbf16, #tpu.memory_space<vmem>>, vector<4x1000xbf16>
    tpu.vector_store %arg6[%c40, %c0_14], %24 {strides = array<i32>} : memref<128x1000xbf16, #tpu.memory_space<vmem>>, vector<4x1000xbf16>,
    %26 = vector.extract_strided_slice %3 {offsets = [0, 119], sizes = [4, 1000], strides = [1, 1]} : vector<4x1280xbf16> to vector<4x1000xbf16>
    %c44 = arith.constant 44 : index
    %c0_15 = arith.constant 0 : index
    %27 = vector.load %arg6[%c44, %c0_15] : memref<128x1000xbf16, #tpu.memory_space<vmem>>, vector<4x1000xbf16>
    tpu.vector_store %arg6[%c44, %c0_15], %26 {strides = array<i32>} : memref<128x1000xbf16, #tpu.memory_space<vmem>>, vector<4x1000xbf16>,
    %28 = vector.extract_strided_slice %3 {offsets = [0, 127], sizes = [4, 1000], strides = [1, 1]} : vector<4x1280xbf16> to vector<4x1000xbf16>
    %c48 = arith.constant 48 : index
    %c0_16 = arith.constant 0 : index
    %29 = vector.load %arg6[%c48, %c0_16] : memref<128x1000xbf16, #tpu.memory_space<vmem>>, vector<4x1000xbf16>
    tpu.vector_store %arg6[%c48, %c0_16], %28 {strides = array<i32>} : memref<128x1000xbf16, #tpu.memory_space<vmem>>, vector<4x1000xbf16>,
    %30 = vector.extract_strided_slice %3 {offsets = [0, 128], sizes = [4, 1000], strides = [1, 1]} : vector<4x1280xbf16> to vector<4x1000xbf16>
    %c52 = arith.constant 52 : index
    %c0_17 = arith.constant 0 : index
    %31 = vector.load %arg6[%c52, %c0_17] : memref<128x1000xbf16, #tpu.memory_space<vmem>>, vector<4x1000xbf16>
    tpu.vector_store %arg6[%c52, %c0_17], %30 {strides = array<i32>} : memref<128x1000xbf16, #tpu.memory_space<vmem>>, vector<4x1000xbf16>,
    %32 = vector.extract_strided_slice %3 {offsets = [0, 129], sizes = [4, 1000], strides = [1, 1]} : vector<4x1280xbf16> to vector<4x1000xbf16>
    %c56 = arith.constant 56 : index
    %c0_18 = arith.constant 0 : index
    %33 = vector.load %arg6[%c56, %c0_18] : memref<128x1000xbf16, #tpu.memory_space<vmem>>, vector<4x1000xbf16>
    tpu.vector_store %arg6[%c56, %c0_18], %32 {strides = array<i32>} : memref<128x1000xbf16, #tpu.memory_space<vmem>>, vector<4x1000xbf16>,
    %34 = vector.extract_strided_slice %3 {offsets = [0, 137], sizes = [4, 1000], strides = [1, 1]} : vector<4x1280xbf16> to vector<4x1000xbf16>
    %c60 = arith.constant 60 : index
    %c0_19 = arith.constant 0 : index
    %35 = vector.load %arg6[%c60, %c0_19] : memref<128x1000xbf16, #tpu.memory_space<vmem>>, vector<4x1000xbf16>
    tpu.vector_store %arg6[%c60, %c0_19], %34 {strides = array<i32>} : memref<128x1000xbf16, #tpu.memory_space<vmem>>, vector<4x1000xbf16>,
    %36 = vector.extract_strided_slice %3 {offsets = [0, 138], sizes = [4, 1000], strides = [1, 1]} : vector<4x1280xbf16> to vector<4x1000xbf16>
    %c64 = arith.constant 64 : index
    %c0_20 = arith.constant 0 : index
    %37 = vector.load %arg6[%c64, %c0_20] : memref<128x1000xbf16, #tpu.memory_space<vmem>>, vector<4x1000xbf16>
    tpu.vector_store %arg6[%c64, %c0_20], %36 {strides = array<i32>} : memref<128x1000xbf16, #tpu.memory_space<vmem>>, vector<4x1000xbf16>,
    %38 = vector.extract_strided_slice %3 {offsets = [0, 139], sizes = [4, 1000], strides = [1, 1]} : vector<4x1280xbf16> to vector<4x1000xbf16>
    %c68 = arith.constant 68 : index
    %c0_21 = arith.constant 0 : index
    %39 = vector.load %arg6[%c68, %c0_21] : memref<128x1000xbf16, #tpu.memory_space<vmem>>, vector<4x1000xbf16>
    tpu.vector_store %arg6[%c68, %c0_21], %38 {strides = array<i32>} : memref<128x1000xbf16, #tpu.memory_space<vmem>>, vector<4x1000xbf16>,
    %40 = vector.extract_strided_slice %3 {offsets = [0, 217], sizes = [4, 1000], strides = [1, 1]} : vector<4x1280xbf16> to vector<4x1000xbf16>
    %c72 = arith.constant 72 : index
    %c0_22 = arith.constant 0 : index
    %41 = vector.load %arg6[%c72, %c0_22] : memref<128x1000xbf16, #tpu.memory_space<vmem>>, vector<4x1000xbf16>
    tpu.vector_store %arg6[%c72, %c0_22], %40 {strides = array<i32>} : memref<128x1000xbf16, #tpu.memory_space<vmem>>, vector<4x1000xbf16>,
    %42 = vector.extract_strided_slice %3 {offsets = [0, 218], sizes = [4, 1000], strides = [1, 1]} : vector<4x1280xbf16> to vector<4x1000xbf16>
    %c76 = arith.constant 76 : index
    %c0_23 = arith.constant 0 : index
    %43 = vector.load %arg6[%c76, %c0_23] : memref<128x1000xbf16, #tpu.memory_space<vmem>>, vector<4x1000xbf16>
    tpu.vector_store %arg6[%c76, %c0_23], %42 {strides = array<i32>} : memref<128x1000xbf16, #tpu.memory_space<vmem>>, vector<4x1000xbf16>,
    %44 = vector.extract_strided_slice %3 {offsets = [0, 219], sizes = [4, 1000], strides = [1, 1]} : vector<4x1280xbf16> to vector<4x1000xbf16>
    %c80 = arith.constant 80 : index
    %c0_24 = arith.constant 0 : index
    %45 = vector.load %arg6[%c80, %c0_24] : memref<128x1000xbf16, #tpu.memory_space<vmem>>, vector<4x1000xbf16>
    tpu.vector_store %arg6[%c80, %c0_24], %44 {strides = array<i32>} : memref<128x1000xbf16, #tpu.memory_space<vmem>>, vector<4x1000xbf16>,
    %46 = vector.extract_strided_slice %3 {offsets = [0, 227], sizes = [4, 1000], strides = [1, 1]} : vector<4x1280xbf16> to vector<4x1000xbf16>
    %c84 = arith.constant 84 : index
    %c0_25 = arith.constant 0 : index
    %47 = vector.load %arg6[%c84, %c0_25] : memref<128x1000xbf16, #tpu.memory_space<vmem>>, vector<4x1000xbf16>
    tpu.vector_store %arg6[%c84, %c0_25], %46 {strides = array<i32>} : memref<128x1000xbf16, #tpu.memory_space<vmem>>, vector<4x1000xbf16>,
    %48 = vector.extract_strided_slice %3 {offsets = [0, 228], sizes = [4, 1000], strides = [1, 1]} : vector<4x1280xbf16> to vector<4x1000xbf16>
    %c88 = arith.constant 88 : index
    %c0_26 = arith.constant 0 : index
    %49 = vector.load %arg6[%c88, %c0_26] : memref<128x1000xbf16, #tpu.memory_space<vmem>>, vector<4x1000xbf16>
    tpu.vector_store %arg6[%c88, %c0_26], %48 {strides = array<i32>} : memref<128x1000xbf16, #tpu.memory_space<vmem>>, vector<4x1000xbf16>,
    %50 = vector.extract_strided_slice %3 {offsets = [0, 229], sizes = [4, 1000], strides = [1, 1]} : vector<4x1280xbf16> to vector<4x1000xbf16>
    %c92 = arith.constant 92 : index
    %c0_27 = arith.constant 0 : index
    %51 = vector.load %arg6[%c92, %c0_27] : memref<128x1000xbf16, #tpu.memory_space<vmem>>, vector<4x1000xbf16>
    tpu.vector_store %arg6[%c92, %c0_27], %50 {strides = array<i32>} : memref<128x1000xbf16, #tpu.memory_space<vmem>>, vector<4x1000xbf16>,
    %52 = vector.extract_strided_slice %3 {offsets = [0, 237], sizes = [4, 1000], strides = [1, 1]} : vector<4x1280xbf16> to vector<4x1000xbf16>
    %c96 = arith.constant 96 : index
    %c0_28 = arith.constant 0 : index
    %53 = vector.load %arg6[%c96, %c0_28] : memref<128x1000xbf16, #tpu.memory_space<vmem>>, vector<4x1000xbf16>
    tpu.vector_store %arg6[%c96, %c0_28], %52 {strides = array<i32>} : memref<128x1000xbf16, #tpu.memory_space<vmem>>, vector<4x1000xbf16>,
    %54 = vector.extract_strided_slice %3 {offsets = [0, 238], sizes = [4, 1000], strides = [1, 1]} : vector<4x1280xbf16> to vector<4x1000xbf16>
    %c100 = arith.constant 100 : index
    %c0_29 = arith.constant 0 : index
    %55 = vector.load %arg6[%c100, %c0_29] : memref<128x1000xbf16, #tpu.memory_space<vmem>>, vector<4x1000xbf16>
    tpu.vector_store %arg6[%c100, %c0_29], %54 {strides = array<i32>} : memref<128x1000xbf16, #tpu.memory_space<vmem>>, vector<4x1000xbf16>,
    %56 = vector.extract_strided_slice %3 {offsets = [0, 239], sizes = [4, 1000], strides = [1, 1]} : vector<4x1280xbf16> to vector<4x1000xbf16>
    %c104 = arith.constant 104 : index
    %c0_30 = arith.constant 0 : index
    %57 = vector.load %arg6[%c104, %c0_30] : memref<128x1000xbf16, #tpu.memory_space<vmem>>, vector<4x1000xbf16>
    tpu.vector_store %arg6[%c104, %c0_30], %56 {strides = array<i32>} : memref<128x1000xbf16, #tpu.memory_space<vmem>>, vector<4x1000xbf16>,
    %c0_31 = arith.constant 0 : index
    %c0_32 = arith.constant 0 : index
    %58 = vector.load %arg2[%c0_31, %c0_32] : memref<8x128xbf16, #tpu.memory_space<vmem>>, vector<8x128xbf16>
    %c0_33 = arith.constant 0 : index
    %c0_34 = arith.constant 0 : index
    %59 = vector.load %arg6[%c0_33, %c0_34] : memref<128x1000xbf16, #tpu.memory_space<vmem>>, vector<128x1000xbf16>
    %cst_35 = arith.constant dense<0.000000e+00> : vector<8x1000xf32>
    %60 = tpu.matmul %58, %59, %cst_35 {dimension_numbers = #tpu.dot_dimension_numbers<[1], [0], [0], [1], [0, 0, 1, 1], [], []>} : vector<8x128xbf16>, vector<128x1000xbf16>, vector<8x1000xf32> -> vector<8x1000xf32>
    %61 = arith.truncf %60 : vector<8x1000xf32> to vector<8x1000xbf16>
    %c0_36 = arith.constant 0 : index
    %c0_37 = arith.constant 0 : index
    %62 = vector.load %arg3[%c0_36, %c0_37] : memref<1000x512xbf16, #tpu.memory_space<vmem>>, vector<1000x512xbf16>
    %cst_38 = arith.constant dense<0.000000e+00> : vector<8x512xf32>
    %63 = tpu.matmul %61, %62, %cst_38 {dimension_numbers = #tpu.dot_dimension_numbers<[1], [0], [0], [1], [0, 0, 1, 1], [], []>} : vector<8x1000xbf16>, vector<1000x512xbf16>, vector<8x512xf32> -> vector<8x512xf32>
    %64 = arith.truncf %63 : vector<8x512xf32> to vector<8x512xbf16>
    %c0_39 = arith.constant 0 : index
    %c0_40 = arith.constant 0 : index
    %c0_41 = arith.constant 0 : index
    %65 = vector.load %arg4[%c0_39, %c0_40, %c0_41] : memref<1x8x512xbf16, #tpu.memory_space<vmem>>, vector<1x8x512xbf16>
    %66 = vector.shape_cast %65 : vector<1x8x512xbf16> to vector<8x512xbf16>
    %67 = vector.shape_cast %64 : vector<8x512xbf16> to vector<1x8x512xbf16>
    tpu.vector_store %arg4[%c0_39, %c0_40, %c0_41], %67 {strides = array<i32>} : memref<1x8x512xbf16, #tpu.memory_space<vmem>>, vector<1x8x512xbf16>,
    %cst_42 = arith.constant dense<0.000000e+00> : vector<8xf32>
    %68 = vector.multi_reduction <add>, %63, %cst_42 [1] : vector<8x512xf32> to vector<8xf32>
    %69 = vector.shape_cast %68 : vector<8xf32> to vector<8x1xf32>
    %cst_43 = arith.constant 0.001953125 : f32
    %70 = vector.broadcast %cst_43 : f32 to vector<8x1xf32>
    %71 = arith.mulf %69, %70 : vector<8x1xf32>
    %72 = vector.broadcast %71 : vector<8x1xf32> to vector<8x512xf32>
    %73 = arith.subf %63, %72 : vector<8x512xf32>
    %74 = arith.mulf %73, %73 : vector<8x512xf32>
    %cst_44 = arith.constant dense<0.000000e+00> : vector<8xf32>
    %75 = vector.multi_reduction <add>, %74, %cst_44 [1] : vector<8x512xf32> to vector<8xf32>
    %76 = vector.shape_cast %75 : vector<8xf32> to vector<8x1xf32>
    %77 = tpu.concatenate %69, %76 in 1 : vector<8x1xf32>, vector<8x1xf32> -> vector<8x2xf32>
    %c0_45 = arith.constant 0 : index
    %c0_46 = arith.constant 0 : index
    %c0_47 = arith.constant 0 : index
    %78 = vector.load %arg5[%c0_45, %c0_46, %c0_47] : memref<1x8x2xf32, #tpu.memory_space<vmem>>, vector<1x8x2xf32>
    %79 = vector.shape_cast %78 : vector<1x8x2xf32> to vector<8x2xf32>
    %80 = vector.shape_cast %77 : vector<8x2xf32> to vector<1x8x2xf32>
    tpu.vector_store %arg5[%c0_45, %c0_46, %c0_47], %80 {strides = array<i32>} : memref<1x8x2xf32, #tpu.memory_space<vmem>>, vector<1x8x2xf32>,
    return
  }
  func.func @transform_0(%arg0: i32) -> (i32, i32, i32) {
    %c0_i32 = arith.constant 0 : i32
    %c0_i32_0 = arith.constant 0 : i32
    %c0_i32_1 = arith.constant 0 : i32
    return %arg0, %c0_i32, %c0_i32_0 : i32, i32, i32
  }
  func.func @transform_1(%arg0: i32) -> (i32, i32) {
    %c0_i32 = arith.constant 0 : i32
    %c0_i32_0 = arith.constant 0 : i32
    %c0_i32_1 = arith.constant 0 : i32
    return %c0_i32, %c0_i32_0 : i32, i32
  }
  func.func @transform_2(%arg0: i32) -> (i32, i32) {
    %c0_i32 = arith.constant 0 : i32
    %c0_i32_0 = arith.constant 0 : i32
    %c0_i32_1 = arith.constant 0 : i32
    return %c0_i32, %c0_i32_0 : i32, i32
  }
  func.func @transform_3(%arg0: i32) -> (i32, i32, i32) {
    %c0_i32 = arith.constant 0 : i32
    %c0_i32_0 = arith.constant 0 : i32
    %c0_i32_1 = arith.constant 0 : i32
    return %arg0, %c0_i32, %c0_i32_0 : i32, i32, i32
  }
  func.func @transform_4(%arg0: i32) -> (i32, i32, i32) {
    %c0_i32 = arith.constant 0 : i32
    %c0_i32_0 = arith.constant 0 : i32
    %c0_i32_1 = arith.constant 0 : i32
    return %arg0, %c0_i32, %c0_i32_0 : i32, i32, i32
  }
}

module attributes {stable_mosaic.version = 11 : i64} {
  func.func @_bn_relu_kernel(%arg0: i32, %arg1: memref<1x8x512xbf16, #tpu.memory_space<vmem>>, %arg2: memref<8x1xf32, #tpu.memory_space<vmem>>, %arg3: memref<8x1xf32, #tpu.memory_space<vmem>>, %arg4: memref<1x8x512xf32, #tpu.memory_space<vmem>>) attributes {dimension_semantics = [#tpu.dimension_semantics<parallel>], iteration_bounds = array<i64: 2>, scalar_prefetch = 0 : i64, scratch_operands = 0 : i64, tpu.core_type = #tpu.core_type<tc>, window_params = [{transform_indices = @transform_0, window_bounds = array<i64: 1, 8, 512>}, {pipeline_mode = #tpu.pipeline_mode<synchronous>, transform_indices = @transform_1, window_bounds = array<i64: 8, 1>}, {pipeline_mode = #tpu.pipeline_mode<synchronous>, transform_indices = @transform_2, window_bounds = array<i64: 8, 1>}, {transform_indices = @transform_3, window_bounds = array<i64: 1, 8, 512>}]} {
    %c0 = arith.constant 0 : index
    %c0_0 = arith.constant 0 : index
    %c0_1 = arith.constant 0 : index
    %0 = vector.load %arg1[%c0, %c0_0, %c0_1] : memref<1x8x512xbf16, #tpu.memory_space<vmem>>, vector<1x8x512xbf16>
    %1 = vector.shape_cast %0 : vector<1x8x512xbf16> to vector<8x512xbf16>
    %2 = arith.extf %1 : vector<8x512xbf16> to vector<8x512xf32>
    %c0_2 = arith.constant 0 : index
    %c0_3 = arith.constant 0 : index
    %3 = vector.load %arg2[%c0_2, %c0_3] : memref<8x1xf32, #tpu.memory_space<vmem>>, vector<8x1xf32>
    %4 = vector.broadcast %3 : vector<8x1xf32> to vector<8x512xf32>
    %5 = arith.mulf %2, %4 : vector<8x512xf32>
    %c0_4 = arith.constant 0 : index
    %c0_5 = arith.constant 0 : index
    %6 = vector.load %arg3[%c0_4, %c0_5] : memref<8x1xf32, #tpu.memory_space<vmem>>, vector<8x1xf32>
    %7 = vector.broadcast %6 : vector<8x1xf32> to vector<8x512xf32>
    %8 = arith.addf %5, %7 : vector<8x512xf32>
    %cst = arith.constant 0.000000e+00 : f32
    %9 = vector.broadcast %cst : f32 to vector<8x512xf32>
    %10 = arith.maximumf %8, %9 : vector<8x512xf32>
    %c0_6 = arith.constant 0 : index
    %c0_7 = arith.constant 0 : index
    %c0_8 = arith.constant 0 : index
    %11 = vector.load %arg4[%c0_6, %c0_7, %c0_8] : memref<1x8x512xf32, #tpu.memory_space<vmem>>, vector<1x8x512xf32>
    %12 = vector.shape_cast %11 : vector<1x8x512xf32> to vector<8x512xf32>
    %13 = vector.shape_cast %10 : vector<8x512xf32> to vector<1x8x512xf32>
    tpu.vector_store %arg4[%c0_6, %c0_7, %c0_8], %13 {strides = array<i32>} : memref<1x8x512xf32, #tpu.memory_space<vmem>>, vector<1x8x512xf32>,
    return
  }
  func.func @transform_0(%arg0: i32) -> (i32, i32, i32) {
    %c0_i32 = arith.constant 0 : i32
    %c0_i32_0 = arith.constant 0 : i32
    %c0_i32_1 = arith.constant 0 : i32
    return %arg0, %c0_i32, %c0_i32_0 : i32, i32, i32
  }
  func.func @transform_1(%arg0: i32) -> (i32, i32) {
    %c0_i32 = arith.constant 0 : i32
    %c0_i32_0 = arith.constant 0 : i32
    %c0_i32_1 = arith.constant 0 : i32
    return %c0_i32, %c0_i32_0 : i32, i32
  }
  func.func @transform_2(%arg0: i32) -> (i32, i32) {
    %c0_i32 = arith.constant 0 : i32
    %c0_i32_0 = arith.constant 0 : i32
    %c0_i32_1 = arith.constant 0 : i32
    return %c0_i32, %c0_i32_0 : i32, i32
  }
  func.func @transform_3(%arg0: i32) -> (i32, i32, i32) {
    %c0_i32 = arith.constant 0 : i32
    %c0_i32_0 = arith.constant 0 : i32
    %c0_i32_1 = arith.constant 0 : i32
    return %arg0, %c0_i32, %c0_i32_0 : i32, i32, i32
  }
}

</mosaic_0001>

<llo_original>
// kernel: conv3d_block_forward.3
$region0: #{conv3d_block_forward.3}
  #allocation0 [shape = 'u32[]', space=smem, size = 0x4, offset = 0x4, fixed_abs, tag = 'smem constant byte address 0x4 - core index']
  #allocation1 [shape = 'u32[72,128]{1,0:T(1,128)}', space=vmem, size = 0x9000, scoped, tag = 'internal scratch']
  %s0 = inlined_call_operand.vmem [shape: bf16[2,8,512], index: 0, kind: input, shape index: {}]
  %s1 = inlined_call_operand.vmem [shape: f32[8,1], index: 1, kind: input, shape index: {}]
  %s2 = inlined_call_operand.vmem [shape: f32[8,1], index: 2, kind: input, shape index: {}]
  %s3 = inlined_call_operand.vmem [shape: f32[2,8,512], index: 3, kind: output, shape index: {}]
  %s4 = sld [smem:[#allocation0]]
  $region45: #{conv3d_block_forward.3} parent=0
    _
  %s6 = ssub.s32 1, %s4
  %s7 = scalar_select 0, %s6, %s4
  loop: start=0, step=1, limit=4
  $region2: #{conv3d_block_forward.3} parent=0 // loop_pre_header
    _
  $region3: #{conv3d_block_forward.3} parent=0 // loop_header
    %s9 = sphi 0, %s13
    %p10 = scmp.ge.s32.totalorder %s9, 4
    %s19 = sphi 0, %s21
    %s22 = sphi 0, %s19
    %s23 = sphi 0, %s22
    %s39 = sphi 0, %s23
    %s43 = sphi 0, %s43
    %s45 = sphi 0, %s43
    %s46 = sphi 0, %s45
    %s60 = sphi 0, %s46
    %s64 = sphi 0, %s64
    %s66 = sphi 0, %s64
    %s67 = sphi 0, %s66
    %s81 = sphi 0, %s67
    %s87 = sphi 0, %s89
    %s90 = sphi 0, %s87
    %s91 = sphi 0, %s90
    %s107 = sphi 0, %s91
  $region4: #{conv3d_block_forward.3} parent=0 // loop_header_branch
    %12 = sbr.rel (%p10) target = $region8
  $region5: #{conv3d_block_forward.3} parent=0 // loop_body
    %s14 = ssub.s32 %s9, 1
    %s15 = ssub.s32 %s9, 2
    %s16 = sadd.s32 %s9, 1
    %s17 = ssub.s32 %s9, %s16
    %p18 = scmp.eq.s32.totalorder %s17, 0
    %s20 = sadd.s32 %s19, 1
    %s21 = scalar_select %p18, %s19, %s20
    %p24 = pneg %p18
    %p25 = scmp.eq.s32.totalorder %s9, 1
    %p26 = por %p24, %p25
    %p27 = scmp.ne.s32.totalorder %s19, %s22
    %p28 = scmp.eq.s32.totalorder %s9, 0
    %p29 = por %p27, %p28
    %p30 = scmp.ne.s32.totalorder %s19, %s22
    %p31 = scmp.eq.s32.totalorder %s14, 1
    %p32 = por %p30, %p31
    %p33 = scmp.ne.s32.totalorder %s22, %s23
    %p34 = scmp.eq.s32.totalorder %s14, 0
    %p35 = por %p33, %p34
    %p36 = scmp.ne.s32.totalorder %s22, %s23
    %p37 = scmp.eq.s32.totalorder %s15, 1
    %p38 = por %p36, %p37
    %p40 = scmp.ne.s32.totalorder %s23, %s39
    %p41 = scmp.eq.s32.totalorder %s15, 0
    %p42 = por %p40, %p41
    %s44 = sadd.s32 %s43, 1
    %p47 = scmp.eq.s32.totalorder %s9, 1
    %p48 = scmp.ne.s32.totalorder %s43, %s45
    %p49 = scmp.eq.s32.totalorder %s9, 0
    %p50 = por %p48, %p49
    %p51 = scmp.ne.s32.totalorder %s43, %s45
    %p52 = scmp.eq.s32.totalorder %s14, 1
    %p53 = por %p51, %p52
    %p54 = scmp.ne.s32.totalorder %s45, %s46
    %p55 = scmp.eq.s32.totalorder %s14, 0
    %p56 = por %p54, %p55
    %p57 = scmp.ne.s32.totalorder %s45, %s46
    %p58 = scmp.eq.s32.totalorder %s15, 1
    %p59 = por %p57, %p58
    %p61 = scmp.ne.s32.totalorder %s46, %s60
    %p62 = scmp.eq.s32.totalorder %s15, 0
    %p63 = por %p61, %p62
    %s65 = sadd.s32 %s64, 1
    %p68 = scmp.eq.s32.totalorder %s9, 1
    %p69 = scmp.ne.s32.totalorder %s64, %s66
    %p70 = scmp.eq.s32.totalorder %s9, 0
    %p71 = por %p69, %p70
    %p72 = scmp.ne.s32.totalorder %s64, %s66
    %p73 = scmp.eq.s32.totalorder %s14, 1
    %p74 = por %p72, %p73
    %p75 = scmp.ne.s32.totalorder %s66, %s67
    %p76 = scmp.eq.s32.totalorder %s14, 0
    %p77 = por %p75, %p76
    %p78 = scmp.ne.s32.totalorder %s66, %s67
    %p79 = scmp.eq.s32.totalorder %s15, 1
    %p80 = por %p78, %p79
    %p82 = scmp.ne.s32.totalorder %s67, %s81
    %p83 = scmp.eq.s32.totalorder %s15, 0
    %p84 = por %p82, %p83
    %s85 = ssub.s32 %s9, %s16
    %p86 = scmp.eq.s32.totalorder %s85, 0
    %s88 = sadd.s32 %s87, 1
    %s89 = scalar_select %p86, %s87, %s88
    %p92 = pneg %p86
    %p93 = scmp.eq.s32.totalorder %s9, 1
    %p94 = por %p92, %p93
    %p95 = scmp.ne.s32.totalorder %s87, %s90
    %p96 = scmp.eq.s32.totalorder %s9, 0
    %p97 = por %p95, %p96
    %p98 = scmp.ne.s32.totalorder %s87, %s90
    %p99 = scmp.eq.s32.totalorder %s14, 1
    %p100 = por %p98, %p99
    %p101 = scmp.ne.s32.totalorder %s90, %s91
    %p102 = scmp.eq.s32.totalorder %s14, 0
    %p103 = por %p101, %p102
    %p104 = scmp.ne.s32.totalorder %s90, %s91
    %p105 = scmp.eq.s32.totalorder %s15, 1
    %p106 = por %p104, %p105
    %p108 = scmp.ne.s32.totalorder %s91, %s107
    %p109 = scmp.eq.s32.totalorder %s15, 0
    %p110 = por %p108, %p109
    %p111 = scmp.le.s32.totalorder 1, %s9
    %p112 = scmp.lt.s32.totalorder %s9, 3
    %p113 = pnand %p111, %p112
    %p114 = pneg %p113
    // Predicated region
    $region9: #{conv3d_block_forward.3} parent=5 // pred_check
      _
    $region10: #{conv3d_block_forward.3} parent=5 // pred_check_branch
      %116 = sbr.rel (%p113) target = $region12
    $region11: #{conv3d_block_forward.3} parent=5 // pred_region
      %s117 = ssub.s32 %s9, 1
      // Predicated region
      $region13: #{conv3d_block_forward.3} parent=11 // pred_check
        %p118 = pneg %p56
      $region14: #{conv3d_block_forward.3} parent=11 // pred_check_branch
        %120 = sbr.rel (%p118) target = $region16
      $region15: #{conv3d_block_forward.3} parent=11 // pred_region
        _
      $region16: #{conv3d_block_forward.3} parent=11 // pred_fallthru
        _
      // Predicated region
      $region17: #{conv3d_block_forward.3} parent=11 // pred_check
        %p121 = pneg %p77
      $region18: #{conv3d_block_forward.3} parent=11 // pred_check_branch
        %123 = sbr.rel (%p121) target = $region20
      $region19: #{conv3d_block_forward.3} parent=11 // pred_region
        _
      $region20: #{conv3d_block_forward.3} parent=11 // pred_fallthru
        _
    $region12: #{conv3d_block_forward.3} parent=5 // pred_fallthru
      _
    %p124 = scmp.lt.s32.totalorder %s9, 2
    // Predicated region
    $region21: #{conv3d_block_forward.3} parent=5 // pred_check
      %p125 = pneg %p124
    $region22: #{conv3d_block_forward.3} parent=5 // pred_check_branch
      %127 = sbr.rel (%p125) target = $region24
    $region23: #{conv3d_block_forward.3} parent=5 // pred_region
      // Predicated region
      $region25: #{conv3d_block_forward.3} parent=23 // pred_check
        %p128 = pneg %p29
      $region26: #{conv3d_block_forward.3} parent=23 // pred_check_branch
        %130 = sbr.rel (%p128) target = $region28
      $region27: #{conv3d_block_forward.3} parent=23 // pred_region
        %p131 = scmp.lt.s32.totalorder %s9, 1
        %s132 = scalar_select %p131, %s9, 1
        %s133 = smul.addr %s132, 4
        %s134 = smul.addr %s133, 4
        %s135 = scalar_lea.vmem %s0, %s134
      $region28: #{conv3d_block_forward.3} parent=23 // pred_fallthru
        _
    $region24: #{conv3d_block_forward.3} parent=5 // pred_fallthru
      _
    %p136 = scmp.le.s32.totalorder 1, %s9
    %p137 = scmp.lt.s32.totalorder %s9, 3
    %p138 = pnand %p136, %p137
    %p139 = pneg %p138
    // Predicated region
    $region29: #{conv3d_block_forward.3} parent=5 // pred_check
      _
    $region30: #{conv3d_block_forward.3} parent=5 // pred_check_branch
      %141 = sbr.rel (%p138) target = $region32
    $region31: #{conv3d_block_forward.3} parent=5 // pred_region
      %s142 = ssub.s32 %s9, 1
      %p143 = scmp.lt.s32.totalorder %s14, 1
      %s144 = scalar_select %p143, %s14, 1
      %s145 = smul.addr %s144, 4
      %s146 = smul.addr %s145, 4
      %s147 = scalar_lea.vmem %s0, %s146
      %p148 = pneg %p35
      %p149 = pneg %p32
      %p150 = pneg %p56
      %p151 = pneg %p53
      %p152 = pneg %p77
      %p153 = pneg %p74
      %p154 = pneg %p103
      %p155 = pneg %p100
      %p156 = scmp.lt.s32.totalorder %s14, 1
      %s157 = scalar_select %p156, %s14, 1
      %s158 = smul.addr %s157, 4
      %s159 = smul.addr %s158, 8
      %s160 = scalar_lea.vmem %s3, %s159
      %p161 = scmp.lt.s32.totalorder %s14, 1
      %s162 = scalar_select %p161, %s14, 1
      %s163 = smul.addr %s162, 4
      %s164 = smul.addr %s163, 4
      %s165 = scalar_lea.vmem %s0, %s164
      %p166 = scmp.lt.s32.totalorder %s14, 1
      %s167 = scalar_select %p166, %s14, 1
      %s168 = smul.addr %s167, 4
      %s169 = smul.addr %s168, 8
      %s170 = scalar_lea.vmem %s3, %s169
      %v171 = vld [vmem:[%s165] sm:$0xff]
      %v172 = vld [vmem:[%s165 + $0x8] sm:$0xff]
      %v173 = vunpack.c.l.bf16 %v171
      %v174 = vunpack.c.h.bf16 %v171
      %v175 = vunpack.c.l.bf16 %v172
      %v176 = vunpack.c.h.bf16 %v172
      %v177 = vld [vmem:[%s1] sm:$0xff]
      %179 = vset.pattern.permute.xlu0 0
      %180 = vperm.xlu0 %179, %v177
      %v181 = vpop.permute.xlu0 %180
      %v183 = vmul.f32 %v173, %v181
      %v184 = vmul.f32 %v174, %v181
      %v185 = vmul.f32 %v175, %v181
      %v186 = vmul.f32 %v176, %v181
      %v187 = vld [vmem:[%s2] sm:$0xff]
      %189 = vset.pattern.permute.xlu0 0
      %190 = vperm.xlu0 %189, %v187
      %v191 = vpop.permute.xlu0 %190
      %v193 = vadd.f32 %v183, %v191
      %v194 = vadd.f32 %v184, %v191
      %v195 = vadd.f32 %v185, %v191
      %v196 = vadd.f32 %v186, %v191
      %v197 = vmax.f32 %v193, 0.0
      %v198 = vmax.f32 %v194, 0.0
      %v199 = vmax.f32 %v195, 0.0
      %v200 = vmax.f32 %v196, 0.0
      %201 = vst [vmem:[%s170] sm:$0xff] %v197
      %202 = vst [vmem:[%s170 + $0x8] sm:$0xff] %v198
      %203 = vst [vmem:[%s170 + $0x10] sm:$0xff] %v199
      %204 = vst [vmem:[%s170 + $0x18] sm:$0xff] %v200
      %p205 = scmp.lt.s32.totalorder %s14, 1
      %s206 = scalar_select %p205, %s14, 1
      %s207 = smul.addr %s206, 4
      %s208 = smul.addr %s207, 8
      %s209 = scalar_lea.vmem %s3, %s208
      // Predicated region
      $region33: #{conv3d_block_forward.3} parent=31 // pred_check
        %p210 = pneg %p100
      $region34: #{conv3d_block_forward.3} parent=31 // pred_check_branch
        %212 = sbr.rel (%p210) target = $region36
      $region35: #{conv3d_block_forward.3} parent=31 // pred_region
        _
      $region36: #{conv3d_block_forward.3} parent=31 // pred_fallthru
        _
    $region32: #{conv3d_block_forward.3} parent=5 // pred_fallthru
      _
    %p213 = scmp.le.s32.totalorder 2, %s9
    // Predicated region
    $region37: #{conv3d_block_forward.3} parent=5 // pred_check
      %p214 = pneg %p213
    $region38: #{conv3d_block_forward.3} parent=5 // pred_check_branch
      %216 = sbr.rel (%p214) target = $region40
    $region39: #{conv3d_block_forward.3} parent=5 // pred_region
      %s217 = ssub.s32 %s9, 2
      // Predicated region
      $region41: #{conv3d_block_forward.3} parent=39 // pred_check
        %p218 = pneg %p106
      $region42: #{conv3d_block_forward.3} parent=39 // pred_check_branch
        %220 = sbr.rel (%p218) target = $region44
      $region43: #{conv3d_block_forward.3} parent=39 // pred_region
        %p221 = scmp.lt.s32.totalorder %s15, 1
        %s222 = scalar_select %p221, %s15, 1
        %s223 = smul.addr %s222, 4
        %s224 = smul.addr %s223, 8
        %s225 = scalar_lea.vmem %s3, %s224
      $region44: #{conv3d_block_forward.3} parent=39 // pred_fallthru
        _
    $region40: #{conv3d_block_forward.3} parent=5 // pred_fallthru
      _
  $region6: #{conv3d_block_forward.3} parent=0 // loop_footer
    %s13 = sadd.s32 1, %s9
  $region7: #{conv3d_block_forward.3} parent=0 // loop_footer_branch
    %8 = sbr.rel target = $region3
  $region8: #{conv3d_block_forward.3} parent=0 // loop_exit
    _

// kernel: conv3d_block_forward.2
$region0: #{conv3d_block_forward.2}
  #allocation0 [shape = 'u32[]', space=smem, size = 0x4, offset = 0x4, fixed_abs, tag = 'smem constant byte address 0x4 - core index']
  #allocation1 [shape = 'u32[72,128]{1,0:T(1,128)}', space=vmem, size = 0x9000, scoped, tag = 'internal scratch']
  #allocation2 [shape = 'bf16[128,1000]{1,0:T(8,128)(2,1)}', space=vmem, size = 0x40000, scoped, tag = 'scratch operand']
  %s0 = inlined_call_operand.vmem [shape: bf16[2,4,1280], index: 0, kind: input, shape index: {}]
  %s1 = inlined_call_operand.vmem [shape: bf16[8,128], index: 1, kind: input, shape index: {}]
  %s2 = inlined_call_operand.vmem [shape: bf16[1000,512], index: 2, kind: input, shape index: {}]
  %s3 = inlined_call_operand.vmem [shape: bf16[2,8,512], index: 3, kind: output, shape index: {0}]
  %s4 = inlined_call_operand.vmem [shape: f32[2,8,2], index: 4, kind: output, shape index: {1}]
  %5 = xla_tuple %s3, %s4
  %s6 = sld [smem:[#allocation0]]
  $region53: #{conv3d_block_forward.2} parent=0
    _
  %s8 = ssub.s32 1, %s6
  %s9 = scalar_select 0, %s8, %s6
  loop: start=0, step=1, limit=4
  $region2: #{conv3d_block_forward.2} parent=0 // loop_pre_header
    _
  $region3: #{conv3d_block_forward.2} parent=0 // loop_header
    %s11 = sphi 0, %s15
    %p12 = scmp.ge.s32.totalorder %s11, 4
    %s21 = sphi 0, %s23
    %s24 = sphi 0, %s21
    %s25 = sphi 0, %s24
    %s41 = sphi 0, %s25
    %s45 = sphi 0, %s45
    %s47 = sphi 0, %s45
    %s48 = sphi 0, %s47
    %s62 = sphi 0, %s48
    %s66 = sphi 0, %s66
    %s68 = sphi 0, %s66
    %s69 = sphi 0, %s68
    %s83 = sphi 0, %s69
    %s89 = sphi 0, %s91
    %s92 = sphi 0, %s89
    %s93 = sphi 0, %s92
    %s109 = sphi 0, %s93
    %s115 = sphi 0, %s117
    %s118 = sphi 0, %s115
    %s119 = sphi 0, %s118
    %s135 = sphi 0, %s119
  $region4: #{conv3d_block_forward.2} parent=0 // loop_header_branch
    %14 = sbr.rel (%p12) target = $region8
  $region5: #{conv3d_block_forward.2} parent=0 // loop_body
    %s16 = ssub.s32 %s11, 1
    %s17 = ssub.s32 %s11, 2
    %s18 = sadd.s32 %s11, 1
    %s19 = ssub.s32 %s11, %s18
    %p20 = scmp.eq.s32.totalorder %s19, 0
    %s22 = sadd.s32 %s21, 1
    %s23 = scalar_select %p20, %s21, %s22
    %p26 = pneg %p20
    %p27 = scmp.eq.s32.totalorder %s11, 1
    %p28 = por %p26, %p27
    %p29 = scmp.ne.s32.totalorder %s21, %s24
    %p30 = scmp.eq.s32.totalorder %s11, 0
    %p31 = por %p29, %p30
    %p32 = scmp.ne.s32.totalorder %s21, %s24
    %p33 = scmp.eq.s32.totalorder %s16, 1
    %p34 = por %p32, %p33
    %p35 = scmp.ne.s32.totalorder %s24, %s25
    %p36 = scmp.eq.s32.totalorder %s16, 0
    %p37 = por %p35, %p36
    %p38 = scmp.ne.s32.totalorder %s24, %s25
    %p39 = scmp.eq.s32.totalorder %s17, 1
    %p40 = por %p38, %p39
    %p42 = scmp.ne.s32.totalorder %s25, %s41
    %p43 = scmp.eq.s32.totalorder %s17, 0
    %p44 = por %p42, %p43
    %s46 = sadd.s32 %s45, 1
    %p49 = scmp.eq.s32.totalorder %s11, 1
    %p50 = scmp.ne.s32.totalorder %s45, %s47
    %p51 = scmp.eq.s32.totalorder %s11, 0
    %p52 = por %p50, %p51
    %p53 = scmp.ne.s32.totalorder %s45, %s47
    %p54 = scmp.eq.s32.totalorder %s16, 1
    %p55 = por %p53, %p54
    %p56 = scmp.ne.s32.totalorder %s47, %s48
    %p57 = scmp.eq.s32.totalorder %s16, 0
    %p58 = por %p56, %p57
    %p59 = scmp.ne.s32.totalorder %s47, %s48
    %p60 = scmp.eq.s32.totalorder %s17, 1
    %p61 = por %p59, %p60
    %p63 = scmp.ne.s32.totalorder %s48, %s62
    %p64 = scmp.eq.s32.totalorder %s17, 0
    %p65 = por %p63, %p64
    %s67 = sadd.s32 %s66, 1
    %p70 = scmp.eq.s32.totalorder %s11, 1
    %p71 = scmp.ne.s32.totalorder %s66, %s68
    %p72 = scmp.eq.s32.totalorder %s11, 0
    %p73 = por %p71, %p72
    %p74 = scmp.ne.s32.totalorder %s66, %s68
    %p75 = scmp.eq.s32.totalorder %s16, 1
    %p76 = por %p74, %p75
    %p77 = scmp.ne.s32.totalorder %s68, %s69
    %p78 = scmp.eq.s32.totalorder %s16, 0
    %p79 = por %p77, %p78
    %p80 = scmp.ne.s32.totalorder %s68, %s69
    %p81 = scmp.eq.s32.totalorder %s17, 1
    %p82 = por %p80, %p81
    %p84 = scmp.ne.s32.totalorder %s69, %s83
    %p85 = scmp.eq.s32.totalorder %s17, 0
    %p86 = por %p84, %p85
    %s87 = ssub.s32 %s11, %s18
    %p88 = scmp.eq.s32.totalorder %s87, 0
    %s90 = sadd.s32 %s89, 1
    %s91 = scalar_select %p88, %s89, %s90
    %p94 = pneg %p88
    %p95 = scmp.eq.s32.totalorder %s11, 1
    %p96 = por %p94, %p95
    %p97 = scmp.ne.s32.totalorder %s89, %s92
    %p98 = scmp.eq.s32.totalorder %s11, 0
    %p99 = por %p97, %p98
    %p100 = scmp.ne.s32.totalorder %s89, %s92
    %p101 = scmp.eq.s32.totalorder %s16, 1
    %p102 = por %p100, %p101
    %p103 = scmp.ne.s32.totalorder %s92, %s93
    %p104 = scmp.eq.s32.totalorder %s16, 0
    %p105 = por %p103, %p104
    %p106 = scmp.ne.s32.totalorder %s92, %s93
    %p107 = scmp.eq.s32.totalorder %s17, 1
    %p108 = por %p106, %p107
    %p110 = scmp.ne.s32.totalorder %s93, %s109
    %p111 = scmp.eq.s32.totalorder %s17, 0
    %p112 = por %p110, %p111
    %s113 = ssub.s32 %s11, %s18
    %p114 = scmp.eq.s32.totalorder %s113, 0
    %s116 = sadd.s32 %s115, 1
    %s117 = scalar_select %p114, %s115, %s116
    %p120 = pneg %p114
    %p121 = scmp.eq.s32.totalorder %s11, 1
    %p122 = por %p120, %p121
    %p123 = scmp.ne.s32.totalorder %s115, %s118
    %p124 = scmp.eq.s32.totalorder %s11, 0
    %p125 = por %p123, %p124
    %p126 = scmp.ne.s32.totalorder %s115, %s118
    %p127 = scmp.eq.s32.totalorder %s16, 1
    %p128 = por %p126, %p127
    %p129 = scmp.ne.s32.totalorder %s118, %s119
    %p130 = scmp.eq.s32.totalorder %s16, 0
    %p131 = por %p129, %p130
    %p132 = scmp.ne.s32.totalorder %s118, %s119
    %p133 = scmp.eq.s32.totalorder %s17, 1
    %p134 = por %p132, %p133
    %p136 = scmp.ne.s32.totalorder %s119, %s135
    %p137 = scmp.eq.s32.totalorder %s17, 0
    %p138 = por %p136, %p137
    %p139 = scmp.le.s32.totalorder 1, %s11
    %p140 = scmp.lt.s32.totalorder %s11, 3
    %p141 = pnand %p139, %p140
    %p142 = pneg %p141
    // Predicated region
    $region9: #{conv3d_block_forward.2} parent=5 // pred_check
      _
    $region10: #{conv3d_block_forward.2} parent=5 // pred_check_branch
      %144 = sbr.rel (%p141) target = $region12
    $region11: #{conv3d_block_forward.2} parent=5 // pred_region
      %s145 = ssub.s32 %s11, 1
      // Predicated region
      $region13: #{conv3d_block_forward.2} parent=11 // pred_check
        %p146 = pneg %p58
      $region14: #{conv3d_block_forward.2} parent=11 // pred_check_branch
        %148 = sbr.rel (%p146) target = $region16
      $region15: #{conv3d_block_forward.2} parent=11 // pred_region
        _
      $region16: #{conv3d_block_forward.2} parent=11 // pred_fallthru
        _
      // Predicated region
      $region17: #{conv3d_block_forward.2} parent=11 // pred_check
        %p149 = pneg %p79
      $region18: #{conv3d_block_forward.2} parent=11 // pred_check_branch
        %151 = sbr.rel (%p149) target = $region20
      $region19: #{conv3d_block_forward.2} parent=11 // pred_region
        _
      $region20: #{conv3d_block_forward.2} parent=11 // pred_fallthru
        _
    $region12: #{conv3d_block_forward.2} parent=5 // pred_fallthru
      _
    %p152 = scmp.lt.s32.totalorder %s11, 2
    // Predicated region
    $region21: #{conv3d_block_forward.2} parent=5 // pred_check
      %p153 = pneg %p152
    $region22: #{conv3d_block_forward.2} parent=5 // pred_check_branch
      %155 = sbr.rel (%p153) target = $region24
    $region23: #{conv3d_block_forward.2} parent=5 // pred_region
      // Predicated region
      $region25: #{conv3d_block_forward.2} parent=23 // pred_check
        %p156 = pneg %p31
      $region26: #{conv3d_block_forward.2} parent=23 // pred_check_branch
        %158 = sbr.rel (%p156) target = $region28
      $region27: #{conv3d_block_forward.2} parent=23 // pred_region
        %p159 = scmp.lt.s32.totalorder %s11, 1
        %s160 = scalar_select %p159, %s11, 1
        %s161 = smul.addr %s160, 10
        %s162 = smul.addr %s161, 2
        %s163 = scalar_lea.vmem %s0, %s162
      $region28: #{conv3d_block_forward.2} parent=23 // pred_fallthru
        _
    $region24: #{conv3d_block_forward.2} parent=5 // pred_fallthru
      _
    %p164 = scmp.le.s32.totalorder 1, %s11
    %p165 = scmp.lt.s32.totalorder %s11, 3
    %p166 = pnand %p164, %p165
    %p167 = pneg %p166
    // Predicated region
    $region29: #{conv3d_block_forward.2} parent=5 // pred_check
      _
    $region30: #{conv3d_block_forward.2} parent=5 // pred_check_branch
      %169 = sbr.rel (%p166) target = $region32
    $region31: #{conv3d_block_forward.2} parent=5 // pred_region
      %s170 = ssub.s32 %s11, 1
      %p171 = scmp.lt.s32.totalorder %s16, 1
      %s172 = scalar_select %p171, %s16, 1
      %s173 = smul.addr %s172, 10
      %s174 = smul.addr %s173, 2
      %s175 = scalar_lea.vmem %s0, %s174
      %p176 = pneg %p37
      %p177 = pneg %p34
      %p178 = pneg %p58
      %p179 = pneg %p55
      %p180 = pneg %p79
      %p181 = pneg %p76
      %p182 = pneg %p105
      %p183 = pneg %p102
      %p184 = scmp.lt.s32.totalorder %s16, 1
      %s185 = scalar_select %p184, %s16, 1
      %s186 = smul.addr %s185, 4
      %s187 = smul.addr %s186, 4
      %s188 = scalar_lea.vmem %s3, %s187
      %p189 = pneg %p131
      %p190 = pneg %p128
      %p191 = scmp.lt.s32.totalorder %s16, 1
      %s192 = scalar_select %p191, %s16, 1
      %s193 = smul.addr %s192, 8
      %s194 = scalar_lea.vmem %s4, %s193
      %p195 = scmp.lt.s32.totalorder %s16, 1
      %s196 = scalar_select %p195, %s16, 1
      %s197 = smul.addr %s196, 10
      %s198 = smul.addr %s197, 2
      %s199 = scalar_lea.vmem %s0, %s198
      %p200 = scmp.lt.s32.totalorder %s16, 1
      %s201 = scalar_select %p200, %s16, 1
      %s202 = smul.addr %s201, 4
      %s203 = smul.addr %s202, 4
      %s204 = scalar_lea.vmem %s3, %s203
      %p205 = scmp.lt.s32.totalorder %s16, 1
      %s206 = scalar_select %p205, %s16, 1
      %s207 = smul.addr %s206, 8
      %s208 = scalar_lea.vmem %s4, %s207
      %210 = vst [vmem:[#allocation2 + $0x1a0] sm:$0xcc] 0
      %211 = vst [vmem:[#allocation2 + $0x1a8] sm:$0xcc] 0
      %212 = vst [vmem:[#allocation2 + $0x1b0] sm:$0xcc] 0
      %vm213 = vcmask 1043458
      %vm214 = vcmask 850950
      %vm215 = vmor %vm214, %vm213
      %216 = vst.msk [vmem:[#allocation2 + $0x1b8] sm:$0xcc] %vm215, 0
      %217 = vst [vmem:[#allocation2 + $0x1c0] sm:$0xff] 0
      %218 = vst [vmem:[#allocation2 + $0x1c8] sm:$0xff] 0
      %219 = vst [vmem:[#allocation2 + $0x1d0] sm:$0xff] 0
      %vm220 = vcmask 1043456
      %vm221 = vcmask 850948
      %vm222 = vmor %vm221, %vm220
      %223 = vst.msk [vmem:[#allocation2 + $0x1d8] sm:$0xff] %vm222, 0
      %224 = vst [vmem:[#allocation2 + $0x1e0] sm:$0xff] 0
      %225 = vst [vmem:[#allocation2 + $0x1e8] sm:$0xff] 0
      %226 = vst [vmem:[#allocation2 + $0x1f0] sm:$0xff] 0
      %227 = vst.msk [vmem:[#allocation2 + $0x1f8] sm:$0xff] %vm222, 0
      %v228 = vld [vmem:[%s199] sm:$0xff]
      %v229 = vld [vmem:[%s199 + $0x8] sm:$0xff]
      %v230 = vld [vmem:[%s199 + $0x10] sm:$0xf]
      %232 = vst [vmem:[#allocation1] ss:$2 sm:$0xff] %v228
      %s234 = scalar_lea.vmem [#allocation1], 16
      %235 = vst [vmem:[%s234] ss:$2 sm:$0xff] %v229
      %v236 = vld.sshfl [vmem:[#allocation1] sm:$0xff pattern:$0x75643120]
      %v238 = vld.sshfl [vmem:[#allocation1 + $0x8] sm:$0xff pattern:$0x75643120]
      %v240 = vld.sshfl [vmem:[#allocation1 + $0x10] sm:$0xff pattern:$0x75643120]
      %v242 = vld.sshfl [vmem:[#allocation1 + $0x18] sm:$0xff pattern:$0x75643120]
      %244 = vrot.lane.b32.xlu0 %v236, 111
      %v245 = vpop.permute.xlu0 %244
      %246 = vrot.lane.b32.xlu0 %v238, 111
      %v247 = vpop.permute.xlu0 %246
      %248 = vrot.lane.b32.xlu0 %v240, 111
      %v249 = vpop.permute.xlu0 %248
      %250 = vrot.lane.b32.xlu0 %v242, 111
      %v251 = vpop.permute.xlu0 %250
      %v252 = vrot.slane %v245, 4
      %v253 = vrot.slane %v247, 4
      %v254 = vrot.slane %v249, 4
      %v255 = vrot.slane %v251, 4
      %vm256 = vcmask 1043456
      %v257 = vsel %vm256, %v252, %v253
      %vm258 = vcmask 908288
      %v259 = vsel %vm258, %v245, %v257
      %v260 = vsel %vm256, %v253, %v254
      %v261 = vsel %vm258, %v247, %v260
      %v262 = vsel %vm256, %v254, %v255
      %v263 = vsel %vm258, %v249, %v262
      %v264 = vsel %vm258, %v251, %v255
      %269 = vst [vmem:[#allocation2] sm:$0x33] %v259
      %270 = vst [vmem:[#allocation2 + $0x8] sm:$0x33] %v261
      %271 = vst [vmem:[#allocation2 + $0x10] sm:$0x33] %v263
      %vm272 = vcmask 1041408
      %vm273 = vcmask 848900
      %vm274 = vmor %vm273, %vm272
      %275 = vst.msk [vmem:[#allocation2 + $0x18] sm:$0x33] %vm274, %v264
      %s276 = scalar_lea.vmem [#allocation1], 1
      %277 = vst [vmem:[%s276] ss:$2 sm:$0xff] %v228
      %s278 = scalar_lea.vmem [#allocation1], 17
      %279 = vst [vmem:[%s278] ss:$2 sm:$0xff] %v229
      %v280 = vld.sshfl [vmem:[#allocation1] sm:$0xff pattern:$0x75643120]
      %v282 = vld.sshfl [vmem:[#allocation1 + $0x8] sm:$0xff pattern:$0x75643120]
      %v284 = vld.sshfl [vmem:[#allocation1 + $0x10] sm:$0xff pattern:$0x75643120]
      %v286 = vld.sshfl [vmem:[#allocation1 + $0x18] sm:$0xff pattern:$0x75643120]
      %288 = vrot.lane.b32.xlu0 %v280, 110
      %v289 = vpop.permute.xlu0 %288
      %290 = vrot.lane.b32.xlu0 %v282, 110
      %v291 = vpop.permute.xlu0 %290
      %292 = vrot.lane.b32.xlu0 %v284, 110
      %v293 = vpop.permute.xlu0 %292
      %294 = vrot.lane.b32.xlu0 %v286, 110
      %v295 = vpop.permute.xlu0 %294
      %v296 = vrot.slane %v289, 4
      %v297 = vrot.slane %v291, 4
      %v298 = vrot.slane %v293, 4
      %v299 = vrot.slane %v295, 4
      %v300 = vsel %vm256, %v296, %v297
      %vm301 = vcmask 900096
      %v302 = vsel %vm301, %v289, %v300
      %v303 = vsel %vm256, %v297, %v298
      %v304 = vsel %vm301, %v291, %v303
      %v305 = vsel %vm256, %v298, %v299
      %v306 = vsel %vm301, %v293, %v305
      %v307 = vsel %vm301, %v295, %v299
      %312 = vst [vmem:[#allocation2] sm:$0xcc] %v302
      %313 = vst [vmem:[#allocation2 + $0x8] sm:$0xcc] %v304
      %314 = vst [vmem:[#allocation2 + $0x10] sm:$0xcc] %v306
      %315 = vst.msk [vmem:[#allocation2 + $0x18] sm:$0xcc] %vm215, %v307
      %316 = vst [vmem:[#allocation1] ss:$2 sm:$0xff] %v228
      %s317 = scalar_lea.vmem [#allocation1], 16
      %318 = vst [vmem:[%s317] ss:$2 sm:$0xff] %v229
      %v319 = vld.sshfl [vmem:[#allocation1] sm:$0xff pattern:$0x75643120]
      %v321 = vld.sshfl [vmem:[#allocation1 + $0x8] sm:$0xff pattern:$0x75643120]
      %v323 = vld.sshfl [vmem:[#allocation1 + $0x10] sm:$0xff pattern:$0x75643120]
      %v325 = vld.sshfl [vmem:[#allocation1 + $0x18] sm:$0xff pattern:$0x75643120]
      %327 = vrot.lane.b32.xlu0 %v319, 109
      %v328 = vpop.permute.xlu0 %327
      %329 = vrot.lane.b32.xlu0 %v321, 109
      %v330 = vpop.permute.xlu0 %329
      %331 = vrot.lane.b32.xlu0 %v323, 109
      %v332 = vpop.permute.xlu0 %331
      %333 = vrot.lane.b32.xlu0 %v325, 109
      %v334 = vpop.permute.xlu0 %333
      %v335 = vrot.slane %v328, 4
      %v336 = vrot.slane %v330, 4
      %v337 = vrot.slane %v332, 4
      %v338 = vrot.slane %v334, 4
      %v339 = vsel %vm256, %v335, %v336
      %vm340 = vcmask 891904
      %v341 = vsel %vm340, %v328, %v339
      %v342 = vsel %vm256, %v336, %v337
      %v343 = vsel %vm340, %v330, %v342
      %v344 = vsel %vm256, %v337, %v338
      %v345 = vsel %vm340, %v332, %v344
      %v346 = vsel %vm340, %v334, %v338
      %351 = vst [vmem:[#allocation2 + $0x20] sm:$0x33] %v341
      %352 = vst [vmem:[#allocation2 + $0x28] sm:$0x33] %v343
      %353 = vst [vmem:[#allocation2 + $0x30] sm:$0x33] %v345
      %354 = vst.msk [vmem:[#allocation2 + $0x38] sm:$0x33] %vm274, %v346
      %s355 = scalar_lea.vmem [#allocation1], 1
      %356 = vst [vmem:[%s355] ss:$2 sm:$0xff] %v228
      %s357 = scalar_lea.vmem [#allocation1], 17
      %358 = vst [vmem:[%s357] ss:$2 sm:$0xff] %v229
      %s360 = scalar_lea.vmem [#allocation1], 33
      %361 = vst [vmem:[%s360] ss:$2 sm:$0xff] %v230
      %v362 = vld.sshfl [vmem:[#allocation1] sm:$0xff pattern:$0x75643120]
      %v364 = vld.sshfl [vmem:[#allocation1 + $0x8] sm:$0xff pattern:$0x75643120]
      %v366 = vld.sshfl [vmem:[#allocation1 + $0x10] sm:$0xff pattern:$0x75643120]
      %v368 = vld.sshfl [vmem:[#allocation1 + $0x18] sm:$0xff pattern:$0x75643120]
      %v370 = vld.sshfl [vmem:[#allocation1 + $0x20] sm:$0xff pattern:$0x75643120]
      %372 = vrot.lane.b32.xlu0 %v362, 101
      %v373 = vpop.permute.xlu0 %372
      %374 = vrot.lane.b32.xlu0 %v364, 101
      %v375 = vpop.permute.xlu0 %374
      %376 = vrot.lane.b32.xlu0 %v366, 101
      %v377 = vpop.permute.xlu0 %376
      %378 = vrot.lane.b32.xlu0 %v368, 101
      %v379 = vpop.permute.xlu0 %378
      %380 = vrot.lane.b32.xlu0 %v370, 101
      %v381 = vpop.permute.xlu0 %380
      %v382 = vrot.slane %v373, 4
      %v383 = vrot.slane %v375, 4
      %v384 = vrot.slane %v377, 4
      %v385 = vrot.slane %v379, 4
      %v386 = vrot.slane %v381, 4
      %v387 = vsel %vm256, %v382, %v383
      %vm388 = vcmask 826368
      %v389 = vsel %vm388, %v373, %v387
      %v390 = vsel %vm256, %v383, %v384
      %v391 = vsel %vm388, %v375, %v390
      %v392 = vsel %vm256, %v384, %v385
      %v393 = vsel %vm388, %v377, %v392
      %v394 = vsel %vm256, %v385, %v386
      %v395 = vsel %vm388, %v379, %v394
      %400 = vst [vmem:[#allocation2 + $0x20] sm:$0xcc] %v389
      %401 = vst [vmem:[#allocation2 + $0x28] sm:$0xcc] %v391
      %402 = vst [vmem:[#allocation2 + $0x30] sm:$0xcc] %v393
      %403 = vst.msk [vmem:[#allocation2 + $0x38] sm:$0xcc] %vm215, %v395
      %404 = vst [vmem:[#allocation1] ss:$2 sm:$0xff] %v228
      %s405 = scalar_lea.vmem [#allocation1], 16
      %406 = vst [vmem:[%s405] ss:$2 sm:$0xff] %v229
      %s407 = scalar_lea.vmem [#allocation1], 32
      %408 = vst [vmem:[%s407] ss:$2 sm:$0xff] %v230
      %v409 = vld.sshfl [vmem:[#allocation1] sm:$0xff pattern:$0x75643120]
      %v411 = vld.sshfl [vmem:[#allocation1 + $0x8] sm:$0xff pattern:$0x75643120]
      %v413 = vld.sshfl [vmem:[#allocation1 + $0x10] sm:$0xff pattern:$0x75643120]
      %v415 = vld.sshfl [vmem:[#allocation1 + $0x18] sm:$0xff pattern:$0x75643120]
      %v417 = vld.sshfl [vmem:[#allocation1 + $0x20] sm:$0xff pattern:$0x75643120]
      %419 = vrot.lane.b32.xlu0 %v409, 100
      %v420 = vpop.permute.xlu0 %419
      %421 = vrot.lane.b32.xlu0 %v411, 100
      %v422 = vpop.permute.xlu0 %421
      %423 = vrot.lane.b32.xlu0 %v413, 100
      %v424 = vpop.permute.xlu0 %423
      %425 = vrot.lane.b32.xlu0 %v415, 100
      %v426 = vpop.permute.xlu0 %425
      %427 = vrot.lane.b32.xlu0 %v417, 100
      %v428 = vpop.permute.xlu0 %427
      %v429 = vrot.slane %v420, 4
      %v430 = vrot.slane %v422, 4
      %v431 = vrot.slane %v424, 4
      %v432 = vrot.slane %v426, 4
      %v433 = vrot.slane %v428, 4
      %v434 = vsel %vm256, %v429, %v430
      %vm435 = vcmask 818176
      %v436 = vsel %vm435, %v420, %v434
      %v437 = vsel %vm256, %v430, %v431
      %v438 = vsel %vm435, %v422, %v437
      %v439 = vsel %vm256, %v431, %v432
      %v440 = vsel %vm435, %v424, %v439
      %v441 = vsel %vm256, %v432, %v433
      %v442 = vsel %vm435, %v426, %v441
      %447 = vst [vmem:[#allocation2 + $0x40] sm:$0x33] %v436
      %448 = vst [vmem:[#allocation2 + $0x48] sm:$0x33] %v438
      %449 = vst [vmem:[#allocation2 + $0x50] sm:$0x33] %v440
      %450 = vst.msk [vmem:[#allocation2 + $0x58] sm:$0x33] %vm274, %v442
      %s451 = scalar_lea.vmem [#allocation1], 1
      %452 = vst [vmem:[%s451] ss:$2 sm:$0xff] %v228
      %s453 = scalar_lea.vmem [#allocation1], 17
      %454 = vst [vmem:[%s453] ss:$2 sm:$0xff] %v229
      %s455 = scalar_lea.vmem [#allocation1], 33
      %456 = vst [vmem:[%s455] ss:$2 sm:$0xff] %v230
      %v457 = vld.sshfl [vmem:[#allocation1] sm:$0xff pattern:$0x75643120]
      %v459 = vld.sshfl [vmem:[#allocation1 + $0x8] sm:$0xff pattern:$0x75643120]
      %v461 = vld.sshfl [vmem:[#allocation1 + $0x10] sm:$0xff pattern:$0x75643120]
      %v463 = vld.sshfl [vmem:[#allocation1 + $0x18] sm:$0xff pattern:$0x75643120]
      %v465 = vld.sshfl [vmem:[#allocation1 + $0x20] sm:$0xff pattern:$0x75643120]
      %467 = vrot.lane.b32.xlu0 %v457, 99
      %v468 = vpop.permute.xlu0 %467
      %469 = vrot.lane.b32.xlu0 %v459, 99
      %v470 = vpop.permute.xlu0 %469
      %471 = vrot.lane.b32.xlu0 %v461, 99
      %v472 = vpop.permute.xlu0 %471
      %473 = vrot.lane.b32.xlu0 %v463, 99
      %v474 = vpop.permute.xlu0 %473
      %475 = vrot.lane.b32.xlu0 %v465, 99
      %v476 = vpop.permute.xlu0 %475
      %v477 = vrot.slane %v468, 4
      %v478 = vrot.slane %v470, 4
      %v479 = vrot.slane %v472, 4
      %v480 = vrot.slane %v474, 4
      %v481 = vrot.slane %v476, 4
      %v482 = vsel %vm256, %v477, %v478
      %vm483 = vcmask 809984
      %v484 = vsel %vm483, %v468, %v482
      %v485 = vsel %vm256, %v478, %v479
      %v486 = vsel %vm483, %v470, %v485
      %v487 = vsel %vm256, %v479, %v480
      %v488 = vsel %vm483, %v472, %v487
      %v489 = vsel %vm256, %v480, %v481
      %v490 = vsel %vm483, %v474, %v489
      %495 = vst [vmem:[#allocation2 + $0x40] sm:$0xcc] %v484
      %496 = vst [vmem:[#allocation2 + $0x48] sm:$0xcc] %v486
      %497 = vst [vmem:[#allocation2 + $0x50] sm:$0xcc] %v488
      %498 = vst.msk [vmem:[#allocation2 + $0x58] sm:$0xcc] %vm215, %v490
      %499 = vst [vmem:[#allocation1] ss:$2 sm:$0xff] %v228
      %s500 = scalar_lea.vmem [#allocation1], 16
      %501 = vst [vmem:[%s500] ss:$2 sm:$0xff] %v229
      %s502 = scalar_lea.vmem [#allocation1], 32
      %503 = vst [vmem:[%s502] ss:$2 sm:$0xff] %v230
      %v504 = vld.sshfl [vmem:[#allocation1] sm:$0xff pattern:$0x75643120]
      %v506 = vld.sshfl [vmem:[#allocation1 + $0x8] sm:$0xff pattern:$0x75643120]
      %v508 = vld.sshfl [vmem:[#allocation1 + $0x10] sm:$0xff pattern:$0x75643120]
      %v510 = vld.sshfl [vmem:[#allocation1 + $0x18] sm:$0xff pattern:$0x75643120]
      %v512 = vld.sshfl [vmem:[#allocation1 + $0x20] sm:$0xff pattern:$0x75643120]
      %514 = vrot.lane.b32.xlu0 %v504, 91
      %v515 = vpop.permute.xlu0 %514
      %516 = vrot.lane.b32.xlu0 %v506, 91
      %v517 = vpop.permute.xlu0 %516
      %518 = vrot.lane.b32.xlu0 %v508, 91
      %v519 = vpop.permute.xlu0 %518
      %520 = vrot.lane.b32.xlu0 %v510, 91
      %v521 = vpop.permute.xlu0 %520
      %522 = vrot.lane.b32.xlu0 %v512, 91
      %v523 = vpop.permute.xlu0 %522
      %v524 = vrot.slane %v515, 4
      %v525 = vrot.slane %v517, 4
      %v526 = vrot.slane %v519, 4
      %v527 = vrot.slane %v521, 4
      %v528 = vrot.slane %v523, 4
      %v529 = vsel %vm256, %v524, %v525
      %vm530 = vcmask 744448
      %v531 = vsel %vm530, %v515, %v529
      %v532 = vsel %vm256, %v525, %v526
      %v533 = vsel %vm530, %v517, %v532
      %v534 = vsel %vm256, %v526, %v527
      %v535 = vsel %vm530, %v519, %v534
      %v536 = vsel %vm256, %v527, %v528
      %v537 = vsel %vm530, %v521, %v536
      %542 = vst [vmem:[#allocation2 + $0x60] sm:$0x33] %v531
      %543 = vst [vmem:[#allocation2 + $0x68] sm:$0x33] %v533
      %544 = vst [vmem:[#allocation2 + $0x70] sm:$0x33] %v535
      %545 = vst.msk [vmem:[#allocation2 + $0x78] sm:$0x33] %vm274, %v537
      %s546 = scalar_lea.vmem [#allocation1], 1
      %547 = vst [vmem:[%s546] ss:$2 sm:$0xff] %v228
      %s548 = scalar_lea.vmem [#allocation1], 17
      %549 = vst [vmem:[%s548] ss:$2 sm:$0xff] %v229
      %s550 = scalar_lea.vmem [#allocation1], 33
      %551 = vst [vmem:[%s550] ss:$2 sm:$0xff] %v230
      %v552 = vld.sshfl [vmem:[#allocation1] sm:$0xff pattern:$0x75643120]
      %v554 = vld.sshfl [vmem:[#allocation1 + $0x8] sm:$0xff pattern:$0x75643120]
      %v556 = vld.sshfl [vmem:[#allocation1 + $0x10] sm:$0xff pattern:$0x75643120]
      %v558 = vld.sshfl [vmem:[#allocation1 + $0x18] sm:$0xff pattern:$0x75643120]
      %v560 = vld.sshfl [vmem:[#allocation1 + $0x20] sm:$0xff pattern:$0x75643120]
      %562 = vrot.lane.b32.xlu0 %v552, 90
      %v563 = vpop.permute.xlu0 %562
      %564 = vrot.lane.b32.xlu0 %v554, 90
      %v565 = vpop.permute.xlu0 %564
      %566 = vrot.lane.b32.xlu0 %v556, 90
      %v567 = vpop.permute.xlu0 %566
      %568 = vrot.lane.b32.xlu0 %v558, 90
      %v569 = vpop.permute.xlu0 %568
      %570 = vrot.lane.b32.xlu0 %v560, 90
      %v571 = vpop.permute.xlu0 %570
      %v572 = vrot.slane %v563, 4
      %v573 = vrot.slane %v565, 4
      %v574 = vrot.slane %v567, 4
      %v575 = vrot.slane %v569, 4
      %v576 = vrot.slane %v571, 4
      %v577 = vsel %vm256, %v572, %v573
      %vm578 = vcmask 736256
      %v579 = vsel %vm578, %v563, %v577
      %v580 = vsel %vm256, %v573, %v574
      %v581 = vsel %vm578, %v565, %v580
      %v582 = vsel %vm256, %v574, %v575
      %v583 = vsel %vm578, %v567, %v582
      %v584 = vsel %vm256, %v575, %v576
      %v585 = vsel %vm578, %v569, %v584
      %590 = vst [vmem:[#allocation2 + $0x60] sm:$0xcc] %v579
      %591 = vst [vmem:[#allocation2 + $0x68] sm:$0xcc] %v581
      %592 = vst [vmem:[#allocation2 + $0x70] sm:$0xcc] %v583
      %593 = vst.msk [vmem:[#allocation2 + $0x78] sm:$0xcc] %vm215, %v585
      %594 = vst [vmem:[#allocation1] ss:$2 sm:$0xff] %v228
      %s595 = scalar_lea.vmem [#allocation1], 16
      %596 = vst [vmem:[%s595] ss:$2 sm:$0xff] %v229
      %s597 = scalar_lea.vmem [#allocation1], 32
      %598 = vst [vmem:[%s597] ss:$2 sm:$0xff] %v230
      %v599 = vld.sshfl [vmem:[#allocation1] sm:$0xff pattern:$0x75643120]
      %v601 = vld.sshfl [vmem:[#allocation1 + $0x8] sm:$0xff pattern:$0x75643120]
      %v603 = vld.sshfl [vmem:[#allocation1 + $0x10] sm:$0xff pattern:$0x75643120]
      %v605 = vld.sshfl [vmem:[#allocation1 + $0x18] sm:$0xff pattern:$0x75643120]
      %v607 = vld.sshfl [vmem:[#allocation1 + $0x20] sm:$0xff pattern:$0x75643120]
      %609 = vrot.lane.b32.xlu0 %v599, 89
      %v610 = vpop.permute.xlu0 %609
      %611 = vrot.lane.b32.xlu0 %v601, 89
      %v612 = vpop.permute.xlu0 %611
      %613 = vrot.lane.b32.xlu0 %v603, 89
      %v614 = vpop.permute.xlu0 %613
      %615 = vrot.lane.b32.xlu0 %v605, 89
      %v616 = vpop.permute.xlu0 %615
      %617 = vrot.lane.b32.xlu0 %v607, 89
      %v618 = vpop.permute.xlu0 %617
      %v619 = vrot.slane %v610, 4
      %v620 = vrot.slane %v612, 4
      %v621 = vrot.slane %v614, 4
      %v622 = vrot.slane %v616, 4
      %v623 = vrot.slane %v618, 4
      %v624 = vsel %vm256, %v619, %v620
      %vm625 = vcmask 728064
      %v626 = vsel %vm625, %v610, %v624
      %v627 = vsel %vm256, %v620, %v621
      %v628 = vsel %vm625, %v612, %v627
      %v629 = vsel %vm256, %v621, %v622
      %v630 = vsel %vm625, %v614, %v629
      %v631 = vsel %vm256, %v622, %v623
      %v632 = vsel %vm625, %v616, %v631
      %637 = vst [vmem:[#allocation2 + $0x80] sm:$0x33] %v626
      %638 = vst [vmem:[#allocation2 + $0x88] sm:$0x33] %v628
      %639 = vst [vmem:[#allocation2 + $0x90] sm:$0x33] %v630
      %640 = vst.msk [vmem:[#allocation2 + $0x98] sm:$0x33] %vm274, %v632
      %s641 = scalar_lea.vmem [#allocation1], 1
      %642 = vst [vmem:[%s641] ss:$2 sm:$0xff] %v228
      %s643 = scalar_lea.vmem [#allocation1], 17
      %644 = vst [vmem:[%s643] ss:$2 sm:$0xff] %v229
      %s645 = scalar_lea.vmem [#allocation1], 33
      %646 = vst [vmem:[%s645] ss:$2 sm:$0xff] %v230
      %v647 = vld.sshfl [vmem:[#allocation1] sm:$0xff pattern:$0x75643120]
      %v649 = vld.sshfl [vmem:[#allocation1 + $0x8] sm:$0xff pattern:$0x75643120]
      %v651 = vld.sshfl [vmem:[#allocation1 + $0x10] sm:$0xff pattern:$0x75643120]
      %v653 = vld.sshfl [vmem:[#allocation1 + $0x18] sm:$0xff pattern:$0x75643120]
      %v655 = vld.sshfl [vmem:[#allocation1 + $0x20] sm:$0xff pattern:$0x75643120]
      %657 = vrot.lane.b32.xlu0 %v647, 11
      %v658 = vpop.permute.xlu0 %657
      %659 = vrot.lane.b32.xlu0 %v649, 11
      %v660 = vpop.permute.xlu0 %659
      %661 = vrot.lane.b32.xlu0 %v651, 11
      %v662 = vpop.permute.xlu0 %661
      %663 = vrot.lane.b32.xlu0 %v653, 11
      %v664 = vpop.permute.xlu0 %663
      %665 = vrot.lane.b32.xlu0 %v655, 11
      %v666 = vpop.permute.xlu0 %665
      %v667 = vrot.slane %v658, 4
      %v668 = vrot.slane %v660, 4
      %v669 = vrot.slane %v662, 4
      %v670 = vrot.slane %v664, 4
      %v671 = vrot.slane %v666, 4
      %v672 = vsel %vm256, %v667, %v668
      %vm673 = vcmask 89088
      %v674 = vsel %vm673, %v658, %v672
      %v675 = vsel %vm256, %v668, %v669
      %v676 = vsel %vm673, %v660, %v675
      %v677 = vsel %vm256, %v669, %v670
      %v678 = vsel %vm673, %v662, %v677
      %v679 = vsel %vm256, %v670, %v671
      %v680 = vsel %vm673, %v664, %v679
      %685 = vst [vmem:[#allocation2 + $0x80] sm:$0xcc] %v674
      %686 = vst [vmem:[#allocation2 + $0x88] sm:$0xcc] %v676
      %687 = vst [vmem:[#allocation2 + $0x90] sm:$0xcc] %v678
      %688 = vst.msk [vmem:[#allocation2 + $0x98] sm:$0xcc] %vm215, %v680
      %689 = vst [vmem:[#allocation1] ss:$2 sm:$0xff] %v228
      %s690 = scalar_lea.vmem [#allocation1], 16
      %691 = vst [vmem:[%s690] ss:$2 sm:$0xff] %v229
      %s692 = scalar_lea.vmem [#allocation1], 32
      %693 = vst [vmem:[%s692] ss:$2 sm:$0xff] %v230
      %v694 = vld.sshfl [vmem:[#allocation1] sm:$0xff pattern:$0x75643120]
      %v696 = vld.sshfl [vmem:[#allocation1 + $0x8] sm:$0xff pattern:$0x75643120]
      %v698 = vld.sshfl [vmem:[#allocation1 + $0x10] sm:$0xff pattern:$0x75643120]
      %v700 = vld.sshfl [vmem:[#allocation1 + $0x18] sm:$0xff pattern:$0x75643120]
      %v702 = vld.sshfl [vmem:[#allocation1 + $0x20] sm:$0xff pattern:$0x75643120]
      %704 = vrot.lane.b32.xlu0 %v694, 10
      %v705 = vpop.permute.xlu0 %704
      %706 = vrot.lane.b32.xlu0 %v696, 10
      %v707 = vpop.permute.xlu0 %706
      %708 = vrot.lane.b32.xlu0 %v698, 10
      %v709 = vpop.permute.xlu0 %708
      %710 = vrot.lane.b32.xlu0 %v700, 10
      %v711 = vpop.permute.xlu0 %710
      %712 = vrot.lane.b32.xlu0 %v702, 10
      %v713 = vpop.permute.xlu0 %712
      %v714 = vrot.slane %v705, 4
      %v715 = vrot.slane %v707, 4
      %v716 = vrot.slane %v709, 4
      %v717 = vrot.slane %v711, 4
      %v718 = vrot.slane %v713, 4
      %v719 = vsel %vm256, %v714, %v715
      %vm720 = vcmask 80896
      %v721 = vsel %vm720, %v705, %v719
      %v722 = vsel %vm256, %v715, %v716
      %v723 = vsel %vm720, %v707, %v722
      %v724 = vsel %vm256, %v716, %v717
      %v725 = vsel %vm720, %v709, %v724
      %v726 = vsel %vm256, %v717, %v718
      %v727 = vsel %vm720, %v711, %v726
      %732 = vst [vmem:[#allocation2 + $0xa0] sm:$0x33] %v721
      %733 = vst [vmem:[#allocation2 + $0xa8] sm:$0x33] %v723
      %734 = vst [vmem:[#allocation2 + $0xb0] sm:$0x33] %v725
      %735 = vst.msk [vmem:[#allocation2 + $0xb8] sm:$0x33] %vm274, %v727
      %s736 = scalar_lea.vmem [#allocation1], 1
      %737 = vst [vmem:[%s736] ss:$2 sm:$0xff] %v228
      %s738 = scalar_lea.vmem [#allocation1], 17
      %739 = vst [vmem:[%s738] ss:$2 sm:$0xff] %v229
      %s740 = scalar_lea.vmem [#allocation1], 33
      %741 = vst [vmem:[%s740] ss:$2 sm:$0xff] %v230
      %v742 = vld.sshfl [vmem:[#allocation1] sm:$0xff pattern:$0x75643120]
      %v744 = vld.sshfl [vmem:[#allocation1 + $0x8] sm:$0xff pattern:$0x75643120]
      %v746 = vld.sshfl [vmem:[#allocation1 + $0x10] sm:$0xff pattern:$0x75643120]
      %v748 = vld.sshfl [vmem:[#allocation1 + $0x18] sm:$0xff pattern:$0x75643120]
      %v750 = vld.sshfl [vmem:[#allocation1 + $0x20] sm:$0xff pattern:$0x75643120]
      %752 = vrot.lane.b32.xlu0 %v742, 9
      %v753 = vpop.permute.xlu0 %752
      %754 = vrot.lane.b32.xlu0 %v744, 9
      %v755 = vpop.permute.xlu0 %754
      %756 = vrot.lane.b32.xlu0 %v746, 9
      %v757 = vpop.permute.xlu0 %756
      %758 = vrot.lane.b32.xlu0 %v748, 9
      %v759 = vpop.permute.xlu0 %758
      %760 = vrot.lane.b32.xlu0 %v750, 9
      %v761 = vpop.permute.xlu0 %760
      %v762 = vrot.slane %v753, 4
      %v763 = vrot.slane %v755, 4
      %v764 = vrot.slane %v757, 4
      %v765 = vrot.slane %v759, 4
      %v766 = vrot.slane %v761, 4
      %v767 = vsel %vm256, %v762, %v763
      %vm768 = vcmask 72704
      %v769 = vsel %vm768, %v753, %v767
      %v770 = vsel %vm256, %v763, %v764
      %v771 = vsel %vm768, %v755, %v770
      %v772 = vsel %vm256, %v764, %v765
      %v773 = vsel %vm768, %v757, %v772
      %v774 = vsel %vm256, %v765, %v766
      %v775 = vsel %vm768, %v759, %v774
      %780 = vst [vmem:[#allocation2 + $0xa0] sm:$0xcc] %v769
      %781 = vst [vmem:[#allocation2 + $0xa8] sm:$0xcc] %v771
      %782 = vst [vmem:[#allocation2 + $0xb0] sm:$0xcc] %v773
      %783 = vst.msk [vmem:[#allocation2 + $0xb8] sm:$0xcc] %vm215, %v775
      %784 = vst [vmem:[#allocation1] ss:$2 sm:$0xff] %v228
      %s785 = scalar_lea.vmem [#allocation1], 16
      %786 = vst [vmem:[%s785] ss:$2 sm:$0xff] %v229
      %s787 = scalar_lea.vmem [#allocation1], 32
      %788 = vst [vmem:[%s787] ss:$2 sm:$0xff] %v230
      %v789 = vld.sshfl [vmem:[#allocation1] sm:$0xff pattern:$0x75643120]
      %v791 = vld.sshfl [vmem:[#allocation1 + $0x8] sm:$0xff pattern:$0x75643120]
      %v793 = vld.sshfl [vmem:[#allocation1 + $0x10] sm:$0xff pattern:$0x75643120]
      %v795 = vld.sshfl [vmem:[#allocation1 + $0x18] sm:$0xff pattern:$0x75643120]
      %v797 = vld.sshfl [vmem:[#allocation1 + $0x20] sm:$0xff pattern:$0x75643120]
      %799 = vrot.lane.b32.xlu0 %v789, 1
      %v800 = vpop.permute.xlu0 %799
      %801 = vrot.lane.b32.xlu0 %v791, 1
      %v802 = vpop.permute.xlu0 %801
      %803 = vrot.lane.b32.xlu0 %v793, 1
      %v804 = vpop.permute.xlu0 %803
      %805 = vrot.lane.b32.xlu0 %v795, 1
      %v806 = vpop.permute.xlu0 %805
      %807 = vrot.lane.b32.xlu0 %v797, 1
      %v808 = vpop.permute.xlu0 %807
      %v809 = vrot.slane %v800, 4
      %v810 = vrot.slane %v802, 4
      %v811 = vrot.slane %v804, 4
      %v812 = vrot.slane %v806, 4
      %v813 = vrot.slane %v808, 4
      %v814 = vsel %vm256, %v809, %v810
      %vm815 = vcmask 7168
      %v816 = vsel %vm815, %v800, %v814
      %v817 = vsel %vm256, %v810, %v811
      %v818 = vsel %vm815, %v802, %v817
      %v819 = vsel %vm256, %v811, %v812
      %v820 = vsel %vm815, %v804, %v819
      %v821 = vsel %vm256, %v812, %v813
      %v822 = vsel %vm815, %v806, %v821
      %827 = vst [vmem:[#allocation2 + $0xc0] sm:$0x33] %v816
      %828 = vst [vmem:[#allocation2 + $0xc8] sm:$0x33] %v818
      %829 = vst [vmem:[#allocation2 + $0xd0] sm:$0x33] %v820
      %830 = vst.msk [vmem:[#allocation2 + $0xd8] sm:$0x33] %vm274, %v822
      %s831 = scalar_lea.vmem [#allocation1], 1
      %832 = vst [vmem:[%s831] ss:$2 sm:$0xff] %v228
      %s833 = scalar_lea.vmem [#allocation1], 17
      %834 = vst [vmem:[%s833] ss:$2 sm:$0xff] %v229
      %s835 = scalar_lea.vmem [#allocation1], 33
      %836 = vst [vmem:[%s835] ss:$2 sm:$0xff] %v230
      %v837 = vld.sshfl [vmem:[#allocation1] sm:$0xff pattern:$0x75643120]
      %v839 = vld.sshfl [vmem:[#allocation1 + $0x8] sm:$0xff pattern:$0x75643120]
      %v841 = vld.sshfl [vmem:[#allocation1 + $0x10] sm:$0xff pattern:$0x75643120]
      %v843 = vld.sshfl [vmem:[#allocation1 + $0x18] sm:$0xff pattern:$0x75643120]
      %v845 = vld.sshfl [vmem:[#allocation1 + $0x20] sm:$0xff pattern:$0x75643120]
      %v847 = vrot.slane %v837, 4
      %v848 = vrot.slane %v839, 4
      %v849 = vrot.slane %v841, 4
      %v850 = vrot.slane %v843, 4
      %v851 = vrot.slane %v845, 4
      %v852 = vsel %vm256, %v847, %v848
      %v853 = vsel %vm256, %v848, %v849
      %v854 = vsel %vm256, %v849, %v850
      %v855 = vsel %vm256, %v850, %v851
      %860 = vst [vmem:[#allocation2 + $0xc0] sm:$0xcc] %v852
      %861 = vst [vmem:[#allocation2 + $0xc8] sm:$0xcc] %v853
      %862 = vst [vmem:[#allocation2 + $0xd0] sm:$0xcc] %v854
      %863 = vst.msk [vmem:[#allocation2 + $0xd8] sm:$0xcc] %vm215, %v855
      %864 = vst [vmem:[#allocation1] ss:$2 sm:$0xff] %v228
      %s865 = scalar_lea.vmem [#allocation1], 16
      %866 = vst [vmem:[%s865] ss:$2 sm:$0xff] %v229
      %s867 = scalar_lea.vmem [#allocation1], 32
      %868 = vst [vmem:[%s867] ss:$2 sm:$0xff] %v230
      %v869 = vld.sshfl [vmem:[#allocation1] sm:$0xff pattern:$0x75643120]
      %v871 = vld.sshfl [vmem:[#allocation1 + $0x8] sm:$0xff pattern:$0x75643120]
      %v873 = vld.sshfl [vmem:[#allocation1 + $0x10] sm:$0xff pattern:$0x75643120]
      %v875 = vld.sshfl [vmem:[#allocation1 + $0x18] sm:$0xff pattern:$0x75643120]
      %v877 = vld.sshfl [vmem:[#allocation1 + $0x20] sm:$0xff pattern:$0x75643120]
      %879 = vrot.lane.b32.xlu0 %v869, 127
      %v880 = vpop.permute.xlu0 %879
      %881 = vrot.lane.b32.xlu0 %v871, 127
      %v882 = vpop.permute.xlu0 %881
      %883 = vrot.lane.b32.xlu0 %v873, 127
      %v884 = vpop.permute.xlu0 %883
      %885 = vrot.lane.b32.xlu0 %v875, 127
      %v886 = vpop.permute.xlu0 %885
      %887 = vrot.lane.b32.xlu0 %v877, 127
      %v888 = vpop.permute.xlu0 %887
      %v889 = vrot.slane %v880, 4
      %v890 = vrot.slane %v882, 4
      %v891 = vrot.slane %v884, 4
      %v892 = vrot.slane %v886, 4
      %v893 = vrot.slane %v888, 4
      %v894 = vsel %vm256, %v889, %v890
      %vm895 = vcmask 1039360
      %v896 = vsel %vm895, %v894, %v882
      %v897 = vsel %vm256, %v890, %v891
      %v898 = vsel %vm895, %v897, %v884
      %v899 = vsel %vm256, %v891, %v892
      %v900 = vsel %vm895, %v899, %v886
      %v901 = vsel %vm256, %v892, %v893
      %v902 = vsel %vm895, %v901, %v888
      %907 = vst [vmem:[#allocation2 + $0xe0] sm:$0x33] %v896
      %908 = vst [vmem:[#allocation2 + $0xe8] sm:$0x33] %v898
      %909 = vst [vmem:[#allocation2 + $0xf0] sm:$0x33] %v900
      %910 = vst.msk [vmem:[#allocation2 + $0xf8] sm:$0x33] %vm274, %v902
      %s911 = scalar_lea.vmem [#allocation1], 1
      %912 = vst [vmem:[%s911] ss:$2 sm:$0xff] %v228
      %s913 = scalar_lea.vmem [#allocation1], 17
      %914 = vst [vmem:[%s913] ss:$2 sm:$0xff] %v229
      %s915 = scalar_lea.vmem [#allocation1], 33
      %916 = vst [vmem:[%s915] ss:$2 sm:$0xff] %v230
      %v917 = vld.sshfl [vmem:[#allocation1] sm:$0xff pattern:$0x75643120]
      %v919 = vld.sshfl [vmem:[#allocation1 + $0x8] sm:$0xff pattern:$0x75643120]
      %v921 = vld.sshfl [vmem:[#allocation1 + $0x10] sm:$0xff pattern:$0x75643120]
      %v923 = vld.sshfl [vmem:[#allocation1 + $0x18] sm:$0xff pattern:$0x75643120]
      %v925 = vld.sshfl [vmem:[#allocation1 + $0x20] sm:$0xff pattern:$0x75643120]
      %927 = vrot.lane.b32.xlu0 %v917, 119
      %v928 = vpop.permute.xlu0 %927
      %929 = vrot.lane.b32.xlu0 %v919, 119
      %v930 = vpop.permute.xlu0 %929
      %931 = vrot.lane.b32.xlu0 %v921, 119
      %v932 = vpop.permute.xlu0 %931
      %933 = vrot.lane.b32.xlu0 %v923, 119
      %v934 = vpop.permute.xlu0 %933
      %935 = vrot.lane.b32.xlu0 %v925, 119
      %v936 = vpop.permute.xlu0 %935
      %v937 = vrot.slane %v928, 4
      %v938 = vrot.slane %v930, 4
      %v939 = vrot.slane %v932, 4
      %v940 = vrot.slane %v934, 4
      %v941 = vrot.slane %v936, 4
      %v942 = vsel %vm256, %v937, %v938
      %vm943 = vcmask 973824
      %v944 = vsel %vm943, %v942, %v930
      %v945 = vsel %vm256, %v938, %v939
      %v946 = vsel %vm943, %v945, %v932
      %v947 = vsel %vm256, %v939, %v940
      %v948 = vsel %vm943, %v947, %v934
      %v949 = vsel %vm256, %v940, %v941
      %v950 = vsel %vm943, %v949, %v936
      %955 = vst [vmem:[#allocation2 + $0xe0] sm:$0xcc] %v944
      %956 = vst [vmem:[#allocation2 + $0xe8] sm:$0xcc] %v946
      %957 = vst [vmem:[#allocation2 + $0xf0] sm:$0xcc] %v948
      %958 = vst.msk [vmem:[#allocation2 + $0xf8] sm:$0xcc] %vm215, %v950
      %959 = vst [vmem:[#allocation1] ss:$2 sm:$0xff] %v228
      %s960 = scalar_lea.vmem [#allocation1], 16
      %961 = vst [vmem:[%s960] ss:$2 sm:$0xff] %v229
      %s962 = scalar_lea.vmem [#allocation1], 32
      %963 = vst [vmem:[%s962] ss:$2 sm:$0xff] %v230
      %v964 = vld.sshfl [vmem:[#allocation1] sm:$0xff pattern:$0x75643120]
      %v966 = vld.sshfl [vmem:[#allocation1 + $0x8] sm:$0xff pattern:$0x75643120]
      %v968 = vld.sshfl [vmem:[#allocation1 + $0x10] sm:$0xff pattern:$0x75643120]
      %v970 = vld.sshfl [vmem:[#allocation1 + $0x18] sm:$0xff pattern:$0x75643120]
      %v972 = vld.sshfl [vmem:[#allocation1 + $0x20] sm:$0xff pattern:$0x75643120]
      %974 = vrot.lane.b32.xlu0 %v964, 118
      %v975 = vpop.permute.xlu0 %974
      %976 = vrot.lane.b32.xlu0 %v966, 118
      %v977 = vpop.permute.xlu0 %976
      %978 = vrot.lane.b32.xlu0 %v968, 118
      %v979 = vpop.permute.xlu0 %978
      %980 = vrot.lane.b32.xlu0 %v970, 118
      %v981 = vpop.permute.xlu0 %980
      %982 = vrot.lane.b32.xlu0 %v972, 118
      %v983 = vpop.permute.xlu0 %982
      %v984 = vrot.slane %v975, 4
      %v985 = vrot.slane %v977, 4
      %v986 = vrot.slane %v979, 4
      %v987 = vrot.slane %v981, 4
      %v988 = vrot.slane %v983, 4
      %v989 = vsel %vm256, %v984, %v985
      %vm990 = vcmask 965632
      %v991 = vsel %vm990, %v989, %v977
      %v992 = vsel %vm256, %v985, %v986
      %v993 = vsel %vm990, %v992, %v979
      %v994 = vsel %vm256, %v986, %v987
      %v995 = vsel %vm990, %v994, %v981
      %v996 = vsel %vm256, %v987, %v988
      %v997 = vsel %vm990, %v996, %v983
      %1002 = vst [vmem:[#allocation2 + $0x100] sm:$0x33] %v991
      %1003 = vst [vmem:[#allocation2 + $0x108] sm:$0x33] %v993
      %1004 = vst [vmem:[#allocation2 + $0x110] sm:$0x33] %v995
      %1005 = vst.msk [vmem:[#allocation2 + $0x118] sm:$0x33] %vm274, %v997
      %s1006 = scalar_lea.vmem [#allocation1], 1
      %1007 = vst [vmem:[%s1006] ss:$2 sm:$0xff] %v228
      %s1008 = scalar_lea.vmem [#allocation1], 17
      %1009 = vst [vmem:[%s1008] ss:$2 sm:$0xff] %v229
      %s1010 = scalar_lea.vmem [#allocation1], 33
      %1011 = vst [vmem:[%s1010] ss:$2 sm:$0xff] %v230
      %v1012 = vld.sshfl [vmem:[#allocation1] sm:$0xff pattern:$0x75643120]
      %v1014 = vld.sshfl [vmem:[#allocation1 + $0x8] sm:$0xff pattern:$0x75643120]
      %v1016 = vld.sshfl [vmem:[#allocation1 + $0x10] sm:$0xff pattern:$0x75643120]
      %v1018 = vld.sshfl [vmem:[#allocation1 + $0x18] sm:$0xff pattern:$0x75643120]
      %v1020 = vld.sshfl [vmem:[#allocation1 + $0x20] sm:$0xff pattern:$0x75643120]
      %1022 = vrot.lane.b32.xlu0 %v1012, 117
      %v1023 = vpop.permute.xlu0 %1022
      %1024 = vrot.lane.b32.xlu0 %v1014, 117
      %v1025 = vpop.permute.xlu0 %1024
      %1026 = vrot.lane.b32.xlu0 %v1016, 117
      %v1027 = vpop.permute.xlu0 %1026
      %1028 = vrot.lane.b32.xlu0 %v1018, 117
      %v1029 = vpop.permute.xlu0 %1028
      %1030 = vrot.lane.b32.xlu0 %v1020, 117
      %v1031 = vpop.permute.xlu0 %1030
      %v1032 = vrot.slane %v1023, 4
      %v1033 = vrot.slane %v1025, 4
      %v1034 = vrot.slane %v1027, 4
      %v1035 = vrot.slane %v1029, 4
      %v1036 = vrot.slane %v1031, 4
      %v1037 = vsel %vm256, %v1032, %v1033
      %vm1038 = vcmask 957440
      %v1039 = vsel %vm1038, %v1037, %v1025
      %v1040 = vsel %vm256, %v1033, %v1034
      %v1041 = vsel %vm1038, %v1040, %v1027
      %v1042 = vsel %vm256, %v1034, %v1035
      %v1043 = vsel %vm1038, %v1042, %v1029
      %v1044 = vsel %vm256, %v1035, %v1036
      %v1045 = vsel %vm1038, %v1044, %v1031
      %1050 = vst [vmem:[#allocation2 + $0x100] sm:$0xcc] %v1039
      %1051 = vst [vmem:[#allocation2 + $0x108] sm:$0xcc] %v1041
      %1052 = vst [vmem:[#allocation2 + $0x110] sm:$0xcc] %v1043
      %1053 = vst.msk [vmem:[#allocation2 + $0x118] sm:$0xcc] %vm215, %v1045
      %1054 = vst [vmem:[#allocation1] ss:$2 sm:$0xff] %v228
      %s1055 = scalar_lea.vmem [#allocation1], 16
      %1056 = vst [vmem:[%s1055] ss:$2 sm:$0xff] %v229
      %s1057 = scalar_lea.vmem [#allocation1], 32
      %1058 = vst [vmem:[%s1057] ss:$2 sm:$0xff] %v230
      %v1059 = vld.sshfl [vmem:[#allocation1] sm:$0xff pattern:$0x75643120]
      %v1061 = vld.sshfl [vmem:[#allocation1 + $0x8] sm:$0xff pattern:$0x75643120]
      %v1063 = vld.sshfl [vmem:[#allocation1 + $0x10] sm:$0xff pattern:$0x75643120]
      %v1065 = vld.sshfl [vmem:[#allocation1 + $0x18] sm:$0xff pattern:$0x75643120]
      %v1067 = vld.sshfl [vmem:[#allocation1 + $0x20] sm:$0xff pattern:$0x75643120]
      %1069 = vrot.lane.b32.xlu0 %v1059, 39
      %v1070 = vpop.permute.xlu0 %1069
      %1071 = vrot.lane.b32.xlu0 %v1061, 39
      %v1072 = vpop.permute.xlu0 %1071
      %1073 = vrot.lane.b32.xlu0 %v1063, 39
      %v1074 = vpop.permute.xlu0 %1073
      %1075 = vrot.lane.b32.xlu0 %v1065, 39
      %v1076 = vpop.permute.xlu0 %1075
      %1077 = vrot.lane.b32.xlu0 %v1067, 39
      %v1078 = vpop.permute.xlu0 %1077
      %v1079 = vrot.slane %v1070, 4
      %v1080 = vrot.slane %v1072, 4
      %v1081 = vrot.slane %v1074, 4
      %v1082 = vrot.slane %v1076, 4
      %v1083 = vrot.slane %v1078, 4
      %v1084 = vsel %vm256, %v1079, %v1080
      %vm1085 = vcmask 318464
      %v1086 = vsel %vm1085, %v1084, %v1072
      %v1087 = vsel %vm256, %v1080, %v1081
      %v1088 = vsel %vm1085, %v1087, %v1074
      %v1089 = vsel %vm256, %v1081, %v1082
      %v1090 = vsel %vm1085, %v1089, %v1076
      %v1091 = vsel %vm256, %v1082, %v1083
      %v1092 = vsel %vm1085, %v1091, %v1078
      %1097 = vst [vmem:[#allocation2 + $0x120] sm:$0x33] %v1086
      %1098 = vst [vmem:[#allocation2 + $0x128] sm:$0x33] %v1088
      %1099 = vst [vmem:[#allocation2 + $0x130] sm:$0x33] %v1090
      %1100 = vst.msk [vmem:[#allocation2 + $0x138] sm:$0x33] %vm274, %v1092
      %s1101 = scalar_lea.vmem [#allocation1], 1
      %1102 = vst [vmem:[%s1101] ss:$2 sm:$0xff] %v228
      %s1103 = scalar_lea.vmem [#allocation1], 17
      %1104 = vst [vmem:[%s1103] ss:$2 sm:$0xff] %v229
      %s1105 = scalar_lea.vmem [#allocation1], 33
      %1106 = vst [vmem:[%s1105] ss:$2 sm:$0xff] %v230
      %v1107 = vld.sshfl [vmem:[#allocation1] sm:$0xff pattern:$0x75643120]
      %v1109 = vld.sshfl [vmem:[#allocation1 + $0x8] sm:$0xff pattern:$0x75643120]
      %v1111 = vld.sshfl [vmem:[#allocation1 + $0x10] sm:$0xff pattern:$0x75643120]
      %v1113 = vld.sshfl [vmem:[#allocation1 + $0x18] sm:$0xff pattern:$0x75643120]
      %v1115 = vld.sshfl [vmem:[#allocation1 + $0x20] sm:$0xff pattern:$0x75643120]
      %1117 = vrot.lane.b32.xlu0 %v1107, 38
      %v1118 = vpop.permute.xlu0 %1117
      %1119 = vrot.lane.b32.xlu0 %v1109, 38
      %v1120 = vpop.permute.xlu0 %1119
      %1121 = vrot.lane.b32.xlu0 %v1111, 38
      %v1122 = vpop.permute.xlu0 %1121
      %1123 = vrot.lane.b32.xlu0 %v1113, 38
      %v1124 = vpop.permute.xlu0 %1123
      %1125 = vrot.lane.b32.xlu0 %v1115, 38
      %v1126 = vpop.permute.xlu0 %1125
      %v1127 = vrot.slane %v1118, 4
      %v1128 = vrot.slane %v1120, 4
      %v1129 = vrot.slane %v1122, 4
      %v1130 = vrot.slane %v1124, 4
      %v1131 = vrot.slane %v1126, 4
      %v1132 = vsel %vm256, %v1127, %v1128
      %vm1133 = vcmask 310272
      %v1134 = vsel %vm1133, %v1132, %v1120
      %v1135 = vsel %vm256, %v1128, %v1129
      %v1136 = vsel %vm1133, %v1135, %v1122
      %v1137 = vsel %vm256, %v1129, %v1130
      %v1138 = vsel %vm1133, %v1137, %v1124
      %v1139 = vsel %vm256, %v1130, %v1131
      %v1140 = vsel %vm1133, %v1139, %v1126
      %1145 = vst [vmem:[#allocation2 + $0x120] sm:$0xcc] %v1134
      %1146 = vst [vmem:[#allocation2 + $0x128] sm:$0xcc] %v1136
      %1147 = vst [vmem:[#allocation2 + $0x130] sm:$0xcc] %v1138
      %1148 = vst.msk [vmem:[#allocation2 + $0x138] sm:$0xcc] %vm215, %v1140
      %1149 = vst [vmem:[#allocation1] ss:$2 sm:$0xff] %v228
      %s1150 = scalar_lea.vmem [#allocation1], 16
      %1151 = vst [vmem:[%s1150] ss:$2 sm:$0xff] %v229
      %s1152 = scalar_lea.vmem [#allocation1], 32
      %1153 = vst [vmem:[%s1152] ss:$2 sm:$0xff] %v230
      %v1154 = vld.sshfl [vmem:[#allocation1] sm:$0xff pattern:$0x75643120]
      %v1156 = vld.sshfl [vmem:[#allocation1 + $0x8] sm:$0xff pattern:$0x75643120]
      %v1158 = vld.sshfl [vmem:[#allocation1 + $0x10] sm:$0xff pattern:$0x75643120]
      %v1160 = vld.sshfl [vmem:[#allocation1 + $0x18] sm:$0xff pattern:$0x75643120]
      %v1162 = vld.sshfl [vmem:[#allocation1 + $0x20] sm:$0xff pattern:$0x75643120]
      %1164 = vrot.lane.b32.xlu0 %v1154, 37
      %v1165 = vpop.permute.xlu0 %1164
      %1166 = vrot.lane.b32.xlu0 %v1156, 37
      %v1167 = vpop.permute.xlu0 %1166
      %1168 = vrot.lane.b32.xlu0 %v1158, 37
      %v1169 = vpop.permute.xlu0 %1168
      %1170 = vrot.lane.b32.xlu0 %v1160, 37
      %v1171 = vpop.permute.xlu0 %1170
      %1172 = vrot.lane.b32.xlu0 %v1162, 37
      %v1173 = vpop.permute.xlu0 %1172
      %v1174 = vrot.slane %v1165, 4
      %v1175 = vrot.slane %v1167, 4
      %v1176 = vrot.slane %v1169, 4
      %v1177 = vrot.slane %v1171, 4
      %v1178 = vrot.slane %v1173, 4
      %v1179 = vsel %vm256, %v1174, %v1175
      %vm1180 = vcmask 302080
      %v1181 = vsel %vm1180, %v1179, %v1167
      %v1182 = vsel %vm256, %v1175, %v1176
      %v1183 = vsel %vm1180, %v1182, %v1169
      %v1184 = vsel %vm256, %v1176, %v1177
      %v1185 = vsel %vm1180, %v1184, %v1171
      %v1186 = vsel %vm256, %v1177, %v1178
      %v1187 = vsel %vm1180, %v1186, %v1173
      %1192 = vst [vmem:[#allocation2 + $0x140] sm:$0x33] %v1181
      %1193 = vst [vmem:[#allocation2 + $0x148] sm:$0x33] %v1183
      %1194 = vst [vmem:[#allocation2 + $0x150] sm:$0x33] %v1185
      %1195 = vst.msk [vmem:[#allocation2 + $0x158] sm:$0x33] %vm274, %v1187
      %s1196 = scalar_lea.vmem [#allocation1], 1
      %1197 = vst [vmem:[%s1196] ss:$2 sm:$0xff] %v228
      %s1198 = scalar_lea.vmem [#allocation1], 17
      %1199 = vst [vmem:[%s1198] ss:$2 sm:$0xff] %v229
      %s1200 = scalar_lea.vmem [#allocation1], 33
      %1201 = vst [vmem:[%s1200] ss:$2 sm:$0xff] %v230
      %v1202 = vld.sshfl [vmem:[#allocation1] sm:$0xff pattern:$0x75643120]
      %v1204 = vld.sshfl [vmem:[#allocation1 + $0x8] sm:$0xff pattern:$0x75643120]
      %v1206 = vld.sshfl [vmem:[#allocation1 + $0x10] sm:$0xff pattern:$0x75643120]
      %v1208 = vld.sshfl [vmem:[#allocation1 + $0x18] sm:$0xff pattern:$0x75643120]
      %v1210 = vld.sshfl [vmem:[#allocation1 + $0x20] sm:$0xff pattern:$0x75643120]
      %1212 = vrot.lane.b32.xlu0 %v1202, 29
      %v1213 = vpop.permute.xlu0 %1212
      %1214 = vrot.lane.b32.xlu0 %v1204, 29
      %v1215 = vpop.permute.xlu0 %1214
      %1216 = vrot.lane.b32.xlu0 %v1206, 29
      %v1217 = vpop.permute.xlu0 %1216
      %1218 = vrot.lane.b32.xlu0 %v1208, 29
      %v1219 = vpop.permute.xlu0 %1218
      %1220 = vrot.lane.b32.xlu0 %v1210, 29
      %v1221 = vpop.permute.xlu0 %1220
      %v1222 = vrot.slane %v1213, 4
      %v1223 = vrot.slane %v1215, 4
      %v1224 = vrot.slane %v1217, 4
      %v1225 = vrot.slane %v1219, 4
      %v1226 = vrot.slane %v1221, 4
      %v1227 = vsel %vm256, %v1222, %v1223
      %vm1228 = vcmask 236544
      %v1229 = vsel %vm1228, %v1227, %v1215
      %v1230 = vsel %vm256, %v1223, %v1224
      %v1231 = vsel %vm1228, %v1230, %v1217
      %v1232 = vsel %vm256, %v1224, %v1225
      %v1233 = vsel %vm1228, %v1232, %v1219
      %v1234 = vsel %vm256, %v1225, %v1226
      %v1235 = vsel %vm1228, %v1234, %v1221
      %1240 = vst [vmem:[#allocation2 + $0x140] sm:$0xcc] %v1229
      %1241 = vst [vmem:[#allocation2 + $0x148] sm:$0xcc] %v1231
      %1242 = vst [vmem:[#allocation2 + $0x150] sm:$0xcc] %v1233
      %1243 = vst.msk [vmem:[#allocation2 + $0x158] sm:$0xcc] %vm215, %v1235
      %1244 = vst [vmem:[#allocation1] ss:$2 sm:$0xff] %v228
      %s1245 = scalar_lea.vmem [#allocation1], 16
      %1246 = vst [vmem:[%s1245] ss:$2 sm:$0xff] %v229
      %s1247 = scalar_lea.vmem [#allocation1], 32
      %1248 = vst [vmem:[%s1247] ss:$2 sm:$0xff] %v230
      %v1249 = vld.sshfl [vmem:[#allocation1] sm:$0xff pattern:$0x75643120]
      %v1251 = vld.sshfl [vmem:[#allocation1 + $0x8] sm:$0xff pattern:$0x75643120]
      %v1253 = vld.sshfl [vmem:[#allocation1 + $0x10] sm:$0xff pattern:$0x75643120]
      %v1255 = vld.sshfl [vmem:[#allocation1 + $0x18] sm:$0xff pattern:$0x75643120]
      %v1257 = vld.sshfl [vmem:[#allocation1 + $0x20] sm:$0xff pattern:$0x75643120]
      %1259 = vrot.lane.b32.xlu0 %v1249, 28
      %v1260 = vpop.permute.xlu0 %1259
      %1261 = vrot.lane.b32.xlu0 %v1251, 28
      %v1262 = vpop.permute.xlu0 %1261
      %1263 = vrot.lane.b32.xlu0 %v1253, 28
      %v1264 = vpop.permute.xlu0 %1263
      %1265 = vrot.lane.b32.xlu0 %v1255, 28
      %v1266 = vpop.permute.xlu0 %1265
      %1267 = vrot.lane.b32.xlu0 %v1257, 28
      %v1268 = vpop.permute.xlu0 %1267
      %v1269 = vrot.slane %v1260, 4
      %v1270 = vrot.slane %v1262, 4
      %v1271 = vrot.slane %v1264, 4
      %v1272 = vrot.slane %v1266, 4
      %v1273 = vrot.slane %v1268, 4
      %v1274 = vsel %vm256, %v1269, %v1270
      %vm1275 = vcmask 228352
      %v1276 = vsel %vm1275, %v1274, %v1262
      %v1277 = vsel %vm256, %v1270, %v1271
      %v1278 = vsel %vm1275, %v1277, %v1264
      %v1279 = vsel %vm256, %v1271, %v1272
      %v1280 = vsel %vm1275, %v1279, %v1266
      %v1281 = vsel %vm256, %v1272, %v1273
      %v1282 = vsel %vm1275, %v1281, %v1268
      %1287 = vst [vmem:[#allocation2 + $0x160] sm:$0x33] %v1276
      %1288 = vst [vmem:[#allocation2 + $0x168] sm:$0x33] %v1278
      %1289 = vst [vmem:[#allocation2 + $0x170] sm:$0x33] %v1280
      %1290 = vst.msk [vmem:[#allocation2 + $0x178] sm:$0x33] %vm274, %v1282
      %s1291 = scalar_lea.vmem [#allocation1], 1
      %1292 = vst [vmem:[%s1291] ss:$2 sm:$0xff] %v228
      %s1293 = scalar_lea.vmem [#allocation1], 17
      %1294 = vst [vmem:[%s1293] ss:$2 sm:$0xff] %v229
      %s1295 = scalar_lea.vmem [#allocation1], 33
      %1296 = vst [vmem:[%s1295] ss:$2 sm:$0xff] %v230
      %v1297 = vld.sshfl [vmem:[#allocation1] sm:$0xff pattern:$0x75643120]
      %v1299 = vld.sshfl [vmem:[#allocation1 + $0x8] sm:$0xff pattern:$0x75643120]
      %v1301 = vld.sshfl [vmem:[#allocation1 + $0x10] sm:$0xff pattern:$0x75643120]
      %v1303 = vld.sshfl [vmem:[#allocation1 + $0x18] sm:$0xff pattern:$0x75643120]
      %v1305 = vld.sshfl [vmem:[#allocation1 + $0x20] sm:$0xff pattern:$0x75643120]
      %1307 = vrot.lane.b32.xlu0 %v1297, 27
      %v1308 = vpop.permute.xlu0 %1307
      %1309 = vrot.lane.b32.xlu0 %v1299, 27
      %v1310 = vpop.permute.xlu0 %1309
      %1311 = vrot.lane.b32.xlu0 %v1301, 27
      %v1312 = vpop.permute.xlu0 %1311
      %1313 = vrot.lane.b32.xlu0 %v1303, 27
      %v1314 = vpop.permute.xlu0 %1313
      %1315 = vrot.lane.b32.xlu0 %v1305, 27
      %v1316 = vpop.permute.xlu0 %1315
      %v1317 = vrot.slane %v1308, 4
      %v1318 = vrot.slane %v1310, 4
      %v1319 = vrot.slane %v1312, 4
      %v1320 = vrot.slane %v1314, 4
      %v1321 = vrot.slane %v1316, 4
      %v1322 = vsel %vm256, %v1317, %v1318
      %vm1323 = vcmask 220160
      %v1324 = vsel %vm1323, %v1322, %v1310
      %v1325 = vsel %vm256, %v1318, %v1319
      %v1326 = vsel %vm1323, %v1325, %v1312
      %v1327 = vsel %vm256, %v1319, %v1320
      %v1328 = vsel %vm1323, %v1327, %v1314
      %v1329 = vsel %vm256, %v1320, %v1321
      %v1330 = vsel %vm1323, %v1329, %v1316
      %1335 = vst [vmem:[#allocation2 + $0x160] sm:$0xcc] %v1324
      %1336 = vst [vmem:[#allocation2 + $0x168] sm:$0xcc] %v1326
      %1337 = vst [vmem:[#allocation2 + $0x170] sm:$0xcc] %v1328
      %1338 = vst.msk [vmem:[#allocation2 + $0x178] sm:$0xcc] %vm215, %v1330
      %1339 = vst [vmem:[#allocation1] ss:$2 sm:$0xff] %v228
      %s1340 = scalar_lea.vmem [#allocation1], 16
      %1341 = vst [vmem:[%s1340] ss:$2 sm:$0xff] %v229
      %s1342 = scalar_lea.vmem [#allocation1], 32
      %1343 = vst [vmem:[%s1342] ss:$2 sm:$0xff] %v230
      %v1344 = vld.sshfl [vmem:[#allocation1] sm:$0xff pattern:$0x75643120]
      %v1346 = vld.sshfl [vmem:[#allocation1 + $0x8] sm:$0xff pattern:$0x75643120]
      %v1348 = vld.sshfl [vmem:[#allocation1 + $0x10] sm:$0xff pattern:$0x75643120]
      %v1350 = vld.sshfl [vmem:[#allocation1 + $0x18] sm:$0xff pattern:$0x75643120]
      %v1352 = vld.sshfl [vmem:[#allocation1 + $0x20] sm:$0xff pattern:$0x75643120]
      %1354 = vrot.lane.b32.xlu0 %v1344, 19
      %v1355 = vpop.permute.xlu0 %1354
      %1356 = vrot.lane.b32.xlu0 %v1346, 19
      %v1357 = vpop.permute.xlu0 %1356
      %1358 = vrot.lane.b32.xlu0 %v1348, 19
      %v1359 = vpop.permute.xlu0 %1358
      %1360 = vrot.lane.b32.xlu0 %v1350, 19
      %v1361 = vpop.permute.xlu0 %1360
      %1362 = vrot.lane.b32.xlu0 %v1352, 19
      %v1363 = vpop.permute.xlu0 %1362
      %v1364 = vrot.slane %v1355, 4
      %v1365 = vrot.slane %v1357, 4
      %v1366 = vrot.slane %v1359, 4
      %v1367 = vrot.slane %v1361, 4
      %v1368 = vrot.slane %v1363, 4
      %v1369 = vsel %vm256, %v1364, %v1365
      %vm1370 = vcmask 154624
      %v1371 = vsel %vm1370, %v1369, %v1357
      %v1372 = vsel %vm256, %v1365, %v1366
      %v1373 = vsel %vm1370, %v1372, %v1359
      %v1374 = vsel %vm256, %v1366, %v1367
      %v1375 = vsel %vm1370, %v1374, %v1361
      %v1376 = vsel %vm256, %v1367, %v1368
      %v1377 = vsel %vm1370, %v1376, %v1363
      %1382 = vst [vmem:[#allocation2 + $0x180] sm:$0x33] %v1371
      %1383 = vst [vmem:[#allocation2 + $0x188] sm:$0x33] %v1373
      %1384 = vst [vmem:[#allocation2 + $0x190] sm:$0x33] %v1375
      %1385 = vst.msk [vmem:[#allocation2 + $0x198] sm:$0x33] %vm274, %v1377
      %s1386 = scalar_lea.vmem [#allocation1], 1
      %1387 = vst [vmem:[%s1386] ss:$2 sm:$0xff] %v228
      %s1388 = scalar_lea.vmem [#allocation1], 17
      %1389 = vst [vmem:[%s1388] ss:$2 sm:$0xff] %v229
      %s1390 = scalar_lea.vmem [#allocation1], 33
      %1391 = vst [vmem:[%s1390] ss:$2 sm:$0xff] %v230
      %v1392 = vld.sshfl [vmem:[#allocation1] sm:$0xff pattern:$0x75643120]
      %v1394 = vld.sshfl [vmem:[#allocation1 + $0x8] sm:$0xff pattern:$0x75643120]
      %v1396 = vld.sshfl [vmem:[#allocation1 + $0x10] sm:$0xff pattern:$0x75643120]
      %v1398 = vld.sshfl [vmem:[#allocation1 + $0x18] sm:$0xff pattern:$0x75643120]
      %v1400 = vld.sshfl [vmem:[#allocation1 + $0x20] sm:$0xff pattern:$0x75643120]
      %1402 = vrot.lane.b32.xlu0 %v1392, 18
      %v1403 = vpop.permute.xlu0 %1402
      %1404 = vrot.lane.b32.xlu0 %v1394, 18
      %v1405 = vpop.permute.xlu0 %1404
      %1406 = vrot.lane.b32.xlu0 %v1396, 18
      %v1407 = vpop.permute.xlu0 %1406
      %1408 = vrot.lane.b32.xlu0 %v1398, 18
      %v1409 = vpop.permute.xlu0 %1408
      %1410 = vrot.lane.b32.xlu0 %v1400, 18
      %v1411 = vpop.permute.xlu0 %1410
      %v1412 = vrot.slane %v1403, 4
      %v1413 = vrot.slane %v1405, 4
      %v1414 = vrot.slane %v1407, 4
      %v1415 = vrot.slane %v1409, 4
      %v1416 = vrot.slane %v1411, 4
      %v1417 = vsel %vm256, %v1412, %v1413
      %vm1418 = vcmask 146432
      %v1419 = vsel %vm1418, %v1417, %v1405
      %v1420 = vsel %vm256, %v1413, %v1414
      %v1421 = vsel %vm1418, %v1420, %v1407
      %v1422 = vsel %vm256, %v1414, %v1415
      %v1423 = vsel %vm1418, %v1422, %v1409
      %v1424 = vsel %vm256, %v1415, %v1416
      %v1425 = vsel %vm1418, %v1424, %v1411
      %1430 = vst [vmem:[#allocation2 + $0x180] sm:$0xcc] %v1419
      %1431 = vst [vmem:[#allocation2 + $0x188] sm:$0xcc] %v1421
      %1432 = vst [vmem:[#allocation2 + $0x190] sm:$0xcc] %v1423
      %1433 = vst.msk [vmem:[#allocation2 + $0x198] sm:$0xcc] %vm215, %v1425
      %1434 = vst [vmem:[#allocation1] ss:$2 sm:$0xff] %v228
      %s1435 = scalar_lea.vmem [#allocation1], 16
      %1436 = vst [vmem:[%s1435] ss:$2 sm:$0xff] %v229
      %s1437 = scalar_lea.vmem [#allocation1], 32
      %1438 = vst [vmem:[%s1437] ss:$2 sm:$0xff] %v230
      %v1439 = vld.sshfl [vmem:[#allocation1] sm:$0xff pattern:$0x75643120]
      %v1441 = vld.sshfl [vmem:[#allocation1 + $0x8] sm:$0xff pattern:$0x75643120]
      %v1443 = vld.sshfl [vmem:[#allocation1 + $0x10] sm:$0xff pattern:$0x75643120]
      %v1445 = vld.sshfl [vmem:[#allocation1 + $0x18] sm:$0xff pattern:$0x75643120]
      %v1447 = vld.sshfl [vmem:[#allocation1 + $0x20] sm:$0xff pattern:$0x75643120]
      %1449 = vrot.lane.b32.xlu0 %v1439, 17
      %v1450 = vpop.permute.xlu0 %1449
      %1451 = vrot.lane.b32.xlu0 %v1441, 17
      %v1452 = vpop.permute.xlu0 %1451
      %1453 = vrot.lane.b32.xlu0 %v1443, 17
      %v1454 = vpop.permute.xlu0 %1453
      %1455 = vrot.lane.b32.xlu0 %v1445, 17
      %v1456 = vpop.permute.xlu0 %1455
      %1457 = vrot.lane.b32.xlu0 %v1447, 17
      %v1458 = vpop.permute.xlu0 %1457
      %v1459 = vrot.slane %v1450, 4
      %v1460 = vrot.slane %v1452, 4
      %v1461 = vrot.slane %v1454, 4
      %v1462 = vrot.slane %v1456, 4
      %v1463 = vrot.slane %v1458, 4
      %v1464 = vsel %vm256, %v1459, %v1460
      %vm1465 = vcmask 138240
      %v1466 = vsel %vm1465, %v1464, %v1452
      %v1467 = vsel %vm256, %v1460, %v1461
      %v1468 = vsel %vm1465, %v1467, %v1454
      %v1469 = vsel %vm256, %v1461, %v1462
      %v1470 = vsel %vm1465, %v1469, %v1456
      %v1471 = vsel %vm256, %v1462, %v1463
      %v1472 = vsel %vm1465, %v1471, %v1458
      %1477 = vst [vmem:[#allocation2 + $0x1a0] sm:$0x33] %v1466
      %1478 = vst [vmem:[#allocation2 + $0x1a8] sm:$0x33] %v1468
      %1479 = vst [vmem:[#allocation2 + $0x1b0] sm:$0x33] %v1470
      %1480 = vst.msk [vmem:[#allocation2 + $0x1b8] sm:$0x33] %vm274, %v1472
      %v1481 = vld [vmem:[%s1] sm:$0xf]
      %v1482 = vld [vmem:[#allocation2] sm:$0xff]
      %v1483 = vld [vmem:[#allocation2 + $0x8] sm:$0xff]
      %v1484 = vld [vmem:[#allocation2 + $0x10] sm:$0xff]
      %v1485 = vld [vmem:[#allocation2 + $0x18] sm:$0xff]
      %v1486 = vld [vmem:[#allocation2 + $0x20] sm:$0xff]
      %v1487 = vld [vmem:[#allocation2 + $0x28] sm:$0xff]
      %v1488 = vld [vmem:[#allocation2 + $0x30] sm:$0xff]
      %v1489 = vld [vmem:[#allocation2 + $0x38] sm:$0xff]
      %v1490 = vld [vmem:[#allocation2 + $0x40] sm:$0xff]
      %v1491 = vld [vmem:[#allocation2 + $0x48] sm:$0xff]
      %v1492 = vld [vmem:[#allocation2 + $0x50] sm:$0xff]
      %v1493 = vld [vmem:[#allocation2 + $0x58] sm:$0xff]
      %v1494 = vld [vmem:[#allocation2 + $0x60] sm:$0xff]
      %v1495 = vld [vmem:[#allocation2 + $0x68] sm:$0xff]
      %v1496 = vld [vmem:[#allocation2 + $0x70] sm:$0xff]
      %v1497 = vld [vmem:[#allocation2 + $0x78] sm:$0xff]
      %v1498 = vld [vmem:[#allocation2 + $0x80] sm:$0xff]
      %v1499 = vld [vmem:[#allocation2 + $0x88] sm:$0xff]
      %v1500 = vld [vmem:[#allocation2 + $0x90] sm:$0xff]
      %v1501 = vld [vmem:[#allocation2 + $0x98] sm:$0xff]
      %v1502 = vld [vmem:[#allocation2 + $0xa0] sm:$0xff]
      %v1503 = vld [vmem:[#allocation2 + $0xa8] sm:$0xff]
      %v1504 = vld [vmem:[#allocation2 + $0xb0] sm:$0xff]
      %v1505 = vld [vmem:[#allocation2 + $0xb8] sm:$0xff]
      %v1506 = vld [vmem:[#allocation2 + $0xc0] sm:$0xff]
      %v1507 = vld [vmem:[#allocation2 + $0xc8] sm:$0xff]
      %v1508 = vld [vmem:[#allocation2 + $0xd0] sm:$0xff]
      %v1509 = vld [vmem:[#allocation2 + $0xd8] sm:$0xff]
      %v1510 = vld [vmem:[#allocation2 + $0xe0] sm:$0xff]
      %v1511 = vld [vmem:[#allocation2 + $0xe8] sm:$0xff]
      %v1512 = vld [vmem:[#allocation2 + $0xf0] sm:$0xff]
      %v1513 = vld [vmem:[#allocation2 + $0xf8] sm:$0xff]
      %v1514 = vld [vmem:[#allocation2 + $0x100] sm:$0xff]
      %v1515 = vld [vmem:[#allocation2 + $0x108] sm:$0xff]
      %v1516 = vld [vmem:[#allocation2 + $0x110] sm:$0xff]
      %v1517 = vld [vmem:[#allocation2 + $0x118] sm:$0xff]
      %v1518 = vld [vmem:[#allocation2 + $0x120] sm:$0xff]
      %v1519 = vld [vmem:[#allocation2 + $0x128] sm:$0xff]
      %v1520 = vld [vmem:[#allocation2 + $0x130] sm:$0xff]
      %v1521 = vld [vmem:[#allocation2 + $0x138] sm:$0xff]
      %v1522 = vld [vmem:[#allocation2 + $0x140] sm:$0xff]
      %v1523 = vld [vmem:[#allocation2 + $0x148] sm:$0xff]
      %v1524 = vld [vmem:[#allocation2 + $0x150] sm:$0xff]
      %v1525 = vld [vmem:[#allocation2 + $0x158] sm:$0xff]
      %v1526 = vld [vmem:[#allocation2 + $0x160] sm:$0xff]
      %v1527 = vld [vmem:[#allocation2 + $0x168] sm:$0xff]
      %v1528 = vld [vmem:[#allocation2 + $0x170] sm:$0xff]
      %v1529 = vld [vmem:[#allocation2 + $0x178] sm:$0xff]
      %v1530 = vld [vmem:[#allocation2 + $0x180] sm:$0xff]
      %v1531 = vld [vmem:[#allocation2 + $0x188] sm:$0xff]
      %v1532 = vld [vmem:[#allocation2 + $0x190] sm:$0xff]
      %v1533 = vld [vmem:[#allocation2 + $0x198] sm:$0xff]
      %v1534 = vld [vmem:[#allocation2 + $0x1a0] sm:$0xff]
      %v1535 = vld [vmem:[#allocation2 + $0x1a8] sm:$0xff]
      %v1536 = vld [vmem:[#allocation2 + $0x1b0] sm:$0xff]
      %v1537 = vld [vmem:[#allocation2 + $0x1b8] sm:$0xff]
      %v1538 = vld [vmem:[#allocation2 + $0x1c0] sm:$0xff]
      %v1539 = vld [vmem:[#allocation2 + $0x1c8] sm:$0xff]
      %v1540 = vld [vmem:[#allocation2 + $0x1d0] sm:$0xff]
      %v1541 = vld [vmem:[#allocation2 + $0x1d8] sm:$0xff]
      %v1542 = vld [vmem:[#allocation2 + $0x1e0] sm:$0xff]
      %v1543 = vld [vmem:[#allocation2 + $0x1e8] sm:$0xff]
      %v1544 = vld [vmem:[#allocation2 + $0x1f0] sm:$0xff]
      %v1545 = vld [vmem:[#allocation2 + $0x1f8] sm:$0xff]
      %v1610 = vunpack.c.l.b16 %v1482
      %v1611 = vunpack.c.h.b16 %v1482
      %v1612 = vunpack.c.l.b16 %v1483
      %v1613 = vunpack.c.h.b16 %v1483
      %v1614 = vunpack.c.l.b16 %v1484
      %v1615 = vunpack.c.h.b16 %v1484
      %v1616 = vunpack.c.l.b16 %v1485
      %v1617 = vunpack.c.h.b16 %v1485
      %v1618 = vunpack.c.l.b16 %v1486
      %v1619 = vunpack.c.h.b16 %v1486
      %v1620 = vunpack.c.l.b16 %v1487
      %v1621 = vunpack.c.h.b16 %v1487
      %v1622 = vunpack.c.l.b16 %v1488
      %v1623 = vunpack.c.h.b16 %v1488
      %v1624 = vunpack.c.l.b16 %v1489
      %v1625 = vunpack.c.h.b16 %v1489
      %v1626 = vunpack.c.l.b16 %v1490
      %v1627 = vunpack.c.h.b16 %v1490
      %v1628 = vunpack.c.l.b16 %v1491
      %v1629 = vunpack.c.h.b16 %v1491
      %v1630 = vunpack.c.l.b16 %v1492
      %v1631 = vunpack.c.h.b16 %v1492
      %v1632 = vunpack.c.l.b16 %v1493
      %v1633 = vunpack.c.h.b16 %v1493
      %v1634 = vunpack.c.l.b16 %v1494
      %v1635 = vunpack.c.h.b16 %v1494
      %v1636 = vunpack.c.l.b16 %v1495
      %v1637 = vunpack.c.h.b16 %v1495
      %v1638 = vunpack.c.l.b16 %v1496
      %v1639 = vunpack.c.h.b16 %v1496
      %v1640 = vunpack.c.l.b16 %v1497
      %v1641 = vunpack.c.h.b16 %v1497
      %v1642 = vunpack.c.l.b16 %v1498
      %v1643 = vunpack.c.h.b16 %v1498
      %v1644 = vunpack.c.l.b16 %v1499
      %v1645 = vunpack.c.h.b16 %v1499
      %v1646 = vunpack.c.l.b16 %v1500
      %v1647 = vunpack.c.h.b16 %v1500
      %v1648 = vunpack.c.l.b16 %v1501
      %v1649 = vunpack.c.h.b16 %v1501
      %v1650 = vunpack.c.l.b16 %v1502
      %v1651 = vunpack.c.h.b16 %v1502
      %v1652 = vunpack.c.l.b16 %v1503
      %v1653 = vunpack.c.h.b16 %v1503
      %v1654 = vunpack.c.l.b16 %v1504
      %v1655 = vunpack.c.h.b16 %v1504
      %v1656 = vunpack.c.l.b16 %v1505
      %v1657 = vunpack.c.h.b16 %v1505
      %v1658 = vunpack.c.l.b16 %v1506
      %v1659 = vunpack.c.h.b16 %v1506
      %v1660 = vunpack.c.l.b16 %v1507
      %v1661 = vunpack.c.h.b16 %v1507
      %v1662 = vunpack.c.l.b16 %v1508
      %v1663 = vunpack.c.h.b16 %v1508
      %v1664 = vunpack.c.l.b16 %v1509
      %v1665 = vunpack.c.h.b16 %v1509
      %v1666 = vunpack.c.l.b16 %v1510
      %v1667 = vunpack.c.h.b16 %v1510
      %v1668 = vunpack.c.l.b16 %v1511
      %v1669 = vunpack.c.h.b16 %v1511
      %v1670 = vunpack.c.l.b16 %v1512
      %v1671 = vunpack.c.h.b16 %v1512
      %v1672 = vunpack.c.l.b16 %v1513
      %v1673 = vunpack.c.h.b16 %v1513
      %v1674 = vunpack.c.l.b16 %v1514
      %v1675 = vunpack.c.h.b16 %v1514
      %v1676 = vunpack.c.l.b16 %v1515
      %v1677 = vunpack.c.h.b16 %v1515
      %v1678 = vunpack.c.l.b16 %v1516
      %v1679 = vunpack.c.h.b16 %v1516
      %v1680 = vunpack.c.l.b16 %v1517
      %v1681 = vunpack.c.h.b16 %v1517
      %v1682 = vunpack.c.l.b16 %v1518
      %v1683 = vunpack.c.h.b16 %v1518
      %v1684 = vunpack.c.l.b16 %v1519
      %v1685 = vunpack.c.h.b16 %v1519
      %v1686 = vunpack.c.l.b16 %v1520
      %v1687 = vunpack.c.h.b16 %v1520
      %v1688 = vunpack.c.l.b16 %v1521
      %v1689 = vunpack.c.h.b16 %v1521
      %v1690 = vunpack.c.l.b16 %v1522
      %v1691 = vunpack.c.h.b16 %v1522
      %v1692 = vunpack.c.l.b16 %v1523
      %v1693 = vunpack.c.h.b16 %v1523
      %v1694 = vunpack.c.l.b16 %v1524
      %v1695 = vunpack.c.h.b16 %v1524
      %v1696 = vunpack.c.l.b16 %v1525
      %v1697 = vunpack.c.h.b16 %v1525
      %v1698 = vunpack.c.l.b16 %v1526
      %v1699 = vunpack.c.h.b16 %v1526
      %v1700 = vunpack.c.l.b16 %v1527
      %v1701 = vunpack.c.h.b16 %v1527
      %v1702 = vunpack.c.l.b16 %v1528
      %v1703 = vunpack.c.h.b16 %v1528
      %v1704 = vunpack.c.l.b16 %v1529
      %v1705 = vunpack.c.h.b16 %v1529
      %v1706 = vunpack.c.l.b16 %v1530
      %v1707 = vunpack.c.h.b16 %v1530
      %v1708 = vunpack.c.l.b16 %v1531
      %v1709 = vunpack.c.h.b16 %v1531
      %v1710 = vunpack.c.l.b16 %v1532
      %v1711 = vunpack.c.h.b16 %v1532
      %v1712 = vunpack.c.l.b16 %v1533
      %v1713 = vunpack.c.h.b16 %v1533
      %v1714 = vunpack.c.l.b16 %v1534
      %v1715 = vunpack.c.h.b16 %v1534
      %v1716 = vunpack.c.l.b16 %v1535
      %v1717 = vunpack.c.h.b16 %v1535
      %v1718 = vunpack.c.l.b16 %v1536
      %v1719 = vunpack.c.h.b16 %v1536
      %v1720 = vunpack.c.l.b16 %v1537
      %v1721 = vunpack.c.h.b16 %v1537
      %v1722 = vunpack.c.l.b16 %v1538
      %v1723 = vunpack.c.h.b16 %v1538
      %v1724 = vunpack.c.l.b16 %v1539
      %v1725 = vunpack.c.h.b16 %v1539
      %v1726 = vunpack.c.l.b16 %v1540
      %v1727 = vunpack.c.h.b16 %v1540
      %v1728 = vunpack.c.l.b16 %v1541
      %v1729 = vunpack.c.h.b16 %v1541
      %v1730 = vunpack.c.l.b16 %v1542
      %v1731 = vunpack.c.h.b16 %v1542
      %v1732 = vunpack.c.l.b16 %v1543
      %v1733 = vunpack.c.h.b16 %v1543
      %v1734 = vunpack.c.l.b16 %v1544
      %v1735 = vunpack.c.h.b16 %v1544
      %v1736 = vunpack.c.l.b16 %v1545
      %v1737 = vunpack.c.h.b16 %v1545
      %v1738 = vpack.c.b16 %v1618, %v1610
      %v1739 = vpack.c.b16 %v1619, %v1611
      %v1740 = vpack.c.b16 %v1620, %v1612
      %v1741 = vpack.c.b16 %v1621, %v1613
      %v1742 = vpack.c.b16 %v1622, %v1614
      %v1743 = vpack.c.b16 %v1623, %v1615
      %v1744 = vpack.c.b16 %v1624, %v1616
      %v1745 = vpack.c.b16 %v1625, %v1617
      %v1746 = vpack.c.b16 %v1634, %v1626
      %v1747 = vpack.c.b16 %v1635, %v1627
      %v1748 = vpack.c.b16 %v1636, %v1628
      %v1749 = vpack.c.b16 %v1637, %v1629
      %v1750 = vpack.c.b16 %v1638, %v1630
      %v1751 = vpack.c.b16 %v1639, %v1631
      %v1752 = vpack.c.b16 %v1640, %v1632
      %v1753 = vpack.c.b16 %v1641, %v1633
      %v1754 = vpack.c.b16 %v1650, %v1642
      %v1755 = vpack.c.b16 %v1651, %v1643
      %v1756 = vpack.c.b16 %v1652, %v1644
      %v1757 = vpack.c.b16 %v1653, %v1645
      %v1758 = vpack.c.b16 %v1654, %v1646
      %v1759 = vpack.c.b16 %v1655, %v1647
      %v1760 = vpack.c.b16 %v1656, %v1648
      %v1761 = vpack.c.b16 %v1657, %v1649
      %v1762 = vpack.c.b16 %v1666, %v1658
      %v1763 = vpack.c.b16 %v1667, %v1659
      %v1764 = vpack.c.b16 %v1668, %v1660
      %v1765 = vpack.c.b16 %v1669, %v1661
      %v1766 = vpack.c.b16 %v1670, %v1662
      %v1767 = vpack.c.b16 %v1671, %v1663
      %v1768 = vpack.c.b16 %v1672, %v1664
      %v1769 = vpack.c.b16 %v1673, %v1665
      %v1770 = vpack.c.b16 %v1682, %v1674
      %v1771 = vpack.c.b16 %v1683, %v1675
      %v1772 = vpack.c.b16 %v1684, %v1676
      %v1773 = vpack.c.b16 %v1685, %v1677
      %v1774 = vpack.c.b16 %v1686, %v1678
      %v1775 = vpack.c.b16 %v1687, %v1679
      %v1776 = vpack.c.b16 %v1688, %v1680
      %v1777 = vpack.c.b16 %v1689, %v1681
      %v1778 = vpack.c.b16 %v1698, %v1690
      %v1779 = vpack.c.b16 %v1699, %v1691
      %v1780 = vpack.c.b16 %v1700, %v1692
      %v1781 = vpack.c.b16 %v1701, %v1693
      %v1782 = vpack.c.b16 %v1702, %v1694
      %v1783 = vpack.c.b16 %v1703, %v1695
      %v1784 = vpack.c.b16 %v1704, %v1696
      %v1785 = vpack.c.b16 %v1705, %v1697
      %v1786 = vpack.c.b16 %v1714, %v1706
      %v1787 = vpack.c.b16 %v1715, %v1707
      %v1788 = vpack.c.b16 %v1716, %v1708
      %v1789 = vpack.c.b16 %v1717, %v1709
      %v1790 = vpack.c.b16 %v1718, %v1710
      %v1791 = vpack.c.b16 %v1719, %v1711
      %v1792 = vpack.c.b16 %v1720, %v1712
      %v1793 = vpack.c.b16 %v1721, %v1713
      %v1794 = vpack.c.b16 %v1730, %v1722
      %v1795 = vpack.c.b16 %v1731, %v1723
      %v1796 = vpack.c.b16 %v1732, %v1724
      %v1797 = vpack.c.b16 %v1733, %v1725
      %v1798 = vpack.c.b16 %v1734, %v1726
      %v1799 = vpack.c.b16 %v1735, %v1727
      %v1800 = vpack.c.b16 %v1736, %v1728
      %v1801 = vpack.c.b16 %v1737, %v1729
      %1866 = vmatpush.bf16.msra.mxu0 %v1794
      %1867 = vmatpush.bf16.msra.mxu0 %v1786
      %1868 = vmatpush.bf16.msra.mxu0 %v1778
      %1869 = vmatpush.bf16.msra.mxu0 %v1770
      %1870 = vmatpush.bf16.msra.mxu0 %v1762
      %1871 = vmatpush.bf16.msra.mxu0 %v1754
      %1872 = vmatpush.bf16.msra.mxu0 %v1746
      %1873 = vmatpush.bf16.msra.mxu0 %v1738
      %1874 = vmatmul.bf16.gmra.mxu0 %v1481
      %v1875 = vpop.f32.mrf.mxu0
      %v1876 = vadd.f32 0.0, %v1875
      %v1877 = vpop.f32.mrf.mxu0
      %1878 = vdwg.mxu0
      %1879 = vmatpush.bf16.msra.mxu0 %v1795
      %1880 = vmatpush.bf16.msra.mxu0 %v1787
      %1881 = vmatpush.bf16.msra.mxu0 %v1779
      %1882 = vmatpush.bf16.msra.mxu0 %v1771
      %1883 = vmatpush.bf16.msra.mxu0 %v1763
      %1884 = vmatpush.bf16.msra.mxu0 %v1755
      %1885 = vmatpush.bf16.msra.mxu0 %v1747
      %1886 = vmatpush.bf16.msra.mxu0 %v1739
      %1887 = vmatmul.bf16.gmra.mxu0 %v1481
      %v1888 = vpop.f32.mrf.mxu0
      %v1889 = vadd.f32 0.0, %v1888
      %v1890 = vpop.f32.mrf.mxu0
      %1891 = vdwg.mxu0
      %1892 = vmatpush.bf16.msra.mxu0 %v1796
      %1893 = vmatpush.bf16.msra.mxu0 %v1788
      %1894 = vmatpush.bf16.msra.mxu0 %v1780
      %1895 = vmatpush.bf16.msra.mxu0 %v1772
      %1896 = vmatpush.bf16.msra.mxu0 %v1764
      %1897 = vmatpush.bf16.msra.mxu0 %v1756
      %1898 = vmatpush.bf16.msra.mxu0 %v1748
      %1899 = vmatpush.bf16.msra.mxu0 %v1740
      %1900 = vmatmul.bf16.gmra.mxu0 %v1481
      %v1901 = vpop.f32.mrf.mxu0
      %v1902 = vadd.f32 0.0, %v1901
      %v1903 = vpop.f32.mrf.mxu0
      %1904 = vdwg.mxu0
      %1905 = vmatpush.bf16.msra.mxu0 %v1797
      %1906 = vmatpush.bf16.msra.mxu0 %v1789
      %1907 = vmatpush.bf16.msra.mxu0 %v1781
      %1908 = vmatpush.bf16.msra.mxu0 %v1773
      %1909 = vmatpush.bf16.msra.mxu0 %v1765
      %1910 = vmatpush.bf16.msra.mxu0 %v1757
      %1911 = vmatpush.bf16.msra.mxu0 %v1749
      %1912 = vmatpush.bf16.msra.mxu0 %v1741
      %1913 = vmatmul.bf16.gmra.mxu0 %v1481
      %v1914 = vpop.f32.mrf.mxu0
      %v1915 = vadd.f32 0.0, %v1914
      %v1916 = vpop.f32.mrf.mxu0
      %1917 = vdwg.mxu0
      %1918 = vmatpush.bf16.msra.mxu0 %v1798
      %1919 = vmatpush.bf16.msra.mxu0 %v1790
      %1920 = vmatpush.bf16.msra.mxu0 %v1782
      %1921 = vmatpush.bf16.msra.mxu0 %v1774
      %1922 = vmatpush.bf16.msra.mxu0 %v1766
      %1923 = vmatpush.bf16.msra.mxu0 %v1758
      %1924 = vmatpush.bf16.msra.mxu0 %v1750
      %1925 = vmatpush.bf16.msra.mxu0 %v1742
      %1926 = vmatmul.bf16.gmra.mxu0 %v1481
      %v1927 = vpop.f32.mrf.mxu0
      %v1928 = vadd.f32 0.0, %v1927
      %v1929 = vpop.f32.mrf.mxu0
      %1930 = vdwg.mxu0
      %1931 = vmatpush.bf16.msra.mxu0 %v1799
      %1932 = vmatpush.bf16.msra.mxu0 %v1791
      %1933 = vmatpush.bf16.msra.mxu0 %v1783
      %1934 = vmatpush.bf16.msra.mxu0 %v1775
      %1935 = vmatpush.bf16.msra.mxu0 %v1767
      %1936 = vmatpush.bf16.msra.mxu0 %v1759
      %1937 = vmatpush.bf16.msra.mxu0 %v1751
      %1938 = vmatpush.bf16.msra.mxu0 %v1743
      %1939 = vmatmul.bf16.gmra.mxu0 %v1481
      %v1940 = vpop.f32.mrf.mxu0
      %v1941 = vadd.f32 0.0, %v1940
      %v1942 = vpop.f32.mrf.mxu0
      %1943 = vdwg.mxu0
      %1944 = vmatpush.bf16.msra.mxu0 %v1800
      %1945 = vmatpush.bf16.msra.mxu0 %v1792
      %1946 = vmatpush.bf16.msra.mxu0 %v1784
      %1947 = vmatpush.bf16.msra.mxu0 %v1776
      %1948 = vmatpush.bf16.msra.mxu0 %v1768
      %1949 = vmatpush.bf16.msra.mxu0 %v1760
      %1950 = vmatpush.bf16.msra.mxu0 %v1752
      %1951 = vmatpush.bf16.msra.mxu0 %v1744
      %1952 = vmatmul.bf16.gmra.mxu0 %v1481
      %v1953 = vpop.f32.mrf.mxu0
      %v1954 = vadd.f32 0.0, %v1953
      %v1955 = vpop.f32.mrf.mxu0
      %1956 = vdwg.mxu0
      %1957 = vmatpush.bf16.msra.mxu0 %v1801
      %1958 = vmatpush.bf16.msra.mxu0 %v1793
      %1959 = vmatpush.bf16.msra.mxu0 %v1785
      %1960 = vmatpush.bf16.msra.mxu0 %v1777
      %1961 = vmatpush.bf16.msra.mxu0 %v1769
      %1962 = vmatpush.bf16.msra.mxu0 %v1761
      %1963 = vmatpush.bf16.msra.mxu0 %v1753
      %1964 = vmatpush.bf16.msra.mxu0 %v1745
      %1965 = vmatmul.bf16.gmra.mxu0 %v1481
      %v1966 = vpop.f32.mrf.mxu0
      %v1967 = vadd.f32 0.0, %v1966
      %v1968 = vpop.f32.mrf.mxu0
      %1969 = vdwg.mxu0
      %v1970 = vpack.c.bf16 %v1876, %v1876
      %v1971 = vpack.c.bf16 %v1889, %v1889
      %v1972 = vpack.c.bf16 %v1902, %v1902
      %v1973 = vpack.c.bf16 %v1915, %v1915
      %v1974 = vpack.c.bf16 %v1928, %v1928
      %v1975 = vpack.c.bf16 %v1941, %v1941
      %v1976 = vpack.c.bf16 %v1954, %v1954
      %v1977 = vpack.c.bf16 %v1967, %v1967
      %v1978 = vld [vmem:[%s2] sm:$0xff]
      %v1979 = vld [vmem:[%s2 + $0x8] sm:$0xff]
      %v1980 = vld [vmem:[%s2 + $0x10] sm:$0xff]
      %v1981 = vld [vmem:[%s2 + $0x18] sm:$0xff]
      %v1982 = vld [vmem:[%s2 + $0x20] sm:$0xff]
      %v1983 = vld [vmem:[%s2 + $0x28] sm:$0xff]
      %v1984 = vld [vmem:[%s2 + $0x30] sm:$0xff]
      %v1985 = vld [vmem:[%s2 + $0x38] sm:$0xff]
      %v1986 = vld [vmem:[%s2 + $0x40] sm:$0xff]
      %v1987 = vld [vmem:[%s2 + $0x48] sm:$0xff]
      %v1988 = vld [vmem:[%s2 + $0x50] sm:$0xff]
      %v1989 = vld [vmem:[%s2 + $0x58] sm:$0xff]
      %v1990 = vld [vmem:[%s2 + $0x60] sm:$0xff]
      %v1991 = vld [vmem:[%s2 + $0x68] sm:$0xff]
      %v1992 = vld [vmem:[%s2 + $0x70] sm:$0xff]
      %v1993 = vld [vmem:[%s2 + $0x78] sm:$0xff]
      %v1994 = vld [vmem:[%s2 + $0x80] sm:$0xff]
      %v1995 = vld [vmem:[%s2 + $0x88] sm:$0xff]
      %v1996 = vld [vmem:[%s2 + $0x90] sm:$0xff]
      %v1997 = vld [vmem:[%s2 + $0x98] sm:$0xff]
      %v1998 = vld [vmem:[%s2 + $0xa0] sm:$0xff]
      %v1999 = vld [vmem:[%s2 + $0xa8] sm:$0xff]
      %v2000 = vld [vmem:[%s2 + $0xb0] sm:$0xff]
      %v2001 = vld [vmem:[%s2 + $0xb8] sm:$0xff]
      %v2002 = vld [vmem:[%s2 + $0xc0] sm:$0xff]
      %v2003 = vld [vmem:[%s2 + $0xc8] sm:$0xff]
      %v2004 = vld [vmem:[%s2 + $0xd0] sm:$0xff]
      %v2005 = vld [vmem:[%s2 + $0xd8] sm:$0xff]
      %v2006 = vld [vmem:[%s2 + $0xe0] sm:$0xff]
      %v2007 = vld [vmem:[%s2 + $0xe8] sm:$0xff]
      %v2008 = vld [vmem:[%s2 + $0xf0] sm:$0xff]
      %v2009 = vld [vmem:[%s2 + $0xf8] sm:$0xff]
      %v2010 = vld [vmem:[%s2 + $0x100] sm:$0xff]
      %v2011 = vld [vmem:[%s2 + $0x108] sm:$0xff]
      %v2012 = vld [vmem:[%s2 + $0x110] sm:$0xff]
      %v2013 = vld [vmem:[%s2 + $0x118] sm:$0xff]
      %v2014 = vld [vmem:[%s2 + $0x120] sm:$0xff]
      %v2015 = vld [vmem:[%s2 + $0x128] sm:$0xff]
      %v2016 = vld [vmem:[%s2 + $0x130] sm:$0xff]
      %v2017 = vld [vmem:[%s2 + $0x138] sm:$0xff]
      %v2018 = vld [vmem:[%s2 + $0x140] sm:$0xff]
      %v2019 = vld [vmem:[%s2 + $0x148] sm:$0xff]
      %v2020 = vld [vmem:[%s2 + $0x150] sm:$0xff]
      %v2021 = vld [vmem:[%s2 + $0x158] sm:$0xff]
      %v2022 = vld [vmem:[%s2 + $0x160] sm:$0xff]
      %v2023 = vld [vmem:[%s2 + $0x168] sm:$0xff]
      %v2024 = vld [vmem:[%s2 + $0x170] sm:$0xff]
      %v2025 = vld [vmem:[%s2 + $0x178] sm:$0xff]
      %v2026 = vld [vmem:[%s2 + $0x180] sm:$0xff]
      %v2027 = vld [vmem:[%s2 + $0x188] sm:$0xff]
      %v2028 = vld [vmem:[%s2 + $0x190] sm:$0xff]
      %v2029 = vld [vmem:[%s2 + $0x198] sm:$0xff]
      %v2030 = vld [vmem:[%s2 + $0x1a0] sm:$0xff]
      %v2031 = vld [vmem:[%s2 + $0x1a8] sm:$0xff]
      %v2032 = vld [vmem:[%s2 + $0x1b0] sm:$0xff]
      %v2033 = vld [vmem:[%s2 + $0x1b8] sm:$0xff]
      %v2034 = vld [vmem:[%s2 + $0x1c0] sm:$0xff]
      %v2035 = vld [vmem:[%s2 + $0x1c8] sm:$0xff]
      %v2036 = vld [vmem:[%s2 + $0x1d0] sm:$0xff]
      %v2037 = vld [vmem:[%s2 + $0x1d8] sm:$0xff]
      %v2038 = vld [vmem:[%s2 + $0x1e0] sm:$0xff]
      %v2039 = vld [vmem:[%s2 + $0x1e8] sm:$0xff]
      %v2040 = vld [vmem:[%s2 + $0x1f0] sm:$0xff]
      %v2041 = vld [vmem:[%s2 + $0x1f8] sm:$0xff]
      %v2042 = vld [vmem:[%s2 + $0x200] sm:$0xff]
      %v2043 = vld [vmem:[%s2 + $0x208] sm:$0xff]
      %v2044 = vld [vmem:[%s2 + $0x210] sm:$0xff]
      %v2045 = vld [vmem:[%s2 + $0x218] sm:$0xff]
      %v2046 = vld [vmem:[%s2 + $0x220] sm:$0xff]
      %v2047 = vld [vmem:[%s2 + $0x228] sm:$0xff]
      %v2048 = vld [vmem:[%s2 + $0x230] sm:$0xff]
      %v2049 = vld [vmem:[%s2 + $0x238] sm:$0xff]
      %v2050 = vld [vmem:[%s2 + $0x240] sm:$0xff]
      %v2051 = vld [vmem:[%s2 + $0x248] sm:$0xff]
      %v2052 = vld [vmem:[%s2 + $0x250] sm:$0xff]
      %v2053 = vld [vmem:[%s2 + $0x258] sm:$0xff]
      %v2054 = vld [vmem:[%s2 + $0x260] sm:$0xff]
      %v2055 = vld [vmem:[%s2 + $0x268] sm:$0xff]
      %v2056 = vld [vmem:[%s2 + $0x270] sm:$0xff]
      %v2057 = vld [vmem:[%s2 + $0x278] sm:$0xff]
      %v2058 = vld [vmem:[%s2 + $0x280] sm:$0xff]
      %v2059 = vld [vmem:[%s2 + $0x288] sm:$0xff]
      %v2060 = vld [vmem:[%s2 + $0x290] sm:$0xff]
      %v2061 = vld [vmem:[%s2 + $0x298] sm:$0xff]
      %v2062 = vld [vmem:[%s2 + $0x2a0] sm:$0xff]
      %v2063 = vld [vmem:[%s2 + $0x2a8] sm:$0xff]
      %v2064 = vld [vmem:[%s2 + $0x2b0] sm:$0xff]
      %v2065 = vld [vmem:[%s2 + $0x2b8] sm:$0xff]
      %v2066 = vld [vmem:[%s2 + $0x2c0] sm:$0xff]
      %v2067 = vld [vmem:[%s2 + $0x2c8] sm:$0xff]
      %v2068 = vld [vmem:[%s2 + $0x2d0] sm:$0xff]
      %v2069 = vld [vmem:[%s2 + $0x2d8] sm:$0xff]
      %v2070 = vld [vmem:[%s2 + $0x2e0] sm:$0xff]
      %v2071 = vld [vmem:[%s2 + $0x2e8] sm:$0xff]
      %v2072 = vld [vmem:[%s2 + $0x2f0] sm:$0xff]
      %v2073 = vld [vmem:[%s2 + $0x2f8] sm:$0xff]
      %v2074 = vld [vmem:[%s2 + $0x300] sm:$0xff]
      %v2075 = vld [vmem:[%s2 + $0x308] sm:$0xff]
      %v2076 = vld [vmem:[%s2 + $0x310] sm:$0xff]
      %v2077 = vld [vmem:[%s2 + $0x318] sm:$0xff]
      %v2078 = vld [vmem:[%s2 + $0x320] sm:$0xff]
      %v2079 = vld [vmem:[%s2 + $0x328] sm:$0xff]
      %v2080 = vld [vmem:[%s2 + $0x330] sm:$0xff]
      %v2081 = vld [vmem:[%s2 + $0x338] sm:$0xff]
      %v2082 = vld [vmem:[%s2 + $0x340] sm:$0xff]
      %v2083 = vld [vmem:[%s2 + $0x348] sm:$0xff]
      %v2084 = vld [vmem:[%s2 + $0x350] sm:$0xff]
      %v2085 = vld [vmem:[%s2 + $0x358] sm:$0xff]
      %v2086 = vld [vmem:[%s2 + $0x360] sm:$0xff]
      %v2087 = vld [vmem:[%s2 + $0x368] sm:$0xff]
      %v2088 = vld [vmem:[%s2 + $0x370] sm:$0xff]
      %v2089 = vld [vmem:[%s2 + $0x378] sm:$0xff]
      %v2090 = vld [vmem:[%s2 + $0x380] sm:$0xff]
      %v2091 = vld [vmem:[%s2 + $0x388] sm:$0xff]
      %v2092 = vld [vmem:[%s2 + $0x390] sm:$0xff]
      %v2093 = vld [vmem:[%s2 + $0x398] sm:$0xff]
      %v2094 = vld [vmem:[%s2 + $0x3a0] sm:$0xff]
      %v2095 = vld [vmem:[%s2 + $0x3a8] sm:$0xff]
      %v2096 = vld [vmem:[%s2 + $0x3b0] sm:$0xff]
      %v2097 = vld [vmem:[%s2 + $0x3b8] sm:$0xff]
      %v2098 = vld [vmem:[%s2 + $0x3c0] sm:$0xff]
      %v2099 = vld [vmem:[%s2 + $0x3c8] sm:$0xff]
      %v2100 = vld [vmem:[%s2 + $0x3d0] sm:$0xff]
      %v2101 = vld [vmem:[%s2 + $0x3d8] sm:$0xff]
      %v2102 = vld [vmem:[%s2 + $0x3e0] sm:$0xff]
      %v2103 = vld [vmem:[%s2 + $0x3e8] sm:$0xff]
      %v2104 = vld [vmem:[%s2 + $0x3f0] sm:$0xff]
      %v2105 = vld [vmem:[%s2 + $0x3f8] sm:$0xff]
      %v2106 = vld [vmem:[%s2 + $0x400] sm:$0xff]
      %v2107 = vld [vmem:[%s2 + $0x408] sm:$0xff]
      %v2108 = vld [vmem:[%s2 + $0x410] sm:$0xff]
      %v2109 = vld [vmem:[%s2 + $0x418] sm:$0xff]
      %v2110 = vld [vmem:[%s2 + $0x420] sm:$0xff]
      %v2111 = vld [vmem:[%s2 + $0x428] sm:$0xff]
      %v2112 = vld [vmem:[%s2 + $0x430] sm:$0xff]
      %v2113 = vld [vmem:[%s2 + $0x438] sm:$0xff]
      %v2114 = vld [vmem:[%s2 + $0x440] sm:$0xff]
      %v2115 = vld [vmem:[%s2 + $0x448] sm:$0xff]
      %v2116 = vld [vmem:[%s2 + $0x450] sm:$0xff]
      %v2117 = vld [vmem:[%s2 + $0x458] sm:$0xff]
      %v2118 = vld [vmem:[%s2 + $0x460] sm:$0xff]
      %v2119 = vld [vmem:[%s2 + $0x468] sm:$0xff]
      %v2120 = vld [vmem:[%s2 + $0x470] sm:$0xff]
      %v2121 = vld [vmem:[%s2 + $0x478] sm:$0xff]
      %v2122 = vld [vmem:[%s2 + $0x480] sm:$0xff]
      %v2123 = vld [vmem:[%s2 + $0x488] sm:$0xff]
      %v2124 = vld [vmem:[%s2 + $0x490] sm:$0xff]
      %v2125 = vld [vmem:[%s2 + $0x498] sm:$0xff]
      %v2126 = vld [vmem:[%s2 + $0x4a0] sm:$0xff]
      %v2127 = vld [vmem:[%s2 + $0x4a8] sm:$0xff]
      %v2128 = vld [vmem:[%s2 + $0x4b0] sm:$0xff]
      %v2129 = vld [vmem:[%s2 + $0x4b8] sm:$0xff]
      %v2130 = vld [vmem:[%s2 + $0x4c0] sm:$0xff]
      %v2131 = vld [vmem:[%s2 + $0x4c8] sm:$0xff]
      %v2132 = vld [vmem:[%s2 + $0x4d0] sm:$0xff]
      %v2133 = vld [vmem:[%s2 + $0x4d8] sm:$0xff]
      %v2134 = vld [vmem:[%s2 + $0x4e0] sm:$0xff]
      %v2135 = vld [vmem:[%s2 + $0x4e8] sm:$0xff]
      %v2136 = vld [vmem:[%s2 + $0x4f0] sm:$0xff]
      %v2137 = vld [vmem:[%s2 + $0x4f8] sm:$0xff]
      %v2138 = vld [vmem:[%s2 + $0x500] sm:$0xff]
      %v2139 = vld [vmem:[%s2 + $0x508] sm:$0xff]
      %v2140 = vld [vmem:[%s2 + $0x510] sm:$0xff]
      %v2141 = vld [vmem:[%s2 + $0x518] sm:$0xff]
      %v2142 = vld [vmem:[%s2 + $0x520] sm:$0xff]
      %v2143 = vld [vmem:[%s2 + $0x528] sm:$0xff]
      %v2144 = vld [vmem:[%s2 + $0x530] sm:$0xff]
      %v2145 = vld [vmem:[%s2 + $0x538] sm:$0xff]
      %v2146 = vld [vmem:[%s2 + $0x540] sm:$0xff]
      %v2147 = vld [vmem:[%s2 + $0x548] sm:$0xff]
      %v2148 = vld [vmem:[%s2 + $0x550] sm:$0xff]
      %v2149 = vld [vmem:[%s2 + $0x558] sm:$0xff]
      %v2150 = vld [vmem:[%s2 + $0x560] sm:$0xff]
      %v2151 = vld [vmem:[%s2 + $0x568] sm:$0xff]
      %v2152 = vld [vmem:[%s2 + $0x570] sm:$0xff]
      %v2153 = vld [vmem:[%s2 + $0x578] sm:$0xff]
      %v2154 = vld [vmem:[%s2 + $0x580] sm:$0xff]
      %v2155 = vld [vmem:[%s2 + $0x588] sm:$0xff]
      %v2156 = vld [vmem:[%s2 + $0x590] sm:$0xff]
      %v2157 = vld [vmem:[%s2 + $0x598] sm:$0xff]
      %v2158 = vld [vmem:[%s2 + $0x5a0] sm:$0xff]
      %v2159 = vld [vmem:[%s2 + $0x5a8] sm:$0xff]
      %v2160 = vld [vmem:[%s2 + $0x5b0] sm:$0xff]
      %v2161 = vld [vmem:[%s2 + $0x5b8] sm:$0xff]
      %v2162 = vld [vmem:[%s2 + $0x5c0] sm:$0xff]
      %v2163 = vld [vmem:[%s2 + $0x5c8] sm:$0xff]
      %v2164 = vld [vmem:[%s2 + $0x5d0] sm:$0xff]
      %v2165 = vld [vmem:[%s2 + $0x5d8] sm:$0xff]
      %v2166 = vld [vmem:[%s2 + $0x5e0] sm:$0xff]
      %v2167 = vld [vmem:[%s2 + $0x5e8] sm:$0xff]
      %v2168 = vld [vmem:[%s2 + $0x5f0] sm:$0xff]
      %v2169 = vld [vmem:[%s2 + $0x5f8] sm:$0xff]
      %v2170 = vld [vmem:[%s2 + $0x600] sm:$0xff]
      %v2171 = vld [vmem:[%s2 + $0x608] sm:$0xff]
      %v2172 = vld [vmem:[%s2 + $0x610] sm:$0xff]
      %v2173 = vld [vmem:[%s2 + $0x618] sm:$0xff]
      %v2174 = vld [vmem:[%s2 + $0x620] sm:$0xff]
      %v2175 = vld [vmem:[%s2 + $0x628] sm:$0xff]
      %v2176 = vld [vmem:[%s2 + $0x630] sm:$0xff]
      %v2177 = vld [vmem:[%s2 + $0x638] sm:$0xff]
      %v2178 = vld [vmem:[%s2 + $0x640] sm:$0xff]
      %v2179 = vld [vmem:[%s2 + $0x648] sm:$0xff]
      %v2180 = vld [vmem:[%s2 + $0x650] sm:$0xff]
      %v2181 = vld [vmem:[%s2 + $0x658] sm:$0xff]
      %v2182 = vld [vmem:[%s2 + $0x660] sm:$0xff]
      %v2183 = vld [vmem:[%s2 + $0x668] sm:$0xff]
      %v2184 = vld [vmem:[%s2 + $0x670] sm:$0xff]
      %v2185 = vld [vmem:[%s2 + $0x678] sm:$0xff]
      %v2186 = vld [vmem:[%s2 + $0x680] sm:$0xff]
      %v2187 = vld [vmem:[%s2 + $0x688] sm:$0xff]
      %v2188 = vld [vmem:[%s2 + $0x690] sm:$0xff]
      %v2189 = vld [vmem:[%s2 + $0x698] sm:$0xff]
      %v2190 = vld [vmem:[%s2 + $0x6a0] sm:$0xff]
      %v2191 = vld [vmem:[%s2 + $0x6a8] sm:$0xff]
      %v2192 = vld [vmem:[%s2 + $0x6b0] sm:$0xff]
      %v2193 = vld [vmem:[%s2 + $0x6b8] sm:$0xff]
      %v2194 = vld [vmem:[%s2 + $0x6c0] sm:$0xff]
      %v2195 = vld [vmem:[%s2 + $0x6c8] sm:$0xff]
      %v2196 = vld [vmem:[%s2 + $0x6d0] sm:$0xff]
      %v2197 = vld [vmem:[%s2 + $0x6d8] sm:$0xff]
      %v2198 = vld [vmem:[%s2 + $0x6e0] sm:$0xff]
      %v2199 = vld [vmem:[%s2 + $0x6e8] sm:$0xff]
      %v2200 = vld [vmem:[%s2 + $0x6f0] sm:$0xff]
      %v2201 = vld [vmem:[%s2 + $0x6f8] sm:$0xff]
      %v2202 = vld [vmem:[%s2 + $0x700] sm:$0xff]
      %v2203 = vld [vmem:[%s2 + $0x708] sm:$0xff]
      %v2204 = vld [vmem:[%s2 + $0x710] sm:$0xff]
      %v2205 = vld [vmem:[%s2 + $0x718] sm:$0xff]
      %v2206 = vld [vmem:[%s2 + $0x720] sm:$0xff]
      %v2207 = vld [vmem:[%s2 + $0x728] sm:$0xff]
      %v2208 = vld [vmem:[%s2 + $0x730] sm:$0xff]
      %v2209 = vld [vmem:[%s2 + $0x738] sm:$0xff]
      %v2210 = vld [vmem:[%s2 + $0x740] sm:$0xff]
      %v2211 = vld [vmem:[%s2 + $0x748] sm:$0xff]
      %v2212 = vld [vmem:[%s2 + $0x750] sm:$0xff]
      %v2213 = vld [vmem:[%s2 + $0x758] sm:$0xff]
      %v2214 = vld [vmem:[%s2 + $0x760] sm:$0xff]
      %v2215 = vld [vmem:[%s2 + $0x768] sm:$0xff]
      %v2216 = vld [vmem:[%s2 + $0x770] sm:$0xff]
      %v2217 = vld [vmem:[%s2 + $0x778] sm:$0xff]
      %v2218 = vld [vmem:[%s2 + $0x780] sm:$0xff]
      %v2219 = vld [vmem:[%s2 + $0x788] sm:$0xff]
      %v2220 = vld [vmem:[%s2 + $0x790] sm:$0xff]
      %v2221 = vld [vmem:[%s2 + $0x798] sm:$0xff]
      %v2222 = vld [vmem:[%s2 + $0x7a0] sm:$0xff]
      %v2223 = vld [vmem:[%s2 + $0x7a8] sm:$0xff]
      %v2224 = vld [vmem:[%s2 + $0x7b0] sm:$0xff]
      %v2225 = vld [vmem:[%s2 + $0x7b8] sm:$0xff]
      %v2226 = vld [vmem:[%s2 + $0x7c0] sm:$0xff]
      %v2227 = vld [vmem:[%s2 + $0x7c8] sm:$0xff]
      %v2478 = vunpack.c.l.b16 %v1978
      %v2479 = vunpack.c.h.b16 %v1978
      %v2480 = vunpack.c.l.b16 %v1979
      %v2481 = vunpack.c.h.b16 %v1979
      %v2482 = vunpack.c.l.b16 %v1980
      %v2483 = vunpack.c.h.b16 %v1980
      %v2484 = vunpack.c.l.b16 %v1981
      %v2485 = vunpack.c.h.b16 %v1981
      %v2486 = vunpack.c.l.b16 %v1982
      %v2487 = vunpack.c.h.b16 %v1982
      %v2488 = vunpack.c.l.b16 %v1983
      %v2489 = vunpack.c.h.b16 %v1983
      %v2490 = vunpack.c.l.b16 %v1984
      %v2491 = vunpack.c.h.b16 %v1984
      %v2492 = vunpack.c.l.b16 %v1985
      %v2493 = vunpack.c.h.b16 %v1985
      %v2494 = vunpack.c.l.b16 %v1986
      %v2495 = vunpack.c.h.b16 %v1986
      %v2496 = vunpack.c.l.b16 %v1987
      %v2497 = vunpack.c.h.b16 %v1987
      %v2498 = vunpack.c.l.b16 %v1988
      %v2499 = vunpack.c.h.b16 %v1988
      %v2500 = vunpack.c.l.b16 %v1989
      %v2501 = vunpack.c.h.b16 %v1989
      %v2502 = vunpack.c.l.b16 %v1990
      %v2503 = vunpack.c.h.b16 %v1990
      %v2504 = vunpack.c.l.b16 %v1991
      %v2505 = vunpack.c.h.b16 %v1991
      %v2506 = vunpack.c.l.b16 %v1992
      %v2507 = vunpack.c.h.b16 %v1992
      %v2508 = vunpack.c.l.b16 %v1993
      %v2509 = vunpack.c.h.b16 %v1993
      %v2510 = vunpack.c.l.b16 %v1994
      %v2511 = vunpack.c.h.b16 %v1994
      %v2512 = vunpack.c.l.b16 %v1995
      %v2513 = vunpack.c.h.b16 %v1995
      %v2514 = vunpack.c.l.b16 %v1996
      %v2515 = vunpack.c.h.b16 %v1996
      %v2516 = vunpack.c.l.b16 %v1997
      %v2517 = vunpack.c.h.b16 %v1997
      %v2518 = vunpack.c.l.b16 %v1998
      %v2519 = vunpack.c.h.b16 %v1998
      %v2520 = vunpack.c.l.b16 %v1999
      %v2521 = vunpack.c.h.b16 %v1999
      %v2522 = vunpack.c.l.b16 %v2000
      %v2523 = vunpack.c.h.b16 %v2000
      %v2524 = vunpack.c.l.b16 %v2001
      %v2525 = vunpack.c.h.b16 %v2001
      %v2526 = vunpack.c.l.b16 %v2002
      %v2527 = vunpack.c.h.b16 %v2002
      %v2528 = vunpack.c.l.b16 %v2003
      %v2529 = vunpack.c.h.b16 %v2003
      %v2530 = vunpack.c.l.b16 %v2004
      %v2531 = vunpack.c.h.b16 %v2004
      %v2532 = vunpack.c.l.b16 %v2005
      %v2533 = vunpack.c.h.b16 %v2005
      %v2534 = vunpack.c.l.b16 %v2006
      %v2535 = vunpack.c.h.b16 %v2006
      %v2536 = vunpack.c.l.b16 %v2007
      %v2537 = vunpack.c.h.b16 %v2007
      %v2538 = vunpack.c.l.b16 %v2008
      %v2539 = vunpack.c.h.b16 %v2008
      %v2540 = vunpack.c.l.b16 %v2009
      %v2541 = vunpack.c.h.b16 %v2009
      %v2542 = vunpack.c.l.b16 %v2010
      %v2543 = vunpack.c.h.b16 %v2010
      %v2544 = vunpack.c.l.b16 %v2011
      %v2545 = vunpack.c.h.b16 %v2011
      %v2546 = vunpack.c.l.b16 %v2012
      %v2547 = vunpack.c.h.b16 %v2012
      %v2548 = vunpack.c.l.b16 %v2013
      %v2549 = vunpack.c.h.b16 %v2013
      %v2550 = vunpack.c.l.b16 %v2014
      %v2551 = vunpack.c.h.b16 %v2014
      %v2552 = vunpack.c.l.b16 %v2015
      %v2553 = vunpack.c.h.b16 %v2015
      %v2554 = vunpack.c.l.b16 %v2016
      %v2555 = vunpack.c.h.b16 %v2016
      %v2556 = vunpack.c.l.b16 %v2017
      %v2557 = vunpack.c.h.b16 %v2017
      %v2558 = vunpack.c.l.b16 %v2018
      %v2559 = vunpack.c.h.b16 %v2018
      %v2560 = vunpack.c.l.b16 %v2019
      %v2561 = vunpack.c.h.b16 %v2019
      %v2562 = vunpack.c.l.b16 %v2020
      %v2563 = vunpack.c.h.b16 %v2020
      %v2564 = vunpack.c.l.b16 %v2021
      %v2565 = vunpack.c.h.b16 %v2021
      %v2566 = vunpack.c.l.b16 %v2022
      %v2567 = vunpack.c.h.b16 %v2022
      %v2568 = vunpack.c.l.b16 %v2023
      %v2569 = vunpack.c.h.b16 %v2023
      %v2570 = vunpack.c.l.b16 %v2024
      %v2571 = vunpack.c.h.b16 %v2024
      %v2572 = vunpack.c.l.b16 %v2025
      %v2573 = vunpack.c.h.b16 %v2025
      %v2574 = vunpack.c.l.b16 %v2026
      %v2575 = vunpack.c.h.b16 %v2026
      %v2576 = vunpack.c.l.b16 %v2027
      %v2577 = vunpack.c.h.b16 %v2027
      %v2578 = vunpack.c.l.b16 %v2028
      %v2579 = vunpack.c.h.b16 %v2028
      %v2580 = vunpack.c.l.b16 %v2029
      %v2581 = vunpack.c.h.b16 %v2029
      %v2582 = vunpack.c.l.b16 %v2030
      %v2583 = vunpack.c.h.b16 %v2030
      %v2584 = vunpack.c.l.b16 %v2031
      %v2585 = vunpack.c.h.b16 %v2031
      %v2586 = vunpack.c.l.b16 %v2032
      %v2587 = vunpack.c.h.b16 %v2032
      %v2588 = vunpack.c.l.b16 %v2033
      %v2589 = vunpack.c.h.b16 %v2033
      %v2590 = vunpack.c.l.b16 %v2034
      %v2591 = vunpack.c.h.b16 %v2034
      %v2592 = vunpack.c.l.b16 %v2035
      %v2593 = vunpack.c.h.b16 %v2035
      %v2594 = vunpack.c.l.b16 %v2036
      %v2595 = vunpack.c.h.b16 %v2036
      %v2596 = vunpack.c.l.b16 %v2037
      %v2597 = vunpack.c.h.b16 %v2037
      %v2598 = vunpack.c.l.b16 %v2038
      %v2599 = vunpack.c.h.b16 %v2038
      %v2600 = vunpack.c.l.b16 %v2039
      %v2601 = vunpack.c.h.b16 %v2039
      %v2602 = vunpack.c.l.b16 %v2040
      %v2603 = vunpack.c.h.b16 %v2040
      %v2604 = vunpack.c.l.b16 %v2041
      %v2605 = vunpack.c.h.b16 %v2041
      %v2606 = vunpack.c.l.b16 %v2042
      %v2607 = vunpack.c.h.b16 %v2042
      %v2608 = vunpack.c.l.b16 %v2043
      %v2609 = vunpack.c.h.b16 %v2043
      %v2610 = vunpack.c.l.b16 %v2044
      %v2611 = vunpack.c.h.b16 %v2044
      %v2612 = vunpack.c.l.b16 %v2045
      %v2613 = vunpack.c.h.b16 %v2045
      %v2614 = vunpack.c.l.b16 %v2046
      %v2615 = vunpack.c.h.b16 %v2046
      %v2616 = vunpack.c.l.b16 %v2047
      %v2617 = vunpack.c.h.b16 %v2047
      %v2618 = vunpack.c.l.b16 %v2048
      %v2619 = vunpack.c.h.b16 %v2048
      %v2620 = vunpack.c.l.b16 %v2049
      %v2621 = vunpack.c.h.b16 %v2049
      %v2622 = vunpack.c.l.b16 %v2050
      %v2623 = vunpack.c.h.b16 %v2050
      %v2624 = vunpack.c.l.b16 %v2051
      %v2625 = vunpack.c.h.b16 %v2051
      %v2626 = vunpack.c.l.b16 %v2052
      %v2627 = vunpack.c.h.b16 %v2052
      %v2628 = vunpack.c.l.b16 %v2053
      %v2629 = vunpack.c.h.b16 %v2053
      %v2630 = vunpack.c.l.b16 %v2054
      %v2631 = vunpack.c.h.b16 %v2054
      %v2632 = vunpack.c.l.b16 %v2055
      %v2633 = vunpack.c.h.b16 %v2055
      %v2634 = vunpack.c.l.b16 %v2056
      %v2635 = vunpack.c.h.b16 %v2056
      %v2636 = vunpack.c.l.b16 %v2057
      %v2637 = vunpack.c.h.b16 %v2057
      %v2638 = vunpack.c.l.b16 %v2058
      %v2639 = vunpack.c.h.b16 %v2058
      %v2640 = vunpack.c.l.b16 %v2059
      %v2641 = vunpack.c.h.b16 %v2059
      %v2642 = vunpack.c.l.b16 %v2060
      %v2643 = vunpack.c.h.b16 %v2060
      %v2644 = vunpack.c.l.b16 %v2061
      %v2645 = vunpack.c.h.b16 %v2061
      %v2646 = vunpack.c.l.b16 %v2062
      %v2647 = vunpack.c.h.b16 %v2062
      %v2648 = vunpack.c.l.b16 %v2063
      %v2649 = vunpack.c.h.b16 %v2063
      %v2650 = vunpack.c.l.b16 %v2064
      %v2651 = vunpack.c.h.b16 %v2064
      %v2652 = vunpack.c.l.b16 %v2065
      %v2653 = vunpack.c.h.b16 %v2065
      %v2654 = vunpack.c.l.b16 %v2066
      %v2655 = vunpack.c.h.b16 %v2066
      %v2656 = vunpack.c.l.b16 %v2067
      %v2657 = vunpack.c.h.b16 %v2067
      %v2658 = vunpack.c.l.b16 %v2068
      %v2659 = vunpack.c.h.b16 %v2068
      %v2660 = vunpack.c.l.b16 %v2069
      %v2661 = vunpack.c.h.b16 %v2069
      %v2662 = vunpack.c.l.b16 %v2070
      %v2663 = vunpack.c.h.b16 %v2070
      %v2664 = vunpack.c.l.b16 %v2071
      %v2665 = vunpack.c.h.b16 %v2071
      %v2666 = vunpack.c.l.b16 %v2072
      %v2667 = vunpack.c.h.b16 %v2072
      %v2668 = vunpack.c.l.b16 %v2073
      %v2669 = vunpack.c.h.b16 %v2073
      %v2670 = vunpack.c.l.b16 %v2074
      %v2671 = vunpack.c.h.b16 %v2074
      %v2672 = vunpack.c.l.b16 %v2075
      %v2673 = vunpack.c.h.b16 %v2075
      %v2674 = vunpack.c.l.b16 %v2076
      %v2675 = vunpack.c.h.b16 %v2076
      %v2676 = vunpack.c.l.b16 %v2077
      %v2677 = vunpack.c.h.b16 %v2077
      %v2678 = vunpack.c.l.b16 %v2078
      %v2679 = vunpack.c.h.b16 %v2078
      %v2680 = vunpack.c.l.b16 %v2079
      %v2681 = vunpack.c.h.b16 %v2079
      %v2682 = vunpack.c.l.b16 %v2080
      %v2683 = vunpack.c.h.b16 %v2080
      %v2684 = vunpack.c.l.b16 %v2081
      %v2685 = vunpack.c.h.b16 %v2081
      %v2686 = vunpack.c.l.b16 %v2082
      %v2687 = vunpack.c.h.b16 %v2082
      %v2688 = vunpack.c.l.b16 %v2083
      %v2689 = vunpack.c.h.b16 %v2083
      %v2690 = vunpack.c.l.b16 %v2084
      %v2691 = vunpack.c.h.b16 %v2084
      %v2692 = vunpack.c.l.b16 %v2085
      %v2693 = vunpack.c.h.b16 %v2085
      %v2694 = vunpack.c.l.b16 %v2086
      %v2695 = vunpack.c.h.b16 %v2086
      %v2696 = vunpack.c.l.b16 %v2087
      %v2697 = vunpack.c.h.b16 %v2087
      %v2698 = vunpack.c.l.b16 %v2088
      %v2699 = vunpack.c.h.b16 %v2088
      %v2700 = vunpack.c.l.b16 %v2089
      %v2701 = vunpack.c.h.b16 %v2089
      %v2702 = vunpack.c.l.b16 %v2090
      %v2703 = vunpack.c.h.b16 %v2090
      %v2704 = vunpack.c.l.b16 %v2091
      %v2705 = vunpack.c.h.b16 %v2091
      %v2706 = vunpack.c.l.b16 %v2092
      %v2707 = vunpack.c.h.b16 %v2092
      %v2708 = vunpack.c.l.b16 %v2093
      %v2709 = vunpack.c.h.b16 %v2093
      %v2710 = vunpack.c.l.b16 %v2094
      %v2711 = vunpack.c.h.b16 %v2094
      %v2712 = vunpack.c.l.b16 %v2095
      %v2713 = vunpack.c.h.b16 %v2095
      %v2714 = vunpack.c.l.b16 %v2096
      %v2715 = vunpack.c.h.b16 %v2096
      %v2716 = vunpack.c.l.b16 %v2097
      %v2717 = vunpack.c.h.b16 %v2097
      %v2718 = vunpack.c.l.b16 %v2098
      %v2719 = vunpack.c.h.b16 %v2098
      %v2720 = vunpack.c.l.b16 %v2099
      %v2721 = vunpack.c.h.b16 %v2099
      %v2722 = vunpack.c.l.b16 %v2100
      %v2723 = vunpack.c.h.b16 %v2100
      %v2724 = vunpack.c.l.b16 %v2101
      %v2725 = vunpack.c.h.b16 %v2101
      %v2726 = vunpack.c.l.b16 %v2102
      %v2727 = vunpack.c.h.b16 %v2102
      %v2728 = vunpack.c.l.b16 %v2103
      %v2729 = vunpack.c.h.b16 %v2103
      %v2730 = vunpack.c.l.b16 %v2104
      %v2731 = vunpack.c.h.b16 %v2104
      %v2732 = vunpack.c.l.b16 %v2105
      %v2733 = vunpack.c.h.b16 %v2105
      %v2734 = vunpack.c.l.b16 %v2106
      %v2735 = vunpack.c.h.b16 %v2106
      %v2736 = vunpack.c.l.b16 %v2107
      %v2737 = vunpack.c.h.b16 %v2107
      %v2738 = vunpack.c.l.b16 %v2108
      %v2739 = vunpack.c.h.b16 %v2108
      %v2740 = vunpack.c.l.b16 %v2109
      %v2741 = vunpack.c.h.b16 %v2109
      %v2742 = vunpack.c.l.b16 %v2110
      %v2743 = vunpack.c.h.b16 %v2110
      %v2744 = vunpack.c.l.b16 %v2111
      %v2745 = vunpack.c.h.b16 %v2111
      %v2746 = vunpack.c.l.b16 %v2112
      %v2747 = vunpack.c.h.b16 %v2112
      %v2748 = vunpack.c.l.b16 %v2113
      %v2749 = vunpack.c.h.b16 %v2113
      %v2750 = vunpack.c.l.b16 %v2114
      %v2751 = vunpack.c.h.b16 %v2114
      %v2752 = vunpack.c.l.b16 %v2115
      %v2753 = vunpack.c.h.b16 %v2115
      %v2754 = vunpack.c.l.b16 %v2116
      %v2755 = vunpack.c.h.b16 %v2116
      %v2756 = vunpack.c.l.b16 %v2117
      %v2757 = vunpack.c.h.b16 %v2117
      %v2758 = vunpack.c.l.b16 %v2118
      %v2759 = vunpack.c.h.b16 %v2118
      %v2760 = vunpack.c.l.b16 %v2119
      %v2761 = vunpack.c.h.b16 %v2119
      %v2762 = vunpack.c.l.b16 %v2120
      %v2763 = vunpack.c.h.b16 %v2120
      %v2764 = vunpack.c.l.b16 %v2121
      %v2765 = vunpack.c.h.b16 %v2121
      %v2766 = vunpack.c.l.b16 %v2122
      %v2767 = vunpack.c.h.b16 %v2122
      %v2768 = vunpack.c.l.b16 %v2123
      %v2769 = vunpack.c.h.b16 %v2123
      %v2770 = vunpack.c.l.b16 %v2124
      %v2771 = vunpack.c.h.b16 %v2124
      %v2772 = vunpack.c.l.b16 %v2125
      %v2773 = vunpack.c.h.b16 %v2125
      %v2774 = vunpack.c.l.b16 %v2126
      %v2775 = vunpack.c.h.b16 %v2126
      %v2776 = vunpack.c.l.b16 %v2127
      %v2777 = vunpack.c.h.b16 %v2127
      %v2778 = vunpack.c.l.b16 %v2128
      %v2779 = vunpack.c.h.b16 %v2128
      %v2780 = vunpack.c.l.b16 %v2129
      %v2781 = vunpack.c.h.b16 %v2129
      %v2782 = vunpack.c.l.b16 %v2130
      %v2783 = vunpack.c.h.b16 %v2130
      %v2784 = vunpack.c.l.b16 %v2131
      %v2785 = vunpack.c.h.b16 %v2131
      %v2786 = vunpack.c.l.b16 %v2132
      %v2787 = vunpack.c.h.b16 %v2132
      %v2788 = vunpack.c.l.b16 %v2133
      %v2789 = vunpack.c.h.b16 %v2133
      %v2790 = vunpack.c.l.b16 %v2134
      %v2791 = vunpack.c.h.b16 %v2134
      %v2792 = vunpack.c.l.b16 %v2135
      %v2793 = vunpack.c.h.b16 %v2135
      %v2794 = vunpack.c.l.b16 %v2136
      %v2795 = vunpack.c.h.b16 %v2136
      %v2796 = vunpack.c.l.b16 %v2137
      %v2797 = vunpack.c.h.b16 %v2137
      %v2798 = vunpack.c.l.b16 %v2138
      %v2799 = vunpack.c.h.b16 %v2138
      %v2800 = vunpack.c.l.b16 %v2139
      %v2801 = vunpack.c.h.b16 %v2139
      %v2802 = vunpack.c.l.b16 %v2140
      %v2803 = vunpack.c.h.b16 %v2140
      %v2804 = vunpack.c.l.b16 %v2141
      %v2805 = vunpack.c.h.b16 %v2141
      %v2806 = vunpack.c.l.b16 %v2142
      %v2807 = vunpack.c.h.b16 %v2142
      %v2808 = vunpack.c.l.b16 %v2143
      %v2809 = vunpack.c.h.b16 %v2143
      %v2810 = vunpack.c.l.b16 %v2144
      %v2811 = vunpack.c.h.b16 %v2144
      %v2812 = vunpack.c.l.b16 %v2145
      %v2813 = vunpack.c.h.b16 %v2145
      %v2814 = vunpack.c.l.b16 %v2146
      %v2815 = vunpack.c.h.b16 %v2146
      %v2816 = vunpack.c.l.b16 %v2147
      %v2817 = vunpack.c.h.b16 %v2147
      %v2818 = vunpack.c.l.b16 %v2148
      %v2819 = vunpack.c.h.b16 %v2148
      %v2820 = vunpack.c.l.b16 %v2149
      %v2821 = vunpack.c.h.b16 %v2149
      %v2822 = vunpack.c.l.b16 %v2150
      %v2823 = vunpack.c.h.b16 %v2150
      %v2824 = vunpack.c.l.b16 %v2151
      %v2825 = vunpack.c.h.b16 %v2151
      %v2826 = vunpack.c.l.b16 %v2152
      %v2827 = vunpack.c.h.b16 %v2152
      %v2828 = vunpack.c.l.b16 %v2153
      %v2829 = vunpack.c.h.b16 %v2153
      %v2830 = vunpack.c.l.b16 %v2154
      %v2831 = vunpack.c.h.b16 %v2154
      %v2832 = vunpack.c.l.b16 %v2155
      %v2833 = vunpack.c.h.b16 %v2155
      %v2834 = vunpack.c.l.b16 %v2156
      %v2835 = vunpack.c.h.b16 %v2156
      %v2836 = vunpack.c.l.b16 %v2157
      %v2837 = vunpack.c.h.b16 %v2157
      %v2838 = vunpack.c.l.b16 %v2158
      %v2839 = vunpack.c.h.b16 %v2158
      %v2840 = vunpack.c.l.b16 %v2159
      %v2841 = vunpack.c.h.b16 %v2159
      %v2842 = vunpack.c.l.b16 %v2160
      %v2843 = vunpack.c.h.b16 %v2160
      %v2844 = vunpack.c.l.b16 %v2161
      %v2845 = vunpack.c.h.b16 %v2161
      %v2846 = vunpack.c.l.b16 %v2162
      %v2847 = vunpack.c.h.b16 %v2162
      %v2848 = vunpack.c.l.b16 %v2163
      %v2849 = vunpack.c.h.b16 %v2163
      %v2850 = vunpack.c.l.b16 %v2164
      %v2851 = vunpack.c.h.b16 %v2164
      %v2852 = vunpack.c.l.b16 %v2165
      %v2853 = vunpack.c.h.b16 %v2165
      %v2854 = vunpack.c.l.b16 %v2166
      %v2855 = vunpack.c.h.b16 %v2166
      %v2856 = vunpack.c.l.b16 %v2167
      %v2857 = vunpack.c.h.b16 %v2167
      %v2858 = vunpack.c.l.b16 %v2168
      %v2859 = vunpack.c.h.b16 %v2168
      %v2860 = vunpack.c.l.b16 %v2169
      %v2861 = vunpack.c.h.b16 %v2169
      %v2862 = vunpack.c.l.b16 %v2170
      %v2863 = vunpack.c.h.b16 %v2170
      %v2864 = vunpack.c.l.b16 %v2171
      %v2865 = vunpack.c.h.b16 %v2171
      %v2866 = vunpack.c.l.b16 %v2172
      %v2867 = vunpack.c.h.b16 %v2172
      %v2868 = vunpack.c.l.b16 %v2173
      %v2869 = vunpack.c.h.b16 %v2173
      %v2870 = vunpack.c.l.b16 %v2174
      %v2871 = vunpack.c.h.b16 %v2174
      %v2872 = vunpack.c.l.b16 %v2175
      %v2873 = vunpack.c.h.b16 %v2175
      %v2874 = vunpack.c.l.b16 %v2176
      %v2875 = vunpack.c.h.b16 %v2176
      %v2876 = vunpack.c.l.b16 %v2177
      %v2877 = vunpack.c.h.b16 %v2177
      %v2878 = vunpack.c.l.b16 %v2178
      %v2879 = vunpack.c.h.b16 %v2178
      %v2880 = vunpack.c.l.b16 %v2179
      %v2881 = vunpack.c.h.b16 %v2179
      %v2882 = vunpack.c.l.b16 %v2180
      %v2883 = vunpack.c.h.b16 %v2180
      %v2884 = vunpack.c.l.b16 %v2181
      %v2885 = vunpack.c.h.b16 %v2181
      %v2886 = vunpack.c.l.b16 %v2182
      %v2887 = vunpack.c.h.b16 %v2182
      %v2888 = vunpack.c.l.b16 %v2183
      %v2889 = vunpack.c.h.b16 %v2183
      %v2890 = vunpack.c.l.b16 %v2184
      %v2891 = vunpack.c.h.b16 %v2184
      %v2892 = vunpack.c.l.b16 %v2185
      %v2893 = vunpack.c.h.b16 %v2185
      %v2894 = vunpack.c.l.b16 %v2186
      %v2895 = vunpack.c.h.b16 %v2186
      %v2896 = vunpack.c.l.b16 %v2187
      %v2897 = vunpack.c.h.b16 %v2187
      %v2898 = vunpack.c.l.b16 %v2188
      %v2899 = vunpack.c.h.b16 %v2188
      %v2900 = vunpack.c.l.b16 %v2189
      %v2901 = vunpack.c.h.b16 %v2189
      %v2902 = vunpack.c.l.b16 %v2190
      %v2903 = vunpack.c.h.b16 %v2190
      %v2904 = vunpack.c.l.b16 %v2191
      %v2905 = vunpack.c.h.b16 %v2191
      %v2906 = vunpack.c.l.b16 %v2192
      %v2907 = vunpack.c.h.b16 %v2192
      %v2908 = vunpack.c.l.b16 %v2193
      %v2909 = vunpack.c.h.b16 %v2193
      %v2910 = vunpack.c.l.b16 %v2194
      %v2911 = vunpack.c.h.b16 %v2194
      %v2912 = vunpack.c.l.b16 %v2195
      %v2913 = vunpack.c.h.b16 %v2195
      %v2914 = vunpack.c.l.b16 %v2196
      %v2915 = vunpack.c.h.b16 %v2196
      %v2916 = vunpack.c.l.b16 %v2197
      %v2917 = vunpack.c.h.b16 %v2197
      %v2918 = vunpack.c.l.b16 %v2198
      %v2919 = vunpack.c.h.b16 %v2198
      %v2920 = vunpack.c.l.b16 %v2199
      %v2921 = vunpack.c.h.b16 %v2199
      %v2922 = vunpack.c.l.b16 %v2200
      %v2923 = vunpack.c.h.b16 %v2200
      %v2924 = vunpack.c.l.b16 %v2201
      %v2925 = vunpack.c.h.b16 %v2201
      %v2926 = vunpack.c.l.b16 %v2202
      %v2927 = vunpack.c.h.b16 %v2202
      %v2928 = vunpack.c.l.b16 %v2203
      %v2929 = vunpack.c.h.b16 %v2203
      %v2930 = vunpack.c.l.b16 %v2204
      %v2931 = vunpack.c.h.b16 %v2204
      %v2932 = vunpack.c.l.b16 %v2205
      %v2933 = vunpack.c.h.b16 %v2205
      %v2934 = vunpack.c.l.b16 %v2206
      %v2935 = vunpack.c.h.b16 %v2206
      %v2936 = vunpack.c.l.b16 %v2207
      %v2937 = vunpack.c.h.b16 %v2207
      %v2938 = vunpack.c.l.b16 %v2208
      %v2939 = vunpack.c.h.b16 %v2208
      %v2940 = vunpack.c.l.b16 %v2209
      %v2941 = vunpack.c.h.b16 %v2209
      %v2942 = vunpack.c.l.b16 %v2210
      %v2943 = vunpack.c.h.b16 %v2210
      %v2944 = vunpack.c.l.b16 %v2211
      %v2945 = vunpack.c.h.b16 %v2211
      %v2946 = vunpack.c.l.b16 %v2212
      %v2947 = vunpack.c.h.b16 %v2212
      %v2948 = vunpack.c.l.b16 %v2213
      %v2949 = vunpack.c.h.b16 %v2213
      %v2950 = vunpack.c.l.b16 %v2214
      %v2951 = vunpack.c.h.b16 %v2214
      %v2952 = vunpack.c.l.b16 %v2215
      %v2953 = vunpack.c.h.b16 %v2215
      %v2954 = vunpack.c.l.b16 %v2216
      %v2955 = vunpack.c.h.b16 %v2216
      %v2956 = vunpack.c.l.b16 %v2217
      %v2957 = vunpack.c.h.b16 %v2217
      %v2958 = vunpack.c.l.b16 %v2218
      %v2959 = vunpack.c.h.b16 %v2218
      %v2960 = vunpack.c.l.b16 %v2219
      %v2961 = vunpack.c.h.b16 %v2219
      %v2962 = vunpack.c.l.b16 %v2220
      %v2963 = vunpack.c.h.b16 %v2220
      %v2964 = vunpack.c.l.b16 %v2221
      %v2965 = vunpack.c.h.b16 %v2221
      %v2966 = vunpack.c.l.b16 %v2222
      %v2967 = vunpack.c.h.b16 %v2222
      %v2968 = vunpack.c.l.b16 %v2223
      %v2969 = vunpack.c.h.b16 %v2223
      %v2970 = vunpack.c.l.b16 %v2224
      %v2971 = vunpack.c.h.b16 %v2224
      %v2972 = vunpack.c.l.b16 %v2225
      %v2973 = vunpack.c.h.b16 %v2225
      %v2974 = vunpack.c.l.b16 %v2226
      %v2975 = vunpack.c.h.b16 %v2226
      %v2976 = vunpack.c.l.b16 %v2227
      %v2977 = vunpack.c.h.b16 %v2227
      %v2978 = vpack.c.b16 %v2482, %v2478
      %v2979 = vpack.c.b16 %v2483, %v2479
      %v2980 = vpack.c.b16 %v2484, %v2480
      %v2981 = vpack.c.b16 %v2485, %v2481
      %v2982 = vpack.c.b16 %v2490, %v2486
      %v2983 = vpack.c.b16 %v2491, %v2487
      %v2984 = vpack.c.b16 %v2492, %v2488
      %v2985 = vpack.c.b16 %v2493, %v2489
      %v2986 = vpack.c.b16 %v2498, %v2494
      %v2987 = vpack.c.b16 %v2499, %v2495
      %v2988 = vpack.c.b16 %v2500, %v2496
      %v2989 = vpack.c.b16 %v2501, %v2497
      %v2990 = vpack.c.b16 %v2506, %v2502
      %v2991 = vpack.c.b16 %v2507, %v2503
      %v2992 = vpack.c.b16 %v2508, %v2504
      %v2993 = vpack.c.b16 %v2509, %v2505
      %v2994 = vpack.c.b16 %v2514, %v2510
      %v2995 = vpack.c.b16 %v2515, %v2511
      %v2996 = vpack.c.b16 %v2516, %v2512
      %v2997 = vpack.c.b16 %v2517, %v2513
      %v2998 = vpack.c.b16 %v2522, %v2518
      %v2999 = vpack.c.b16 %v2523, %v2519
      %v3000 = vpack.c.b16 %v2524, %v2520
      %v3001 = vpack.c.b16 %v2525, %v2521
      %v3002 = vpack.c.b16 %v2530, %v2526
      %v3003 = vpack.c.b16 %v2531, %v2527
      %v3004 = vpack.c.b16 %v2532, %v2528
      %v3005 = vpack.c.b16 %v2533, %v2529
      %v3006 = vpack.c.b16 %v2538, %v2534
      %v3007 = vpack.c.b16 %v2539, %v2535
      %v3008 = vpack.c.b16 %v2540, %v2536
      %v3009 = vpack.c.b16 %v2541, %v2537
      %v3010 = vpack.c.b16 %v2546, %v2542
      %v3011 = vpack.c.b16 %v2547, %v2543
      %v3012 = vpack.c.b16 %v2548, %v2544
      %v3013 = vpack.c.b16 %v2549, %v2545
      %v3014 = vpack.c.b16 %v2554, %v2550
      %v3015 = vpack.c.b16 %v2555, %v2551
      %v3016 = vpack.c.b16 %v2556, %v2552
      %v3017 = vpack.c.b16 %v2557, %v2553
      %v3018 = vpack.c.b16 %v2562, %v2558
      %v3019 = vpack.c.b16 %v2563, %v2559
      %v3020 = vpack.c.b16 %v2564, %v2560
      %v3021 = vpack.c.b16 %v2565, %v2561
      %v3022 = vpack.c.b16 %v2570, %v2566
      %v3023 = vpack.c.b16 %v2571, %v2567
      %v3024 = vpack.c.b16 %v2572, %v2568
      %v3025 = vpack.c.b16 %v2573, %v2569
      %v3026 = vpack.c.b16 %v2578, %v2574
      %v3027 = vpack.c.b16 %v2579, %v2575
      %v3028 = vpack.c.b16 %v2580, %v2576
      %v3029 = vpack.c.b16 %v2581, %v2577
      %v3030 = vpack.c.b16 %v2586, %v2582
      %v3031 = vpack.c.b16 %v2587, %v2583
      %v3032 = vpack.c.b16 %v2588, %v2584
      %v3033 = vpack.c.b16 %v2589, %v2585
      %v3034 = vpack.c.b16 %v2594, %v2590
      %v3035 = vpack.c.b16 %v2595, %v2591
      %v3036 = vpack.c.b16 %v2596, %v2592
      %v3037 = vpack.c.b16 %v2597, %v2593
      %v3038 = vpack.c.b16 %v2602, %v2598
      %v3039 = vpack.c.b16 %v2603, %v2599
      %v3040 = vpack.c.b16 %v2604, %v2600
      %v3041 = vpack.c.b16 %v2605, %v2601
      %v3042 = vpack.c.b16 %v2610, %v2606
      %v3043 = vpack.c.b16 %v2611, %v2607
      %v3044 = vpack.c.b16 %v2612, %v2608
      %v3045 = vpack.c.b16 %v2613, %v2609
      %v3046 = vpack.c.b16 %v2618, %v2614
      %v3047 = vpack.c.b16 %v2619, %v2615
      %v3048 = vpack.c.b16 %v2620, %v2616
      %v3049 = vpack.c.b16 %v2621, %v2617
      %v3050 = vpack.c.b16 %v2626, %v2622
      %v3051 = vpack.c.b16 %v2627, %v2623
      %v3052 = vpack.c.b16 %v2628, %v2624
      %v3053 = vpack.c.b16 %v2629, %v2625
      %v3054 = vpack.c.b16 %v2634, %v2630
      %v3055 = vpack.c.b16 %v2635, %v2631
      %v3056 = vpack.c.b16 %v2636, %v2632
      %v3057 = vpack.c.b16 %v2637, %v2633
      %v3058 = vpack.c.b16 %v2642, %v2638
      %v3059 = vpack.c.b16 %v2643, %v2639
      %v3060 = vpack.c.b16 %v2644, %v2640
      %v3061 = vpack.c.b16 %v2645, %v2641
      %v3062 = vpack.c.b16 %v2650, %v2646
      %v3063 = vpack.c.b16 %v2651, %v2647
      %v3064 = vpack.c.b16 %v2652, %v2648
      %v3065 = vpack.c.b16 %v2653, %v2649
      %v3066 = vpack.c.b16 %v2658, %v2654
      %v3067 = vpack.c.b16 %v2659, %v2655
      %v3068 = vpack.c.b16 %v2660, %v2656
      %v3069 = vpack.c.b16 %v2661, %v2657
      %v3070 = vpack.c.b16 %v2666, %v2662
      %v3071 = vpack.c.b16 %v2667, %v2663
      %v3072 = vpack.c.b16 %v2668, %v2664
      %v3073 = vpack.c.b16 %v2669, %v2665
      %v3074 = vpack.c.b16 %v2674, %v2670
      %v3075 = vpack.c.b16 %v2675, %v2671
      %v3076 = vpack.c.b16 %v2676, %v2672
      %v3077 = vpack.c.b16 %v2677, %v2673
      %v3078 = vpack.c.b16 %v2682, %v2678
      %v3079 = vpack.c.b16 %v2683, %v2679
      %v3080 = vpack.c.b16 %v2684, %v2680
      %v3081 = vpack.c.b16 %v2685, %v2681
      %v3082 = vpack.c.b16 %v2690, %v2686
      %v3083 = vpack.c.b16 %v2691, %v2687
      %v3084 = vpack.c.b16 %v2692, %v2688
      %v3085 = vpack.c.b16 %v2693, %v2689
      %v3086 = vpack.c.b16 %v2698, %v2694
      %v3087 = vpack.c.b16 %v2699, %v2695
      %v3088 = vpack.c.b16 %v2700, %v2696
      %v3089 = vpack.c.b16 %v2701, %v2697
      %v3090 = vpack.c.b16 %v2706, %v2702
      %v3091 = vpack.c.b16 %v2707, %v2703
      %v3092 = vpack.c.b16 %v2708, %v2704
      %v3093 = vpack.c.b16 %v2709, %v2705
      %v3094 = vpack.c.b16 %v2714, %v2710
      %v3095 = vpack.c.b16 %v2715, %v2711
      %v3096 = vpack.c.b16 %v2716, %v2712
      %v3097 = vpack.c.b16 %v2717, %v2713
      %v3098 = vpack.c.b16 %v2722, %v2718
      %v3099 = vpack.c.b16 %v2723, %v2719
      %v3100 = vpack.c.b16 %v2724, %v2720
      %v3101 = vpack.c.b16 %v2725, %v2721
      %v3102 = vpack.c.b16 %v2730, %v2726
      %v3103 = vpack.c.b16 %v2731, %v2727
      %v3104 = vpack.c.b16 %v2732, %v2728
      %v3105 = vpack.c.b16 %v2733, %v2729
      %v3106 = vpack.c.b16 %v2738, %v2734
      %v3107 = vpack.c.b16 %v2739, %v2735
      %v3108 = vpack.c.b16 %v2740, %v2736
      %v3109 = vpack.c.b16 %v2741, %v2737
      %v3110 = vpack.c.b16 %v2746, %v2742
      %v3111 = vpack.c.b16 %v2747, %v2743
      %v3112 = vpack.c.b16 %v2748, %v2744
      %v3113 = vpack.c.b16 %v2749, %v2745
      %v3114 = vpack.c.b16 %v2754, %v2750
      %v3115 = vpack.c.b16 %v2755, %v2751
      %v3116 = vpack.c.b16 %v2756, %v2752
      %v3117 = vpack.c.b16 %v2757, %v2753
      %v3118 = vpack.c.b16 %v2762, %v2758
      %v3119 = vpack.c.b16 %v2763, %v2759
      %v3120 = vpack.c.b16 %v2764, %v2760
      %v3121 = vpack.c.b16 %v2765, %v2761
      %v3122 = vpack.c.b16 %v2770, %v2766
      %v3123 = vpack.c.b16 %v2771, %v2767
      %v3124 = vpack.c.b16 %v2772, %v2768
      %v3125 = vpack.c.b16 %v2773, %v2769
      %v3126 = vpack.c.b16 %v2778, %v2774
      %v3127 = vpack.c.b16 %v2779, %v2775
      %v3128 = vpack.c.b16 %v2780, %v2776
      %v3129 = vpack.c.b16 %v2781, %v2777
      %v3130 = vpack.c.b16 %v2786, %v2782
      %v3131 = vpack.c.b16 %v2787, %v2783
      %v3132 = vpack.c.b16 %v2788, %v2784
      %v3133 = vpack.c.b16 %v2789, %v2785
      %v3134 = vpack.c.b16 %v2794, %v2790
      %v3135 = vpack.c.b16 %v2795, %v2791
      %v3136 = vpack.c.b16 %v2796, %v2792
      %v3137 = vpack.c.b16 %v2797, %v2793
      %v3138 = vpack.c.b16 %v2802, %v2798
      %v3139 = vpack.c.b16 %v2803, %v2799
      %v3140 = vpack.c.b16 %v2804, %v2800
      %v3141 = vpack.c.b16 %v2805, %v2801
      %v3142 = vpack.c.b16 %v2810, %v2806
      %v3143 = vpack.c.b16 %v2811, %v2807
      %v3144 = vpack.c.b16 %v2812, %v2808
      %v3145 = vpack.c.b16 %v2813, %v2809
      %v3146 = vpack.c.b16 %v2818, %v2814
      %v3147 = vpack.c.b16 %v2819, %v2815
      %v3148 = vpack.c.b16 %v2820, %v2816
      %v3149 = vpack.c.b16 %v2821, %v2817
      %v3150 = vpack.c.b16 %v2826, %v2822
      %v3151 = vpack.c.b16 %v2827, %v2823
      %v3152 = vpack.c.b16 %v2828, %v2824
      %v3153 = vpack.c.b16 %v2829, %v2825
      %v3154 = vpack.c.b16 %v2834, %v2830
      %v3155 = vpack.c.b16 %v2835, %v2831
      %v3156 = vpack.c.b16 %v2836, %v2832
      %v3157 = vpack.c.b16 %v2837, %v2833
      %v3158 = vpack.c.b16 %v2842, %v2838
      %v3159 = vpack.c.b16 %v2843, %v2839
      %v3160 = vpack.c.b16 %v2844, %v2840
      %v3161 = vpack.c.b16 %v2845, %v2841
      %v3162 = vpack.c.b16 %v2850, %v2846
      %v3163 = vpack.c.b16 %v2851, %v2847
      %v3164 = vpack.c.b16 %v2852, %v2848
      %v3165 = vpack.c.b16 %v2853, %v2849
      %v3166 = vpack.c.b16 %v2858, %v2854
      %v3167 = vpack.c.b16 %v2859, %v2855
      %v3168 = vpack.c.b16 %v2860, %v2856
      %v3169 = vpack.c.b16 %v2861, %v2857
      %v3170 = vpack.c.b16 %v2866, %v2862
      %v3171 = vpack.c.b16 %v2867, %v2863
      %v3172 = vpack.c.b16 %v2868, %v2864
      %v3173 = vpack.c.b16 %v2869, %v2865
      %v3174 = vpack.c.b16 %v2874, %v2870
      %v3175 = vpack.c.b16 %v2875, %v2871
      %v3176 = vpack.c.b16 %v2876, %v2872
      %v3177 = vpack.c.b16 %v2877, %v2873
      %v3178 = vpack.c.b16 %v2882, %v2878
      %v3179 = vpack.c.b16 %v2883, %v2879
      %v3180 = vpack.c.b16 %v2884, %v2880
      %v3181 = vpack.c.b16 %v2885, %v2881
      %v3182 = vpack.c.b16 %v2890, %v2886
      %v3183 = vpack.c.b16 %v2891, %v2887
      %v3184 = vpack.c.b16 %v2892, %v2888
      %v3185 = vpack.c.b16 %v2893, %v2889
      %v3186 = vpack.c.b16 %v2898, %v2894
      %v3187 = vpack.c.b16 %v2899, %v2895
      %v3188 = vpack.c.b16 %v2900, %v2896
      %v3189 = vpack.c.b16 %v2901, %v2897
      %v3190 = vpack.c.b16 %v2906, %v2902
      %v3191 = vpack.c.b16 %v2907, %v2903
      %v3192 = vpack.c.b16 %v2908, %v2904
      %v3193 = vpack.c.b16 %v2909, %v2905
      %v3194 = vpack.c.b16 %v2914, %v2910
      %v3195 = vpack.c.b16 %v2915, %v2911
      %v3196 = vpack.c.b16 %v2916, %v2912
      %v3197 = vpack.c.b16 %v2917, %v2913
      %v3198 = vpack.c.b16 %v2922, %v2918
      %v3199 = vpack.c.b16 %v2923, %v2919
      %v3200 = vpack.c.b16 %v2924, %v2920
      %v3201 = vpack.c.b16 %v2925, %v2921
      %v3202 = vpack.c.b16 %v2930, %v2926
      %v3203 = vpack.c.b16 %v2931, %v2927
      %v3204 = vpack.c.b16 %v2932, %v2928
      %v3205 = vpack.c.b16 %v2933, %v2929
      %v3206 = vpack.c.b16 %v2938, %v2934
      %v3207 = vpack.c.b16 %v2939, %v2935
      %v3208 = vpack.c.b16 %v2940, %v2936
      %v3209 = vpack.c.b16 %v2941, %v2937
      %v3210 = vpack.c.b16 %v2946, %v2942
      %v3211 = vpack.c.b16 %v2947, %v2943
      %v3212 = vpack.c.b16 %v2948, %v2944
      %v3213 = vpack.c.b16 %v2949, %v2945
      %v3214 = vpack.c.b16 %v2954, %v2950
      %v3215 = vpack.c.b16 %v2955, %v2951
      %v3216 = vpack.c.b16 %v2956, %v2952
      %v3217 = vpack.c.b16 %v2957, %v2953
      %v3218 = vpack.c.b16 %v2962, %v2958
      %v3219 = vpack.c.b16 %v2963, %v2959
      %v3220 = vpack.c.b16 %v2964, %v2960
      %v3221 = vpack.c.b16 %v2965, %v2961
      %v3222 = vpack.c.b16 %v2970, %v2966
      %v3223 = vpack.c.b16 %v2971, %v2967
      %v3224 = vpack.c.b16 %v2972, %v2968
      %v3225 = vpack.c.b16 %v2973, %v2969
      %v3226 = vpack.c.b16 %v2974, %v2974
      %v3227 = vpack.c.b16 %v2975, %v2975
      %v3228 = vpack.c.b16 %v2976, %v2976
      %v3229 = vpack.c.b16 %v2977, %v2977
      %vm3478 = vcmask 850944
      %v3480 = vsel %vm3478, %v1977, 0
      %v3483 = vsel %vm220, %v3226, 0
      %v3486 = vsel %vm220, %v3227, 0
      %v3489 = vsel %vm220, %v3228, 0
      %v3492 = vsel %vm220, %v3229, 0
      %3494 = vmatpush.bf16.msra.mxu0 %v3006
      %3495 = vmatpush.bf16.msra.mxu0 %v3002
      %3496 = vmatpush.bf16.msra.mxu0 %v2998
      %3497 = vmatpush.bf16.msra.mxu0 %v2994
      %3498 = vmatpush.bf16.msra.mxu0 %v2990
      %3499 = vmatpush.bf16.msra.mxu0 %v2986
      %3500 = vmatpush.bf16.msra.mxu0 %v2982
      %3501 = vmatpush.bf16.msra.mxu0 %v2978
      %3502 = vmatmul.bf16.gmra.mxu0 %v1970
      %v3503 = vpop.f32.mrf.mxu0
      %v3504 = vadd.f32 0.0, %v3503
      %v3505 = vpop.f32.mrf.mxu0
      %3506 = vdwg.mxu0
      %3507 = vmatpush.bf16.msra.mxu0 %v3038
      %3508 = vmatpush.bf16.msra.mxu0 %v3034
      %3509 = vmatpush.bf16.msra.mxu0 %v3030
      %3510 = vmatpush.bf16.msra.mxu0 %v3026
      %3511 = vmatpush.bf16.msra.mxu0 %v3022
      %3512 = vmatpush.bf16.msra.mxu0 %v3018
      %3513 = vmatpush.bf16.msra.mxu0 %v3014
      %3514 = vmatpush.bf16.msra.mxu0 %v3010
      %3515 = vmatmul.bf16.gmra.mxu0 %v1971
      %v3516 = vpop.f32.mrf.mxu0
      %v3517 = vadd.f32 %v3504, %v3516
      %v3518 = vpop.f32.mrf.mxu0
      %3519 = vdwg.mxu0
      %3520 = vmatpush.bf16.msra.mxu0 %v3070
      %3521 = vmatpush.bf16.msra.mxu0 %v3066
      %3522 = vmatpush.bf16.msra.mxu0 %v3062
      %3523 = vmatpush.bf16.msra.mxu0 %v3058
      %3524 = vmatpush.bf16.msra.mxu0 %v3054
      %3525 = vmatpush.bf16.msra.mxu0 %v3050
      %3526 = vmatpush.bf16.msra.mxu0 %v3046
      %3527 = vmatpush.bf16.msra.mxu0 %v3042
      %3528 = vmatmul.bf16.gmra.mxu0 %v1972
      %v3529 = vpop.f32.mrf.mxu0
      %v3530 = vadd.f32 %v3517, %v3529
      %v3531 = vpop.f32.mrf.mxu0
      %3532 = vdwg.mxu0
      %3533 = vmatpush.bf16.msra.mxu0 %v3102
      %3534 = vmatpush.bf16.msra.mxu0 %v3098
      %3535 = vmatpush.bf16.msra.mxu0 %v3094
      %3536 = vmatpush.bf16.msra.mxu0 %v3090
      %3537 = vmatpush.bf16.msra.mxu0 %v3086
      %3538 = vmatpush.bf16.msra.mxu0 %v3082
      %3539 = vmatpush.bf16.msra.mxu0 %v3078
      %3540 = vmatpush.bf16.msra.mxu0 %v3074
      %3541 = vmatmul.bf16.gmra.mxu0 %v1973
      %v3542 = vpop.f32.mrf.mxu0
      %v3543 = vadd.f32 %v3530, %v3542
      %v3544 = vpop.f32.mrf.mxu0
      %3545 = vdwg.mxu0
      %3546 = vmatpush.bf16.msra.mxu0 %v3134
      %3547 = vmatpush.bf16.msra.mxu0 %v3130
      %3548 = vmatpush.bf16.msra.mxu0 %v3126
      %3549 = vmatpush.bf16.msra.mxu0 %v3122
      %3550 = vmatpush.bf16.msra.mxu0 %v3118
      %3551 = vmatpush.bf16.msra.mxu0 %v3114
      %3552 = vmatpush.bf16.msra.mxu0 %v3110
      %3553 = vmatpush.bf16.msra.mxu0 %v3106
      %3554 = vmatmul.bf16.gmra.mxu0 %v1974
      %v3555 = vpop.f32.mrf.mxu0
      %v3556 = vadd.f32 %v3543, %v3555
      %v3557 = vpop.f32.mrf.mxu0
      %3558 = vdwg.mxu0
      %3559 = vmatpush.bf16.msra.mxu0 %v3166
      %3560 = vmatpush.bf16.msra.mxu0 %v3162
      %3561 = vmatpush.bf16.msra.mxu0 %v3158
      %3562 = vmatpush.bf16.msra.mxu0 %v3154
      %3563 = vmatpush.bf16.msra.mxu0 %v3150
      %3564 = vmatpush.bf16.msra.mxu0 %v3146
      %3565 = vmatpush.bf16.msra.mxu0 %v3142
      %3566 = vmatpush.bf16.msra.mxu0 %v3138
      %3567 = vmatmul.bf16.gmra.mxu0 %v1975
      %v3568 = vpop.f32.mrf.mxu0
      %v3569 = vadd.f32 %v3556, %v3568
      %v3570 = vpop.f32.mrf.mxu0
      %3571 = vdwg.mxu0
      %3572 = vmatpush.bf16.msra.mxu0 %v3198
      %3573 = vmatpush.bf16.msra.mxu0 %v3194
      %3574 = vmatpush.bf16.msra.mxu0 %v3190
      %3575 = vmatpush.bf16.msra.mxu0 %v3186
      %3576 = vmatpush.bf16.msra.mxu0 %v3182
      %3577 = vmatpush.bf16.msra.mxu0 %v3178
      %3578 = vmatpush.bf16.msra.mxu0 %v3174
      %3579 = vmatpush.bf16.msra.mxu0 %v3170
      %3580 = vmatmul.bf16.gmra.mxu0 %v1976
      %v3581 = vpop.f32.mrf.mxu0
      %v3582 = vadd.f32 %v3569, %v3581
      %v3583 = vpop.f32.mrf.mxu0
      %3584 = vdwg.mxu0
      %3585 = vmatpush.bf16.msra.mxu0 0
      %3586 = vmatpush.bf16.msra.mxu0 %v3483
      %3587 = vmatpush.bf16.msra.mxu0 %v3222
      %3588 = vmatpush.bf16.msra.mxu0 %v3218
      %3589 = vmatpush.bf16.msra.mxu0 %v3214
      %3590 = vmatpush.bf16.msra.mxu0 %v3210
      %3591 = vmatpush.bf16.msra.mxu0 %v3206
      %3592 = vmatpush.bf16.msra.mxu0 %v3202
      %3593 = vmatmul.bf16.gmra.mxu0 %v3480
      %v3594 = vpop.f32.mrf.mxu0
      %v3595 = vadd.f32 %v3582, %v3594
      %v3596 = vpop.f32.mrf.mxu0
      %3597 = vdwg.mxu0
      %3598 = vmatpush.bf16.msra.mxu0 %v3007
      %3599 = vmatpush.bf16.msra.mxu0 %v3003
      %3600 = vmatpush.bf16.msra.mxu0 %v2999
      %3601 = vmatpush.bf16.msra.mxu0 %v2995
      %3602 = vmatpush.bf16.msra.mxu0 %v2991
      %3603 = vmatpush.bf16.msra.mxu0 %v2987
      %3604 = vmatpush.bf16.msra.mxu0 %v2983
      %3605 = vmatpush.bf16.msra.mxu0 %v2979
      %3606 = vmatmul.bf16.gmra.mxu0 %v1970
      %v3607 = vpop.f32.mrf.mxu0
      %v3608 = vadd.f32 0.0, %v3607
      %v3609 = vpop.f32.mrf.mxu0
      %3610 = vdwg.mxu0
      %3611 = vmatpush.bf16.msra.mxu0 %v3039
      %3612 = vmatpush.bf16.msra.mxu0 %v3035
      %3613 = vmatpush.bf16.msra.mxu0 %v3031
      %3614 = vmatpush.bf16.msra.mxu0 %v3027
      %3615 = vmatpush.bf16.msra.mxu0 %v3023
      %3616 = vmatpush.bf16.msra.mxu0 %v3019
      %3617 = vmatpush.bf16.msra.mxu0 %v3015
      %3618 = vmatpush.bf16.msra.mxu0 %v3011
      %3619 = vmatmul.bf16.gmra.mxu0 %v1971
      %v3620 = vpop.f32.mrf.mxu0
      %v3621 = vadd.f32 %v3608, %v3620
      %v3622 = vpop.f32.mrf.mxu0
      %3623 = vdwg.mxu0
      %3624 = vmatpush.bf16.msra.mxu0 %v3071
      %3625 = vmatpush.bf16.msra.mxu0 %v3067
      %3626 = vmatpush.bf16.msra.mxu0 %v3063
      %3627 = vmatpush.bf16.msra.mxu0 %v3059
      %3628 = vmatpush.bf16.msra.mxu0 %v3055
      %3629 = vmatpush.bf16.msra.mxu0 %v3051
      %3630 = vmatpush.bf16.msra.mxu0 %v3047
      %3631 = vmatpush.bf16.msra.mxu0 %v3043
      %3632 = vmatmul.bf16.gmra.mxu0 %v1972
      %v3633 = vpop.f32.mrf.mxu0
      %v3634 = vadd.f32 %v3621, %v3633
      %v3635 = vpop.f32.mrf.mxu0
      %3636 = vdwg.mxu0
      %3637 = vmatpush.bf16.msra.mxu0 %v3103
      %3638 = vmatpush.bf16.msra.mxu0 %v3099
      %3639 = vmatpush.bf16.msra.mxu0 %v3095
      %3640 = vmatpush.bf16.msra.mxu0 %v3091
      %3641 = vmatpush.bf16.msra.mxu0 %v3087
      %3642 = vmatpush.bf16.msra.mxu0 %v3083
      %3643 = vmatpush.bf16.msra.mxu0 %v3079
      %3644 = vmatpush.bf16.msra.mxu0 %v3075
      %3645 = vmatmul.bf16.gmra.mxu0 %v1973
      %v3646 = vpop.f32.mrf.mxu0
      %v3647 = vadd.f32 %v3634, %v3646
      %v3648 = vpop.f32.mrf.mxu0
      %3649 = vdwg.mxu0
      %3650 = vmatpush.bf16.msra.mxu0 %v3135
      %3651 = vmatpush.bf16.msra.mxu0 %v3131
      %3652 = vmatpush.bf16.msra.mxu0 %v3127
      %3653 = vmatpush.bf16.msra.mxu0 %v3123
      %3654 = vmatpush.bf16.msra.mxu0 %v3119
      %3655 = vmatpush.bf16.msra.mxu0 %v3115
      %3656 = vmatpush.bf16.msra.mxu0 %v3111
      %3657 = vmatpush.bf16.msra.mxu0 %v3107
      %3658 = vmatmul.bf16.gmra.mxu0 %v1974
      %v3659 = vpop.f32.mrf.mxu0
      %v3660 = vadd.f32 %v3647, %v3659
      %v3661 = vpop.f32.mrf.mxu0
      %3662 = vdwg.mxu0
      %3663 = vmatpush.bf16.msra.mxu0 %v3167
      %3664 = vmatpush.bf16.msra.mxu0 %v3163
      %3665 = vmatpush.bf16.msra.mxu0 %v3159
      %3666 = vmatpush.bf16.msra.mxu0 %v3155
      %3667 = vmatpush.bf16.msra.mxu0 %v3151
      %3668 = vmatpush.bf16.msra.mxu0 %v3147
      %3669 = vmatpush.bf16.msra.mxu0 %v3143
      %3670 = vmatpush.bf16.msra.mxu0 %v3139
      %3671 = vmatmul.bf16.gmra.mxu0 %v1975
      %v3672 = vpop.f32.mrf.mxu0
      %v3673 = vadd.f32 %v3660, %v3672
      %v3674 = vpop.f32.mrf.mxu0
      %3675 = vdwg.mxu0
      %3676 = vmatpush.bf16.msra.mxu0 %v3199
      %3677 = vmatpush.bf16.msra.mxu0 %v3195
      %3678 = vmatpush.bf16.msra.mxu0 %v3191
      %3679 = vmatpush.bf16.msra.mxu0 %v3187
      %3680 = vmatpush.bf16.msra.mxu0 %v3183
      %3681 = vmatpush.bf16.msra.mxu0 %v3179
      %3682 = vmatpush.bf16.msra.mxu0 %v3175
      %3683 = vmatpush.bf16.msra.mxu0 %v3171
      %3684 = vmatmul.bf16.gmra.mxu0 %v1976
      %v3685 = vpop.f32.mrf.mxu0
      %v3686 = vadd.f32 %v3673, %v3685
      %v3687 = vpop.f32.mrf.mxu0
      %3688 = vdwg.mxu0
      %3689 = vmatpush.bf16.msra.mxu0 0
      %3690 = vmatpush.bf16.msra.mxu0 %v3486
      %3691 = vmatpush.bf16.msra.mxu0 %v3223
      %3692 = vmatpush.bf16.msra.mxu0 %v3219
      %3693 = vmatpush.bf16.msra.mxu0 %v3215
      %3694 = vmatpush.bf16.msra.mxu0 %v3211
      %3695 = vmatpush.bf16.msra.mxu0 %v3207
      %3696 = vmatpush.bf16.msra.mxu0 %v3203
      %3697 = vmatmul.bf16.gmra.mxu0 %v3480
      %v3698 = vpop.f32.mrf.mxu0
      %v3699 = vadd.f32 %v3686, %v3698
      %v3700 = vpop.f32.mrf.mxu0
      %3701 = vdwg.mxu0
      %3702 = vmatpush.bf16.msra.mxu0 %v3008
      %3703 = vmatpush.bf16.msra.mxu0 %v3004
      %3704 = vmatpush.bf16.msra.mxu0 %v3000
      %3705 = vmatpush.bf16.msra.mxu0 %v2996
      %3706 = vmatpush.bf16.msra.mxu0 %v2992
      %3707 = vmatpush.bf16.msra.mxu0 %v2988
      %3708 = vmatpush.bf16.msra.mxu0 %v2984
      %3709 = vmatpush.bf16.msra.mxu0 %v2980
      %3710 = vmatmul.bf16.gmra.mxu0 %v1970
      %v3711 = vpop.f32.mrf.mxu0
      %v3712 = vadd.f32 0.0, %v3711
      %v3713 = vpop.f32.mrf.mxu0
      %3714 = vdwg.mxu0
      %3715 = vmatpush.bf16.msra.mxu0 %v3040
      %3716 = vmatpush.bf16.msra.mxu0 %v3036
      %3717 = vmatpush.bf16.msra.mxu0 %v3032
      %3718 = vmatpush.bf16.msra.mxu0 %v3028
      %3719 = vmatpush.bf16.msra.mxu0 %v3024
      %3720 = vmatpush.bf16.msra.mxu0 %v3020
      %3721 = vmatpush.bf16.msra.mxu0 %v3016
      %3722 = vmatpush.bf16.msra.mxu0 %v3012
      %3723 = vmatmul.bf16.gmra.mxu0 %v1971
      %v3724 = vpop.f32.mrf.mxu0
      %v3725 = vadd.f32 %v3712, %v3724
      %v3726 = vpop.f32.mrf.mxu0
      %3727 = vdwg.mxu0
      %3728 = vmatpush.bf16.msra.mxu0 %v3072
      %3729 = vmatpush.bf16.msra.mxu0 %v3068
      %3730 = vmatpush.bf16.msra.mxu0 %v3064
      %3731 = vmatpush.bf16.msra.mxu0 %v3060
      %3732 = vmatpush.bf16.msra.mxu0 %v3056
      %3733 = vmatpush.bf16.msra.mxu0 %v3052
      %3734 = vmatpush.bf16.msra.mxu0 %v3048
      %3735 = vmatpush.bf16.msra.mxu0 %v3044
      %3736 = vmatmul.bf16.gmra.mxu0 %v1972
      %v3737 = vpop.f32.mrf.mxu0
      %v3738 = vadd.f32 %v3725, %v3737
      %v3739 = vpop.f32.mrf.mxu0
      %3740 = vdwg.mxu0
      %3741 = vmatpush.bf16.msra.mxu0 %v3104
      %3742 = vmatpush.bf16.msra.mxu0 %v3100
      %3743 = vmatpush.bf16.msra.mxu0 %v3096
      %3744 = vmatpush.bf16.msra.mxu0 %v3092
      %3745 = vmatpush.bf16.msra.mxu0 %v3088
      %3746 = vmatpush.bf16.msra.mxu0 %v3084
      %3747 = vmatpush.bf16.msra.mxu0 %v3080
      %3748 = vmatpush.bf16.msra.mxu0 %v3076
      %3749 = vmatmul.bf16.gmra.mxu0 %v1973
      %v3750 = vpop.f32.mrf.mxu0
      %v3751 = vadd.f32 %v3738, %v3750
      %v3752 = vpop.f32.mrf.mxu0
      %3753 = vdwg.mxu0
      %3754 = vmatpush.bf16.msra.mxu0 %v3136
      %3755 = vmatpush.bf16.msra.mxu0 %v3132
      %3756 = vmatpush.bf16.msra.mxu0 %v3128
      %3757 = vmatpush.bf16.msra.mxu0 %v3124
      %3758 = vmatpush.bf16.msra.mxu0 %v3120
      %3759 = vmatpush.bf16.msra.mxu0 %v3116
      %3760 = vmatpush.bf16.msra.mxu0 %v3112
      %3761 = vmatpush.bf16.msra.mxu0 %v3108
      %3762 = vmatmul.bf16.gmra.mxu0 %v1974
      %v3763 = vpop.f32.mrf.mxu0
      %v3764 = vadd.f32 %v3751, %v3763
      %v3765 = vpop.f32.mrf.mxu0
      %3766 = vdwg.mxu0
      %3767 = vmatpush.bf16.msra.mxu0 %v3168
      %3768 = vmatpush.bf16.msra.mxu0 %v3164
      %3769 = vmatpush.bf16.msra.mxu0 %v3160
      %3770 = vmatpush.bf16.msra.mxu0 %v3156
      %3771 = vmatpush.bf16.msra.mxu0 %v3152
      %3772 = vmatpush.bf16.msra.mxu0 %v3148
      %3773 = vmatpush.bf16.msra.mxu0 %v3144
      %3774 = vmatpush.bf16.msra.mxu0 %v3140
      %3775 = vmatmul.bf16.gmra.mxu0 %v1975
      %v3776 = vpop.f32.mrf.mxu0
      %v3777 = vadd.f32 %v3764, %v3776
      %v3778 = vpop.f32.mrf.mxu0
      %3779 = vdwg.mxu0
      %3780 = vmatpush.bf16.msra.mxu0 %v3200
      %3781 = vmatpush.bf16.msra.mxu0 %v3196
      %3782 = vmatpush.bf16.msra.mxu0 %v3192
      %3783 = vmatpush.bf16.msra.mxu0 %v3188
      %3784 = vmatpush.bf16.msra.mxu0 %v3184
      %3785 = vmatpush.bf16.msra.mxu0 %v3180
      %3786 = vmatpush.bf16.msra.mxu0 %v3176
      %3787 = vmatpush.bf16.msra.mxu0 %v3172
      %3788 = vmatmul.bf16.gmra.mxu0 %v1976
      %v3789 = vpop.f32.mrf.mxu0
      %v3790 = vadd.f32 %v3777, %v3789
      %v3791 = vpop.f32.mrf.mxu0
      %3792 = vdwg.mxu0
      %3793 = vmatpush.bf16.msra.mxu0 0
      %3794 = vmatpush.bf16.msra.mxu0 %v3489
      %3795 = vmatpush.bf16.msra.mxu0 %v3224
      %3796 = vmatpush.bf16.msra.mxu0 %v3220
      %3797 = vmatpush.bf16.msra.mxu0 %v3216
      %3798 = vmatpush.bf16.msra.mxu0 %v3212
      %3799 = vmatpush.bf16.msra.mxu0 %v3208
      %3800 = vmatpush.bf16.msra.mxu0 %v3204
      %3801 = vmatmul.bf16.gmra.mxu0 %v3480
      %v3802 = vpop.f32.mrf.mxu0
      %v3803 = vadd.f32 %v3790, %v3802
      %v3804 = vpop.f32.mrf.mxu0
      %3805 = vdwg.mxu0
      %3806 = vmatpush.bf16.msra.mxu0 %v3009
      %3807 = vmatpush.bf16.msra.mxu0 %v3005
      %3808 = vmatpush.bf16.msra.mxu0 %v3001
      %3809 = vmatpush.bf16.msra.mxu0 %v2997
      %3810 = vmatpush.bf16.msra.mxu0 %v2993
      %3811 = vmatpush.bf16.msra.mxu0 %v2989
      %3812 = vmatpush.bf16.msra.mxu0 %v2985
      %3813 = vmatpush.bf16.msra.mxu0 %v2981
      %3814 = vmatmul.bf16.gmra.mxu0 %v1970
      %v3815 = vpop.f32.mrf.mxu0
      %v3816 = vadd.f32 0.0, %v3815
      %v3817 = vpop.f32.mrf.mxu0
      %3818 = vdwg.mxu0
      %3819 = vmatpush.bf16.msra.mxu0 %v3041
      %3820 = vmatpush.bf16.msra.mxu0 %v3037
      %3821 = vmatpush.bf16.msra.mxu0 %v3033
      %3822 = vmatpush.bf16.msra.mxu0 %v3029
      %3823 = vmatpush.bf16.msra.mxu0 %v3025
      %3824 = vmatpush.bf16.msra.mxu0 %v3021
      %3825 = vmatpush.bf16.msra.mxu0 %v3017
      %3826 = vmatpush.bf16.msra.mxu0 %v3013
      %3827 = vmatmul.bf16.gmra.mxu0 %v1971
      %v3828 = vpop.f32.mrf.mxu0
      %v3829 = vadd.f32 %v3816, %v3828
      %v3830 = vpop.f32.mrf.mxu0
      %3831 = vdwg.mxu0
      %3832 = vmatpush.bf16.msra.mxu0 %v3073
      %3833 = vmatpush.bf16.msra.mxu0 %v3069
      %3834 = vmatpush.bf16.msra.mxu0 %v3065
      %3835 = vmatpush.bf16.msra.mxu0 %v3061
      %3836 = vmatpush.bf16.msra.mxu0 %v3057
      %3837 = vmatpush.bf16.msra.mxu0 %v3053
      %3838 = vmatpush.bf16.msra.mxu0 %v3049
      %3839 = vmatpush.bf16.msra.mxu0 %v3045
      %3840 = vmatmul.bf16.gmra.mxu0 %v1972
      %v3841 = vpop.f32.mrf.mxu0
      %v3842 = vadd.f32 %v3829, %v3841
      %v3843 = vpop.f32.mrf.mxu0
      %3844 = vdwg.mxu0
      %3845 = vmatpush.bf16.msra.mxu0 %v3105
      %3846 = vmatpush.bf16.msra.mxu0 %v3101
      %3847 = vmatpush.bf16.msra.mxu0 %v3097
      %3848 = vmatpush.bf16.msra.mxu0 %v3093
      %3849 = vmatpush.bf16.msra.mxu0 %v3089
      %3850 = vmatpush.bf16.msra.mxu0 %v3085
      %3851 = vmatpush.bf16.msra.mxu0 %v3081
      %3852 = vmatpush.bf16.msra.mxu0 %v3077
      %3853 = vmatmul.bf16.gmra.mxu0 %v1973
      %v3854 = vpop.f32.mrf.mxu0
      %v3855 = vadd.f32 %v3842, %v3854
      %v3856 = vpop.f32.mrf.mxu0
      %3857 = vdwg.mxu0
      %3858 = vmatpush.bf16.msra.mxu0 %v3137
      %3859 = vmatpush.bf16.msra.mxu0 %v3133
      %3860 = vmatpush.bf16.msra.mxu0 %v3129
      %3861 = vmatpush.bf16.msra.mxu0 %v3125
      %3862 = vmatpush.bf16.msra.mxu0 %v3121
      %3863 = vmatpush.bf16.msra.mxu0 %v3117
      %3864 = vmatpush.bf16.msra.mxu0 %v3113
      %3865 = vmatpush.bf16.msra.mxu0 %v3109
      %3866 = vmatmul.bf16.gmra.mxu0 %v1974
      %v3867 = vpop.f32.mrf.mxu0
      %v3868 = vadd.f32 %v3855, %v3867
      %v3869 = vpop.f32.mrf.mxu0
      %3870 = vdwg.mxu0
      %3871 = vmatpush.bf16.msra.mxu0 %v3169
      %3872 = vmatpush.bf16.msra.mxu0 %v3165
      %3873 = vmatpush.bf16.msra.mxu0 %v3161
      %3874 = vmatpush.bf16.msra.mxu0 %v3157
      %3875 = vmatpush.bf16.msra.mxu0 %v3153
      %3876 = vmatpush.bf16.msra.mxu0 %v3149
      %3877 = vmatpush.bf16.msra.mxu0 %v3145
      %3878 = vmatpush.bf16.msra.mxu0 %v3141
      %3879 = vmatmul.bf16.gmra.mxu0 %v1975
      %v3880 = vpop.f32.mrf.mxu0
      %v3881 = vadd.f32 %v3868, %v3880
      %v3882 = vpop.f32.mrf.mxu0
      %3883 = vdwg.mxu0
      %3884 = vmatpush.bf16.msra.mxu0 %v3201
      %3885 = vmatpush.bf16.msra.mxu0 %v3197
      %3886 = vmatpush.bf16.msra.mxu0 %v3193
      %3887 = vmatpush.bf16.msra.mxu0 %v3189
      %3888 = vmatpush.bf16.msra.mxu0 %v3185
      %3889 = vmatpush.bf16.msra.mxu0 %v3181
      %3890 = vmatpush.bf16.msra.mxu0 %v3177
      %3891 = vmatpush.bf16.msra.mxu0 %v3173
      %3892 = vmatmul.bf16.gmra.mxu0 %v1976
      %v3893 = vpop.f32.mrf.mxu0
      %v3894 = vadd.f32 %v3881, %v3893
      %v3895 = vpop.f32.mrf.mxu0
      %3896 = vdwg.mxu0
      %3897 = vmatpush.bf16.msra.mxu0 0
      %3898 = vmatpush.bf16.msra.mxu0 %v3492
      %3899 = vmatpush.bf16.msra.mxu0 %v3225
      %3900 = vmatpush.bf16.msra.mxu0 %v3221
      %3901 = vmatpush.bf16.msra.mxu0 %v3217
      %3902 = vmatpush.bf16.msra.mxu0 %v3213
      %3903 = vmatpush.bf16.msra.mxu0 %v3209
      %3904 = vmatpush.bf16.msra.mxu0 %v3205
      %3905 = vmatmul.bf16.gmra.mxu0 %v3480
      %v3906 = vpop.f32.mrf.mxu0
      %v3907 = vadd.f32 %v3894, %v3906
      %v3908 = vpop.f32.mrf.mxu0
      %3909 = vdwg.mxu0
      %v3910 = vpack.c.bf16 %v3699, %v3595
      %v3911 = vpack.c.bf16 %v3907, %v3803
      %3912 = vst [vmem:[%s204] sm:$0xff] %v3910
      %3913 = vst [vmem:[%s204 + $0x8] sm:$0xff] %v3911
      %v3914 = vadd.f32 %v3595, %v3699
      %v3915 = vadd.f32 %v3914, %v3803
      %v3916 = vadd.f32 %v3915, %v3907
      %3917 = vadd.xlane.f32.xlu0 %v3916
      %v3918 = vpop.xlane.xlu0 %3917
      %v3919 = vmul.f32 %v3918, 0.001953125
      %v3920 = vsub.f32 %v3595, %v3919
      %v3921 = vsub.f32 %v3699, %v3919
      %v3922 = vsub.f32 %v3803, %v3919
      %v3923 = vsub.f32 %v3907, %v3919
      %v3924 = vmul.f32 %v3920, %v3920
      %v3925 = vmul.f32 %v3921, %v3921
      %v3926 = vmul.f32 %v3922, %v3922
      %v3927 = vmul.f32 %v3923, %v3923
      %v3928 = vadd.f32 %v3924, %v3925
      %v3929 = vadd.f32 %v3928, %v3926
      %v3930 = vadd.f32 %v3929, %v3927
      %3931 = vadd.xlane.f32.xlu0 %v3930
      %v3932 = vpop.xlane.xlu0 %3931
      %vm3933 = vcmask 7168
      %v3934 = vsel %vm3933, %v3918, %v3932
      %vm3935 = vcmask 15360
      %3936 = vst.msk [vmem:[%s208] sm:$0xff] %vm3935, %v3934
      %p3937 = scmp.lt.s32.totalorder %s16, 1
      %s3938 = scalar_select %p3937, %s16, 1
      %s3939 = smul.addr %s3938, 4
      %s3940 = smul.addr %s3939, 4
      %s3941 = scalar_lea.vmem %s3, %s3940
      %p3942 = scmp.lt.s32.totalorder %s16, 1
      %s3943 = scalar_select %p3942, %s16, 1
      %s3944 = smul.addr %s3943, 8
      %s3945 = scalar_lea.vmem %s4, %s3944
      // Predicated region
      $region33: #{conv3d_block_forward.2} parent=31 // pred_check
        %p3946 = pneg %p102
      $region34: #{conv3d_block_forward.2} parent=31 // pred_check_branch
        %3948 = sbr.rel (%p3946) target = $region36
      $region35: #{conv3d_block_forward.2} parent=31 // pred_region
        _
      $region36: #{conv3d_block_forward.2} parent=31 // pred_fallthru
        _
      // Predicated region
      $region37: #{conv3d_block_forward.2} parent=31 // pred_check
        %p3949 = pneg %p128
      $region38: #{conv3d_block_forward.2} parent=31 // pred_check_branch
        %3951 = sbr.rel (%p3949) target = $region40
      $region39: #{conv3d_block_forward.2} parent=31 // pred_region
        _
      $region40: #{conv3d_block_forward.2} parent=31 // pred_fallthru
        _
    $region32: #{conv3d_block_forward.2} parent=5 // pred_fallthru
      _
    %p3952 = scmp.le.s32.totalorder 2, %s11
    // Predicated region
    $region41: #{conv3d_block_forward.2} parent=5 // pred_check
      %p3953 = pneg %p3952
    $region42: #{conv3d_block_forward.2} parent=5 // pred_check_branch
      %3955 = sbr.rel (%p3953) target = $region44
    $region43: #{conv3d_block_forward.2} parent=5 // pred_region
      %s3956 = ssub.s32 %s11, 2
      // Predicated region
      $region45: #{conv3d_block_forward.2} parent=43 // pred_check
        %p3957 = pneg %p108
      $region46: #{conv3d_block_forward.2} parent=43 // pred_check_branch
        %3959 = sbr.rel (%p3957) target = $region48
      $region47: #{conv3d_block_forward.2} parent=43 // pred_region
        %p3960 = scmp.lt.s32.totalorder %s17, 1
        %s3961 = scalar_select %p3960, %s17, 1
        %s3962 = smul.addr %s3961, 4
        %s3963 = smul.addr %s3962, 4
        %s3964 = scalar_lea.vmem %s3, %s3963
      $region48: #{conv3d_block_forward.2} parent=43 // pred_fallthru
        _
      // Predicated region
      $region49: #{conv3d_block_forward.2} parent=43 // pred_check
        %p3965 = pneg %p134
      $region50: #{conv3d_block_forward.2} parent=43 // pred_check_branch
        %3967 = sbr.rel (%p3965) target = $region52
      $region51: #{conv3d_block_forward.2} parent=43 // pred_region
        %p3968 = scmp.lt.s32.totalorder %s17, 1
        %s3969 = scalar_select %p3968, %s17, 1
        %s3970 = smul.addr %s3969, 8
        %s3971 = scalar_lea.vmem %s4, %s3970
      $region52: #{conv3d_block_forward.2} parent=43 // pred_fallthru
        _
    $region44: #{conv3d_block_forward.2} parent=5 // pred_fallthru
      _
  $region6: #{conv3d_block_forward.2} parent=0 // loop_footer
    %s15 = sadd.s32 1, %s11
  $region7: #{conv3d_block_forward.2} parent=0 // loop_footer_branch
    %10 = sbr.rel target = $region3
  $region8: #{conv3d_block_forward.2} parent=0 // loop_exit
    _

</llo_original>
